<compile_context>
chip_gen: v6e
topology: v6e:2x2x1
jax: 0.10.0
libtpu: 0.0.40
codegen_flags: <defaults>
</compile_context>

<pallas_src>
import jax
import jax.numpy as jnp
from jax.experimental import pallas as pl
from jax.experimental.pallas import tpu as pltpu


def _softplus(y):
    # PyTorch Softplus defaults: beta=1, threshold=20.
    return jnp.where(y > 20.0, y, jnp.log1p(jnp.exp(jnp.minimum(y, 20.0))))


# ---------------------------------------------------------------------------
# Fused Pallas kernel
# ---------------------------------------------------------------------------
def make_fused_kernel(num_layers, T, Bp, H):
    """Build the fused kernel. All sizes are static Python ints.

    Kernel args (in order):
      x_in   (T*Bp, Din)  merged time-major rows (hist feats | fcst feats | bias 1s)
      w_in   (Din, H)     stacked [hist_w; fcst_w; hist_b; fcst_b]
      per layer: w_ih (H, 4H), w_hh (H, 4H), b (1, 4H)  (b = b_ih + b_hh)
      head_w (H, F), head_b (1, F)
      out    (Bp, F)
      scratch: gx0 (T*Bp, 4H)  hoisted layer-0 input-projection gates
    """

    def kernel(*refs):
        it = iter(refs)
        x_in = next(it)
        w_in = next(it)
        lstm = [(next(it), next(it), next(it)) for _ in range(num_layers)]
        head_w, head_b = next(it), next(it)
        out_ref = next(it)
        gx0_scr = next(it)

        # ---- merged hist/fcst projection + hoisted layer-0 input projection.
        # Both are single large MXU matmuls, entirely off the serial chain.
        w_ih0, _, b0 = lstm[0]
        x0 = jnp.dot(x_in[...], w_in[...], preferred_element_type=jnp.float32)
        gx0_scr[...] = (
            jnp.dot(x0, w_ih0[...], preferred_element_type=jnp.float32) + b0[...])

        # ---- stage weights once (not re-read inside the serial steps). ------
        whh = [wh[...] for (_, wh, _) in lstm]                   # (H, 4H)
        wih = [None] + [wi[...] for (wi, _, _) in lstm[1:]]      # (H, 4H)
        bias = [None] + [b[...] for (_, _, b) in lstm[1:]]       # (1, 4H)

        # ---- stacked LSTM, wavefront (diagonal) schedule ---------------------
        # TODO(synk): inter-layer dropout (training-mode nn.LSTM) and non-zero
        # initial (h0, c0) are unsupported; inference path with zero state.
        # TODO(synk): replace the static unrolled wave loop with
        # lax.fori_loop(..., unroll=k) and chunk gx0_scr over time once T grows
        # beyond ~32 (vreg pressure / v7x 64 MiB VMEM).
        zeros = jnp.zeros((Bp, H), jnp.float32)
        h = [zeros for _ in range(num_layers)]
        c = [zeros for _ in range(num_layers)]
        y = [zeros for _ in range(num_layers)]   # latest per-layer output

        for wv in range(T + num_layers - 1):
            # Top-down within a wave: layer l consumes layer l-1's output from
            # the PREVIOUS wave (same time step t) before it is overwritten.
            for l in range(num_layers - 1, -1, -1):
                t = wv - l
                if not (0 <= t < T):
                    continue
                if l == 0:
                    gx = gx0_scr[pl.ds(t * Bp, Bp), :]
                else:
                    # Per-step input projection from the previous layer's h.
                    # Depends only on the previous wave -> off the h->h chain.
                    gx = jnp.dot(y[l - 1], wih[l],
                                 preferred_element_type=jnp.float32) + bias[l]
                gates = gx + jnp.dot(h[l], whh[l],
                                     preferred_element_type=jnp.float32)
                # PyTorch LSTM gate order: i, f, g, o.
                i_g = jax.nn.sigmoid(gates[:, 0 * H:1 * H])
                f_g = jax.nn.sigmoid(gates[:, 1 * H:2 * H])
                g_g = jnp.tanh(gates[:, 2 * H:3 * H])
                o_g = jax.nn.sigmoid(gates[:, 3 * H:4 * H])
                c[l] = f_g * c[l] + i_g * g_g
                h[l] = o_g * jnp.tanh(c[l])
                y[l] = h[l]

        # ---- head: Linear + Softplus on the last timestep of the top layer --
        out = (jnp.dot(h[num_layers - 1], head_w[...],
                       preferred_element_type=jnp.float32) + head_b[...])
        out_ref[...] = _softplus(out)

    return kernel


# ---------------------------------------------------------------------------
# Parameter construction (deterministic, mirrors nn.Module __init__ shapes)
# ---------------------------------------------------------------------------
def init_params(key, hist_dim, fcst_dim, config):
    hidden = config["hidden_dim"]
    layers = config["num_layers"]
    future = config["future_hours"]
    use_fcst = config.get("use_forecast", False) and fcst_dim > 0

    def uni(k, shape, bound):
        return jax.random.uniform(k, shape, jnp.float32, -bound, bound)

    keys = jax.random.split(key, 8 + 4 * layers)
    ki = iter(keys)
    p = {"hidden": hidden}

    b_h = 1.0 / jnp.sqrt(hist_dim)
    p["hist_w_t"] = uni(next(ki), (hist_dim, hidden), b_h)   # (in, out)
    p["hist_b"] = uni(next(ki), (hidden,), b_h)

    if use_fcst:
        b_f = 1.0 / jnp.sqrt(fcst_dim)
        p["fcst_w_t"] = uni(next(ki), (fcst_dim, hidden), b_f)
        p["fcst_b"] = uni(next(ki), (hidden,), b_f)
    else:
        p["fcst_w_t"] = None
        p["fcst_b"] = None

    b_r = 1.0 / jnp.sqrt(hidden)
    lstm = []
    for _ in range(layers):
        w_ih_t = uni(next(ki), (hidden, 4 * hidden), b_r)    # (in, 4H)
        w_hh_t = uni(next(ki), (hidden, 4 * hidden), b_r)    # (H, 4H)
        b_ih = uni(next(ki), (4 * hidden,), b_r)
        b_hh = uni(next(ki), (4 * hidden,), b_r)
        lstm.append((w_ih_t, w_hh_t, b_ih + b_hh))
    p["lstm"] = lstm

    b_o = 1.0 / jnp.sqrt(hidden)
    p["head_w_t"] = uni(next(ki), (hidden, future), b_o)
    p["head_b"] = uni(next(ki), (future,), b_o)
    return p


# ---------------------------------------------------------------------------
# Forward pass (single fused Pallas call) and pure-JAX reference
# ---------------------------------------------------------------------------
def forward(params, hist, fcst=None):
    B, Th, Dh = hist.shape
    H = params["hidden"]
    F = params["head_b"].shape[0]
    use_fcst = (params["fcst_w_t"] is not None and fcst is not None
                and fcst.shape[-1] > 0)

    Bp = ((B + 7) // 8) * 8  # pad batch to a sublane multiple

    if use_fcst:
        _, Tf, Df = fcst.shape
    else:
        Tf, Df = 0, 0
    n_bias = 2 if use_fcst else 1
    Din = Dh + Df + n_bias
    T = Th + Tf

    # ---- merged hist/fcst projection operands ------------------------------
    # Feature layout of each row: [hist feats | fcst feats | hist-bias 1 | fcst-bias 1]
    # so both projections (and their biases) are ONE matmul inside the kernel.
    # TODO(synk): for large T*B*D express this layout via BlockSpec index_maps
    # instead of materializing a padded copy in HBM (irrelevant at toy sizes).
    def to_rows(x, T_, D, col0, bias_col):
        x = jnp.transpose(x, (1, 0, 2))                       # time-major (T_, B, D)
        rows = jnp.zeros((T_, Bp, Din), jnp.float32)
        rows = rows.at[:, :B, col0:col0 + D].set(x)
        rows = rows.at[:, :B, bias_col].set(1.0)
        return rows.reshape(T_ * Bp, Din)

    parts = [to_rows(hist, Th, Dh, 0, Dh + Df)]
    if use_fcst:
        parts.append(to_rows(fcst, Tf, Df, Dh, Dh + Df + 1))
    x_in = jnp.concatenate(parts, axis=0)                     # (T*Bp, Din)

    w_rows = [params["hist_w_t"]]
    if use_fcst:
        w_rows.append(params["fcst_w_t"])
    w_rows.append(params["hist_b"].reshape(1, H))
    if use_fcst:
        w_rows.append(params["fcst_b"].reshape(1, H))
    w_in = jnp.concatenate(w_rows, axis=0)                    # (Din, H)

    lstm = params["lstm"]
    num_layers = len(lstm)
    args = [x_in, w_in]
    for (w_ih_t, w_hh_t, b) in lstm:
        args += [w_ih_t, w_hh_t, b.reshape(1, 4 * H)]
    args += [params["head_w_t"], params["head_b"].reshape(1, F)]

    # Rough FLOP / transcendental / byte hints for the XLA scheduler.
    flops = 2 * T * Bp * (Din * H + H * 4 * H)                      # proj + gx0
    flops += 2 * T * Bp * 4 * H * H                                 # layer-0 recurrence
    flops += (num_layers - 1) * T * 2 * (2 * Bp * H * 4 * H)        # deep layers
    flops += 2 * Bp * H * F
    transc = T * num_layers * Bp * 5 * H + 2 * Bp * F
    bytes_accessed = 4 * (sum(int(a.size) for a in args) + Bp * F)
    cost = pl.CostEstimate(flops=int(flops), transcendentals=int(transc),
                           bytes_accessed=int(bytes_accessed))

    kernel = make_fused_kernel(num_layers, T, Bp, H)
    out = pl.pallas_call(
        kernel,
        out_shape=jax.ShapeDtypeStruct((Bp, F), jnp.float32),
        scratch_shapes=[
            pltpu.VMEM((T * Bp, 4 * H), jnp.float32),   # hoisted layer-0 gates
        ],
        compiler_params=pltpu.CompilerParams(
            vmem_limit_bytes=32 * 1024 * 1024),
        cost_estimate=cost,
    )(*args)
    return out[:B]


def ref_forward(params, hist, fcst=None):
    B, Th, Dh = hist.shape
    hidden = params["hidden"]
    seqs = [(hist.reshape(B * Th, Dh) @ params["hist_w_t"]
             + params["hist_b"]).reshape(B, Th, hidden)]
    if fcst is not None and params["fcst_w_t"] is not None and fcst.shape[-1] > 0:
        _, Tf, Df = fcst.shape
        seqs.append((fcst.reshape(B * Tf, Df) @ params["fcst_w_t"]
                     + params["fcst_b"]).reshape(B, Tf, hidden))
    seq = jnp.concatenate(seqs, axis=1)
    x = jnp.transpose(seq, (1, 0, 2))

    def run_layer(x_tbh, w_ih_t, w_hh_t, b):
        T_, B_, H = x_tbh.shape

        def step(carry, xt):
            h, c = carry
            gates = xt @ w_ih_t + h @ w_hh_t + b
            i = jax.nn.sigmoid(gates[:, :H])
            f = jax.nn.sigmoid(gates[:, H:2 * H])
            g = jnp.tanh(gates[:, 2 * H:3 * H])
            o = jax.nn.sigmoid(gates[:, 3 * H:])
            c = f * c + i * g
            h = o * jnp.tanh(c)
            return (h, c), h

        init = (jnp.zeros((B_, H), jnp.float32), jnp.zeros((B_, H), jnp.float32))
        _, hs = jax.lax.scan(step, init, x_tbh)
        return hs

    for (w_ih_t, w_hh_t, b) in params["lstm"]:
        x = run_layer(x, w_ih_t, w_hh_t, b)
    last = x[-1]
    y = last @ params["head_w_t"] + params["head_b"]
    return _softplus(y)


# ---------------------------------------------------------------------------
if __name__ == "__main__":
    config = {
        "hidden_dim": 32,
        "num_layers": 2,
        "dropout": 0.0,
        "use_forecast": True,
        "future_hours": 8,
    }
    hist_dim, fcst_dim = 4, 3
    B, T_hist, T_fcst = 2, 8, 4

    key = jax.random.PRNGKey(0)
    k_p, k_h, k_f = jax.random.split(key, 3)
    params = init_params(k_p, hist_dim, fcst_dim, config)
    hist = jax.random.normal(k_h, (B, T_hist, hist_dim), jnp.float32)
    fcst = jax.random.normal(k_f, (B, T_fcst, fcst_dim), jnp.float32)

    out = forward(params, hist, fcst)
    out = jax.block_until_ready(out)
    assert out.shape == (B, config["future_hours"]), out.shape

    ref = jax.block_until_ready(ref_forward(params, hist, fcst))
    assert jnp.allclose(out, ref, atol=1e-4, rtol=1e-4), (out, ref)

    print("KERNEL_OK")
</pallas_src>

<mosaic_0001>
module attributes {stable_mosaic.version = 11 : i64} {
  func.func @kernel(%arg0: memref<96x9xf32, #tpu.memory_space<vmem>>, %arg1: memref<9x32xf32, #tpu.memory_space<vmem>>, %arg2: memref<32x128xf32, #tpu.memory_space<vmem>>, %arg3: memref<32x128xf32, #tpu.memory_space<vmem>>, %arg4: memref<1x128xf32, #tpu.memory_space<vmem>>, %arg5: memref<32x128xf32, #tpu.memory_space<vmem>>, %arg6: memref<32x128xf32, #tpu.memory_space<vmem>>, %arg7: memref<1x128xf32, #tpu.memory_space<vmem>>, %arg8: memref<32x8xf32, #tpu.memory_space<vmem>>, %arg9: memref<1x8xf32, #tpu.memory_space<vmem>>, %arg10: memref<8x8xf32, #tpu.memory_space<vmem>>, %arg11: memref<96x128xf32, #tpu.memory_space<vmem>>) attributes {dimension_semantics = [], scalar_prefetch = 0 : i64, scratch_operands = 1 : i64, tpu.core_type = #tpu.core_type<tc>} {
    %c0 = arith.constant 0 : index
    %c0_0 = arith.constant 0 : index
    %0 = vector.load %arg0[%c0, %c0_0] : memref<96x9xf32, #tpu.memory_space<vmem>>, vector<96x9xf32>
    %c0_1 = arith.constant 0 : index
    %c0_2 = arith.constant 0 : index
    %1 = vector.load %arg1[%c0_1, %c0_2] : memref<9x32xf32, #tpu.memory_space<vmem>>, vector<9x32xf32>
    %cst = arith.constant dense<0.000000e+00> : vector<96x32xf32>
    %2 = tpu.matmul %0, %1, %cst {dimension_numbers = #tpu.dot_dimension_numbers<[1], [0], [0], [1], [0, 0, 1, 1], [], []>} : vector<96x9xf32>, vector<9x32xf32>, vector<96x32xf32> -> vector<96x32xf32>
    %c0_3 = arith.constant 0 : index
    %c0_4 = arith.constant 0 : index
    %3 = vector.load %arg2[%c0_3, %c0_4] : memref<32x128xf32, #tpu.memory_space<vmem>>, vector<32x128xf32>
    %cst_5 = arith.constant dense<0.000000e+00> : vector<96x128xf32>
    %4 = tpu.matmul %2, %3, %cst_5 {dimension_numbers = #tpu.dot_dimension_numbers<[1], [0], [0], [1], [0, 0, 1, 1], [], []>} : vector<96x32xf32>, vector<32x128xf32>, vector<96x128xf32> -> vector<96x128xf32>
    %c0_6 = arith.constant 0 : index
    %c0_7 = arith.constant 0 : index
    %5 = vector.load %arg4[%c0_6, %c0_7] : memref<1x128xf32, #tpu.memory_space<vmem>>, vector<1x128xf32>
    %6 = vector.broadcast %5 : vector<1x128xf32> to vector<96x128xf32>
    %7 = arith.addf %4, %6 : vector<96x128xf32>
    %c0_8 = arith.constant 0 : index
    %c0_9 = arith.constant 0 : index
    %8 = vector.load %arg11[%c0_8, %c0_9] : memref<96x128xf32, #tpu.memory_space<vmem>>, vector<96x128xf32>
    tpu.vector_store %arg11[%c0_8, %c0_9], %7 {strides = array<i32>} : memref<96x128xf32, #tpu.memory_space<vmem>>, vector<96x128xf32>,
    %c0_10 = arith.constant 0 : index
    %c0_11 = arith.constant 0 : index
    %9 = vector.load %arg3[%c0_10, %c0_11] : memref<32x128xf32, #tpu.memory_space<vmem>>, vector<32x128xf32>
    %c0_12 = arith.constant 0 : index
    %c0_13 = arith.constant 0 : index
    %10 = vector.load %arg6[%c0_12, %c0_13] : memref<32x128xf32, #tpu.memory_space<vmem>>, vector<32x128xf32>
    %c0_14 = arith.constant 0 : index
    %c0_15 = arith.constant 0 : index
    %11 = vector.load %arg5[%c0_14, %c0_15] : memref<32x128xf32, #tpu.memory_space<vmem>>, vector<32x128xf32>
    %c0_16 = arith.constant 0 : index
    %c0_17 = arith.constant 0 : index
    %12 = vector.load %arg7[%c0_16, %c0_17] : memref<1x128xf32, #tpu.memory_space<vmem>>, vector<1x128xf32>
    %cst_18 = arith.constant 0.000000e+00 : f32
    %13 = vector.broadcast %cst_18 : f32 to vector<8x32xf32>
    %c0_19 = arith.constant 0 : index
    %c0_20 = arith.constant 0 : index
    %14 = vector.load %arg11[%c0_19, %c0_20] : memref<96x128xf32, #tpu.memory_space<vmem>>, vector<8x128xf32>
    %cst_21 = arith.constant dense<0.000000e+00> : vector<8x128xf32>
    %15 = tpu.matmul %13, %9, %cst_21 {dimension_numbers = #tpu.dot_dimension_numbers<[1], [0], [0], [1], [0, 0, 1, 1], [], []>} : vector<8x32xf32>, vector<32x128xf32>, vector<8x128xf32> -> vector<8x128xf32>
    %16 = arith.addf %14, %15 : vector<8x128xf32>
    %17 = vector.extract_strided_slice %16 {offsets = [0, 0], sizes = [8, 32], strides = [1, 1]} : vector<8x128xf32> to vector<8x32xf32>
    %18 = arith.negf %17 : vector<8x32xf32>
    %19 = math.exp %18 : vector<8x32xf32>
    %cst_22 = arith.constant 1.000000e+00 : f32
    %20 = vector.broadcast %cst_22 : f32 to vector<8x32xf32>
    %21 = arith.addf %20, %19 : vector<8x32xf32>
    %22 = arith.divf %20, %21 : vector<8x32xf32>
    %23 = vector.extract_strided_slice %16 {offsets = [0, 32], sizes = [8, 32], strides = [1, 1]} : vector<8x128xf32> to vector<8x32xf32>
    %24 = arith.negf %23 : vector<8x32xf32>
    %25 = math.exp %24 : vector<8x32xf32>
    %cst_23 = arith.constant 1.000000e+00 : f32
    %26 = vector.broadcast %cst_23 : f32 to vector<8x32xf32>
    %27 = arith.addf %26, %25 : vector<8x32xf32>
    %28 = arith.divf %26, %27 : vector<8x32xf32>
    %29 = vector.extract_strided_slice %16 {offsets = [0, 64], sizes = [8, 32], strides = [1, 1]} : vector<8x128xf32> to vector<8x32xf32>
    %30 = math.tanh %29 : vector<8x32xf32>
    %31 = vector.extract_strided_slice %16 {offsets = [0, 96], sizes = [8, 32], strides = [1, 1]} : vector<8x128xf32> to vector<8x32xf32>
    %32 = arith.negf %31 : vector<8x32xf32>
    %33 = math.exp %32 : vector<8x32xf32>
    %cst_24 = arith.constant 1.000000e+00 : f32
    %34 = vector.broadcast %cst_24 : f32 to vector<8x32xf32>
    %35 = arith.addf %34, %33 : vector<8x32xf32>
    %36 = arith.divf %34, %35 : vector<8x32xf32>
    %37 = arith.mulf %28, %13 : vector<8x32xf32>
    %38 = arith.mulf %22, %30 : vector<8x32xf32>
    %39 = arith.addf %37, %38 : vector<8x32xf32>
    %40 = math.tanh %39 : vector<8x32xf32>
    %41 = arith.mulf %36, %40 : vector<8x32xf32>
    %cst_25 = arith.constant dense<0.000000e+00> : vector<8x128xf32>
    %42 = tpu.matmul %41, %11, %cst_25 {dimension_numbers = #tpu.dot_dimension_numbers<[1], [0], [0], [1], [0, 0, 1, 1], [], []>} : vector<8x32xf32>, vector<32x128xf32>, vector<8x128xf32> -> vector<8x128xf32>
    %43 = vector.broadcast %12 : vector<1x128xf32> to vector<8x128xf32>
    %44 = arith.addf %42, %43 : vector<8x128xf32>
    %cst_26 = arith.constant dense<0.000000e+00> : vector<8x128xf32>
    %45 = tpu.matmul %13, %10, %cst_26 {dimension_numbers = #tpu.dot_dimension_numbers<[1], [0], [0], [1], [0, 0, 1, 1], [], []>} : vector<8x32xf32>, vector<32x128xf32>, vector<8x128xf32> -> vector<8x128xf32>
    %46 = arith.addf %44, %45 : vector<8x128xf32>
    %47 = vector.extract_strided_slice %46 {offsets = [0, 0], sizes = [8, 32], strides = [1, 1]} : vector<8x128xf32> to vector<8x32xf32>
    %48 = arith.negf %47 : vector<8x32xf32>
    %49 = math.exp %48 : vector<8x32xf32>
    %cst_27 = arith.constant 1.000000e+00 : f32
    %50 = vector.broadcast %cst_27 : f32 to vector<8x32xf32>
    %51 = arith.addf %50, %49 : vector<8x32xf32>
    %52 = arith.divf %50, %51 : vector<8x32xf32>
    %53 = vector.extract_strided_slice %46 {offsets = [0, 32], sizes = [8, 32], strides = [1, 1]} : vector<8x128xf32> to vector<8x32xf32>
    %54 = arith.negf %53 : vector<8x32xf32>
    %55 = math.exp %54 : vector<8x32xf32>
    %cst_28 = arith.constant 1.000000e+00 : f32
    %56 = vector.broadcast %cst_28 : f32 to vector<8x32xf32>
    %57 = arith.addf %56, %55 : vector<8x32xf32>
    %58 = arith.divf %56, %57 : vector<8x32xf32>
    %59 = vector.extract_strided_slice %46 {offsets = [0, 64], sizes = [8, 32], strides = [1, 1]} : vector<8x128xf32> to vector<8x32xf32>
    %60 = math.tanh %59 : vector<8x32xf32>
    %61 = vector.extract_strided_slice %46 {offsets = [0, 96], sizes = [8, 32], strides = [1, 1]} : vector<8x128xf32> to vector<8x32xf32>
    %62 = arith.negf %61 : vector<8x32xf32>
    %63 = math.exp %62 : vector<8x32xf32>
    %cst_29 = arith.constant 1.000000e+00 : f32
    %64 = vector.broadcast %cst_29 : f32 to vector<8x32xf32>
    %65 = arith.addf %64, %63 : vector<8x32xf32>
    %66 = arith.divf %64, %65 : vector<8x32xf32>
    %67 = arith.mulf %58, %13 : vector<8x32xf32>
    %68 = arith.mulf %52, %60 : vector<8x32xf32>
    %69 = arith.addf %67, %68 : vector<8x32xf32>
    %70 = math.tanh %69 : vector<8x32xf32>
    %71 = arith.mulf %66, %70 : vector<8x32xf32>
    %c8 = arith.constant 8 : index
    %c0_30 = arith.constant 0 : index
    %72 = vector.load %arg11[%c8, %c0_30] : memref<96x128xf32, #tpu.memory_space<vmem>>, vector<8x128xf32>
    %cst_31 = arith.constant dense<0.000000e+00> : vector<8x128xf32>
    %73 = tpu.matmul %41, %9, %cst_31 {dimension_numbers = #tpu.dot_dimension_numbers<[1], [0], [0], [1], [0, 0, 1, 1], [], []>} : vector<8x32xf32>, vector<32x128xf32>, vector<8x128xf32> -> vector<8x128xf32>
    %74 = arith.addf %72, %73 : vector<8x128xf32>
    %75 = vector.extract_strided_slice %74 {offsets = [0, 0], sizes = [8, 32], strides = [1, 1]} : vector<8x128xf32> to vector<8x32xf32>
    %76 = arith.negf %75 : vector<8x32xf32>
    %77 = math.exp %76 : vector<8x32xf32>
    %cst_32 = arith.constant 1.000000e+00 : f32
    %78 = vector.broadcast %cst_32 : f32 to vector<8x32xf32>
    %79 = arith.addf %78, %77 : vector<8x32xf32>
    %80 = arith.divf %78, %79 : vector<8x32xf32>
    %81 = vector.extract_strided_slice %74 {offsets = [0, 32], sizes = [8, 32], strides = [1, 1]} : vector<8x128xf32> to vector<8x32xf32>
    %82 = arith.negf %81 : vector<8x32xf32>
    %83 = math.exp %82 : vector<8x32xf32>
    %cst_33 = arith.constant 1.000000e+00 : f32
    %84 = vector.broadcast %cst_33 : f32 to vector<8x32xf32>
    %85 = arith.addf %84, %83 : vector<8x32xf32>
    %86 = arith.divf %84, %85 : vector<8x32xf32>
    %87 = vector.extract_strided_slice %74 {offsets = [0, 64], sizes = [8, 32], strides = [1, 1]} : vector<8x128xf32> to vector<8x32xf32>
    %88 = math.tanh %87 : vector<8x32xf32>
    %89 = vector.extract_strided_slice %74 {offsets = [0, 96], sizes = [8, 32], strides = [1, 1]} : vector<8x128xf32> to vector<8x32xf32>
    %90 = arith.negf %89 : vector<8x32xf32>
    %91 = math.exp %90 : vector<8x32xf32>
    %cst_34 = arith.constant 1.000000e+00 : f32
    %92 = vector.broadcast %cst_34 : f32 to vector<8x32xf32>
    %93 = arith.addf %92, %91 : vector<8x32xf32>
    %94 = arith.divf %92, %93 : vector<8x32xf32>
    %95 = arith.mulf %86, %39 : vector<8x32xf32>
    %96 = arith.mulf %80, %88 : vector<8x32xf32>
    %97 = arith.addf %95, %96 : vector<8x32xf32>
    %98 = math.tanh %97 : vector<8x32xf32>
    %99 = arith.mulf %94, %98 : vector<8x32xf32>
    %cst_35 = arith.constant dense<0.000000e+00> : vector<8x128xf32>
    %100 = tpu.matmul %99, %11, %cst_35 {dimension_numbers = #tpu.dot_dimension_numbers<[1], [0], [0], [1], [0, 0, 1, 1], [], []>} : vector<8x32xf32>, vector<32x128xf32>, vector<8x128xf32> -> vector<8x128xf32>
    %101 = vector.broadcast %12 : vector<1x128xf32> to vector<8x128xf32>
    %102 = arith.addf %100, %101 : vector<8x128xf32>
    %cst_36 = arith.constant dense<0.000000e+00> : vector<8x128xf32>
    %103 = tpu.matmul %71, %10, %cst_36 {dimension_numbers = #tpu.dot_dimension_numbers<[1], [0], [0], [1], [0, 0, 1, 1], [], []>} : vector<8x32xf32>, vector<32x128xf32>, vector<8x128xf32> -> vector<8x128xf32>
    %104 = arith.addf %102, %103 : vector<8x128xf32>
    %105 = vector.extract_strided_slice %104 {offsets = [0, 0], sizes = [8, 32], strides = [1, 1]} : vector<8x128xf32> to vector<8x32xf32>
    %106 = arith.negf %105 : vector<8x32xf32>
    %107 = math.exp %106 : vector<8x32xf32>
    %cst_37 = arith.constant 1.000000e+00 : f32
    %108 = vector.broadcast %cst_37 : f32 to vector<8x32xf32>
    %109 = arith.addf %108, %107 : vector<8x32xf32>
    %110 = arith.divf %108, %109 : vector<8x32xf32>
    %111 = vector.extract_strided_slice %104 {offsets = [0, 32], sizes = [8, 32], strides = [1, 1]} : vector<8x128xf32> to vector<8x32xf32>
    %112 = arith.negf %111 : vector<8x32xf32>
    %113 = math.exp %112 : vector<8x32xf32>
    %cst_38 = arith.constant 1.000000e+00 : f32
    %114 = vector.broadcast %cst_38 : f32 to vector<8x32xf32>
    %115 = arith.addf %114, %113 : vector<8x32xf32>
    %116 = arith.divf %114, %115 : vector<8x32xf32>
    %117 = vector.extract_strided_slice %104 {offsets = [0, 64], sizes = [8, 32], strides = [1, 1]} : vector<8x128xf32> to vector<8x32xf32>
    %118 = math.tanh %117 : vector<8x32xf32>
    %119 = vector.extract_strided_slice %104 {offsets = [0, 96], sizes = [8, 32], strides = [1, 1]} : vector<8x128xf32> to vector<8x32xf32>
    %120 = arith.negf %119 : vector<8x32xf32>
    %121 = math.exp %120 : vector<8x32xf32>
    %cst_39 = arith.constant 1.000000e+00 : f32
    %122 = vector.broadcast %cst_39 : f32 to vector<8x32xf32>
    %123 = arith.addf %122, %121 : vector<8x32xf32>
    %124 = arith.divf %122, %123 : vector<8x32xf32>
    %125 = arith.mulf %116, %69 : vector<8x32xf32>
    %126 = arith.mulf %110, %118 : vector<8x32xf32>
    %127 = arith.addf %125, %126 : vector<8x32xf32>
    %128 = math.tanh %127 : vector<8x32xf32>
    %129 = arith.mulf %124, %128 : vector<8x32xf32>
    %c16 = arith.constant 16 : index
    %c0_40 = arith.constant 0 : index
    %130 = vector.load %arg11[%c16, %c0_40] : memref<96x128xf32, #tpu.memory_space<vmem>>, vector<8x128xf32>
    %cst_41 = arith.constant dense<0.000000e+00> : vector<8x128xf32>
    %131 = tpu.matmul %99, %9, %cst_41 {dimension_numbers = #tpu.dot_dimension_numbers<[1], [0], [0], [1], [0, 0, 1, 1], [], []>} : vector<8x32xf32>, vector<32x128xf32>, vector<8x128xf32> -> vector<8x128xf32>
    %132 = arith.addf %130, %131 : vector<8x128xf32>
    %133 = vector.extract_strided_slice %132 {offsets = [0, 0], sizes = [8, 32], strides = [1, 1]} : vector<8x128xf32> to vector<8x32xf32>
    %134 = arith.negf %133 : vector<8x32xf32>
    %135 = math.exp %134 : vector<8x32xf32>
    %cst_42 = arith.constant 1.000000e+00 : f32
    %136 = vector.broadcast %cst_42 : f32 to vector<8x32xf32>
    %137 = arith.addf %136, %135 : vector<8x32xf32>
    %138 = arith.divf %136, %137 : vector<8x32xf32>
    %139 = vector.extract_strided_slice %132 {offsets = [0, 32], sizes = [8, 32], strides = [1, 1]} : vector<8x128xf32> to vector<8x32xf32>
    %140 = arith.negf %139 : vector<8x32xf32>
    %141 = math.exp %140 : vector<8x32xf32>
    %cst_43 = arith.constant 1.000000e+00 : f32
    %142 = vector.broadcast %cst_43 : f32 to vector<8x32xf32>
    %143 = arith.addf %142, %141 : vector<8x32xf32>
    %144 = arith.divf %142, %143 : vector<8x32xf32>
    %145 = vector.extract_strided_slice %132 {offsets = [0, 64], sizes = [8, 32], strides = [1, 1]} : vector<8x128xf32> to vector<8x32xf32>
    %146 = math.tanh %145 : vector<8x32xf32>
    %147 = vector.extract_strided_slice %132 {offsets = [0, 96], sizes = [8, 32], strides = [1, 1]} : vector<8x128xf32> to vector<8x32xf32>
    %148 = arith.negf %147 : vector<8x32xf32>
    %149 = math.exp %148 : vector<8x32xf32>
    %cst_44 = arith.constant 1.000000e+00 : f32
    %150 = vector.broadcast %cst_44 : f32 to vector<8x32xf32>
    %151 = arith.addf %150, %149 : vector<8x32xf32>
    %152 = arith.divf %150, %151 : vector<8x32xf32>
    %153 = arith.mulf %144, %97 : vector<8x32xf32>
    %154 = arith.mulf %138, %146 : vector<8x32xf32>
    %155 = arith.addf %153, %154 : vector<8x32xf32>
    %156 = math.tanh %155 : vector<8x32xf32>
    %157 = arith.mulf %152, %156 : vector<8x32xf32>
    %cst_45 = arith.constant dense<0.000000e+00> : vector<8x128xf32>
    %158 = tpu.matmul %157, %11, %cst_45 {dimension_numbers = #tpu.dot_dimension_numbers<[1], [0], [0], [1], [0, 0, 1, 1], [], []>} : vector<8x32xf32>, vector<32x128xf32>, vector<8x128xf32> -> vector<8x128xf32>
    %159 = vector.broadcast %12 : vector<1x128xf32> to vector<8x128xf32>
    %160 = arith.addf %158, %159 : vector<8x128xf32>
    %cst_46 = arith.constant dense<0.000000e+00> : vector<8x128xf32>
    %161 = tpu.matmul %129, %10, %cst_46 {dimension_numbers = #tpu.dot_dimension_numbers<[1], [0], [0], [1], [0, 0, 1, 1], [], []>} : vector<8x32xf32>, vector<32x128xf32>, vector<8x128xf32> -> vector<8x128xf32>
    %162 = arith.addf %160, %161 : vector<8x128xf32>
    %163 = vector.extract_strided_slice %162 {offsets = [0, 0], sizes = [8, 32], strides = [1, 1]} : vector<8x128xf32> to vector<8x32xf32>
    %164 = arith.negf %163 : vector<8x32xf32>
    %165 = math.exp %164 : vector<8x32xf32>
    %cst_47 = arith.constant 1.000000e+00 : f32
    %166 = vector.broadcast %cst_47 : f32 to vector<8x32xf32>
    %167 = arith.addf %166, %165 : vector<8x32xf32>
    %168 = arith.divf %166, %167 : vector<8x32xf32>
    %169 = vector.extract_strided_slice %162 {offsets = [0, 32], sizes = [8, 32], strides = [1, 1]} : vector<8x128xf32> to vector<8x32xf32>
    %170 = arith.negf %169 : vector<8x32xf32>
    %171 = math.exp %170 : vector<8x32xf32>
    %cst_48 = arith.constant 1.000000e+00 : f32
    %172 = vector.broadcast %cst_48 : f32 to vector<8x32xf32>
    %173 = arith.addf %172, %171 : vector<8x32xf32>
    %174 = arith.divf %172, %173 : vector<8x32xf32>
    %175 = vector.extract_strided_slice %162 {offsets = [0, 64], sizes = [8, 32], strides = [1, 1]} : vector<8x128xf32> to vector<8x32xf32>
    %176 = math.tanh %175 : vector<8x32xf32>
    %177 = vector.extract_strided_slice %162 {offsets = [0, 96], sizes = [8, 32], strides = [1, 1]} : vector<8x128xf32> to vector<8x32xf32>
    %178 = arith.negf %177 : vector<8x32xf32>
    %179 = math.exp %178 : vector<8x32xf32>
    %cst_49 = arith.constant 1.000000e+00 : f32
    %180 = vector.broadcast %cst_49 : f32 to vector<8x32xf32>
    %181 = arith.addf %180, %179 : vector<8x32xf32>
    %182 = arith.divf %180, %181 : vector<8x32xf32>
    %183 = arith.mulf %174, %127 : vector<8x32xf32>
    %184 = arith.mulf %168, %176 : vector<8x32xf32>
    %185 = arith.addf %183, %184 : vector<8x32xf32>
    %186 = math.tanh %185 : vector<8x32xf32>
    %187 = arith.mulf %182, %186 : vector<8x32xf32>
    %c24 = arith.constant 24 : index
    %c0_50 = arith.constant 0 : index
    %188 = vector.load %arg11[%c24, %c0_50] : memref<96x128xf32, #tpu.memory_space<vmem>>, vector<8x128xf32>
    %cst_51 = arith.constant dense<0.000000e+00> : vector<8x128xf32>
    %189 = tpu.matmul %157, %9, %cst_51 {dimension_numbers = #tpu.dot_dimension_numbers<[1], [0], [0], [1], [0, 0, 1, 1], [], []>} : vector<8x32xf32>, vector<32x128xf32>, vector<8x128xf32> -> vector<8x128xf32>
    %190 = arith.addf %188, %189 : vector<8x128xf32>
    %191 = vector.extract_strided_slice %190 {offsets = [0, 0], sizes = [8, 32], strides = [1, 1]} : vector<8x128xf32> to vector<8x32xf32>
    %192 = arith.negf %191 : vector<8x32xf32>
    %193 = math.exp %192 : vector<8x32xf32>
    %cst_52 = arith.constant 1.000000e+00 : f32
    %194 = vector.broadcast %cst_52 : f32 to vector<8x32xf32>
    %195 = arith.addf %194, %193 : vector<8x32xf32>
    %196 = arith.divf %194, %195 : vector<8x32xf32>
    %197 = vector.extract_strided_slice %190 {offsets = [0, 32], sizes = [8, 32], strides = [1, 1]} : vector<8x128xf32> to vector<8x32xf32>
    %198 = arith.negf %197 : vector<8x32xf32>
    %199 = math.exp %198 : vector<8x32xf32>
    %cst_53 = arith.constant 1.000000e+00 : f32
    %200 = vector.broadcast %cst_53 : f32 to vector<8x32xf32>
    %201 = arith.addf %200, %199 : vector<8x32xf32>
    %202 = arith.divf %200, %201 : vector<8x32xf32>
    %203 = vector.extract_strided_slice %190 {offsets = [0, 64], sizes = [8, 32], strides = [1, 1]} : vector<8x128xf32> to vector<8x32xf32>
    %204 = math.tanh %203 : vector<8x32xf32>
    %205 = vector.extract_strided_slice %190 {offsets = [0, 96], sizes = [8, 32], strides = [1, 1]} : vector<8x128xf32> to vector<8x32xf32>
    %206 = arith.negf %205 : vector<8x32xf32>
    %207 = math.exp %206 : vector<8x32xf32>
    %cst_54 = arith.constant 1.000000e+00 : f32
    %208 = vector.broadcast %cst_54 : f32 to vector<8x32xf32>
    %209 = arith.addf %208, %207 : vector<8x32xf32>
    %210 = arith.divf %208, %209 : vector<8x32xf32>
    %211 = arith.mulf %202, %155 : vector<8x32xf32>
    %212 = arith.mulf %196, %204 : vector<8x32xf32>
    %213 = arith.addf %211, %212 : vector<8x32xf32>
    %214 = math.tanh %213 : vector<8x32xf32>
    %215 = arith.mulf %210, %214 : vector<8x32xf32>
    %cst_55 = arith.constant dense<0.000000e+00> : vector<8x128xf32>
    %216 = tpu.matmul %215, %11, %cst_55 {dimension_numbers = #tpu.dot_dimension_numbers<[1], [0], [0], [1], [0, 0, 1, 1], [], []>} : vector<8x32xf32>, vector<32x128xf32>, vector<8x128xf32> -> vector<8x128xf32>
    %217 = vector.broadcast %12 : vector<1x128xf32> to vector<8x128xf32>
    %218 = arith.addf %216, %217 : vector<8x128xf32>
    %cst_56 = arith.constant dense<0.000000e+00> : vector<8x128xf32>
    %219 = tpu.matmul %187, %10, %cst_56 {dimension_numbers = #tpu.dot_dimension_numbers<[1], [0], [0], [1], [0, 0, 1, 1], [], []>} : vector<8x32xf32>, vector<32x128xf32>, vector<8x128xf32> -> vector<8x128xf32>
    %220 = arith.addf %218, %219 : vector<8x128xf32>
    %221 = vector.extract_strided_slice %220 {offsets = [0, 0], sizes = [8, 32], strides = [1, 1]} : vector<8x128xf32> to vector<8x32xf32>
    %222 = arith.negf %221 : vector<8x32xf32>
    %223 = math.exp %222 : vector<8x32xf32>
    %cst_57 = arith.constant 1.000000e+00 : f32
    %224 = vector.broadcast %cst_57 : f32 to vector<8x32xf32>
    %225 = arith.addf %224, %223 : vector<8x32xf32>
    %226 = arith.divf %224, %225 : vector<8x32xf32>
    %227 = vector.extract_strided_slice %220 {offsets = [0, 32], sizes = [8, 32], strides = [1, 1]} : vector<8x128xf32> to vector<8x32xf32>
    %228 = arith.negf %227 : vector<8x32xf32>
    %229 = math.exp %228 : vector<8x32xf32>
    %cst_58 = arith.constant 1.000000e+00 : f32
    %230 = vector.broadcast %cst_58 : f32 to vector<8x32xf32>
    %231 = arith.addf %230, %229 : vector<8x32xf32>
    %232 = arith.divf %230, %231 : vector<8x32xf32>
    %233 = vector.extract_strided_slice %220 {offsets = [0, 64], sizes = [8, 32], strides = [1, 1]} : vector<8x128xf32> to vector<8x32xf32>
    %234 = math.tanh %233 : vector<8x32xf32>
    %235 = vector.extract_strided_slice %220 {offsets = [0, 96], sizes = [8, 32], strides = [1, 1]} : vector<8x128xf32> to vector<8x32xf32>
    %236 = arith.negf %235 : vector<8x32xf32>
    %237 = math.exp %236 : vector<8x32xf32>
    %cst_59 = arith.constant 1.000000e+00 : f32
    %238 = vector.broadcast %cst_59 : f32 to vector<8x32xf32>
    %239 = arith.addf %238, %237 : vector<8x32xf32>
    %240 = arith.divf %238, %239 : vector<8x32xf32>
    %241 = arith.mulf %232, %185 : vector<8x32xf32>
    %242 = arith.mulf %226, %234 : vector<8x32xf32>
    %243 = arith.addf %241, %242 : vector<8x32xf32>
    %244 = math.tanh %243 : vector<8x32xf32>
    %245 = arith.mulf %240, %244 : vector<8x32xf32>
    %c32 = arith.constant 32 : index
    %c0_60 = arith.constant 0 : index
    %246 = vector.load %arg11[%c32, %c0_60] : memref<96x128xf32, #tpu.memory_space<vmem>>, vector<8x128xf32>
    %cst_61 = arith.constant dense<0.000000e+00> : vector<8x128xf32>
    %247 = tpu.matmul %215, %9, %cst_61 {dimension_numbers = #tpu.dot_dimension_numbers<[1], [0], [0], [1], [0, 0, 1, 1], [], []>} : vector<8x32xf32>, vector<32x128xf32>, vector<8x128xf32> -> vector<8x128xf32>
    %248 = arith.addf %246, %247 : vector<8x128xf32>
    %249 = vector.extract_strided_slice %248 {offsets = [0, 0], sizes = [8, 32], strides = [1, 1]} : vector<8x128xf32> to vector<8x32xf32>
    %250 = arith.negf %249 : vector<8x32xf32>
    %251 = math.exp %250 : vector<8x32xf32>
    %cst_62 = arith.constant 1.000000e+00 : f32
    %252 = vector.broadcast %cst_62 : f32 to vector<8x32xf32>
    %253 = arith.addf %252, %251 : vector<8x32xf32>
    %254 = arith.divf %252, %253 : vector<8x32xf32>
    %255 = vector.extract_strided_slice %248 {offsets = [0, 32], sizes = [8, 32], strides = [1, 1]} : vector<8x128xf32> to vector<8x32xf32>
    %256 = arith.negf %255 : vector<8x32xf32>
    %257 = math.exp %256 : vector<8x32xf32>
    %cst_63 = arith.constant 1.000000e+00 : f32
    %258 = vector.broadcast %cst_63 : f32 to vector<8x32xf32>
    %259 = arith.addf %258, %257 : vector<8x32xf32>
    %260 = arith.divf %258, %259 : vector<8x32xf32>
    %261 = vector.extract_strided_slice %248 {offsets = [0, 64], sizes = [8, 32], strides = [1, 1]} : vector<8x128xf32> to vector<8x32xf32>
    %262 = math.tanh %261 : vector<8x32xf32>
    %263 = vector.extract_strided_slice %248 {offsets = [0, 96], sizes = [8, 32], strides = [1, 1]} : vector<8x128xf32> to vector<8x32xf32>
    %264 = arith.negf %263 : vector<8x32xf32>
    %265 = math.exp %264 : vector<8x32xf32>
    %cst_64 = arith.constant 1.000000e+00 : f32
    %266 = vector.broadcast %cst_64 : f32 to vector<8x32xf32>
    %267 = arith.addf %266, %265 : vector<8x32xf32>
    %268 = arith.divf %266, %267 : vector<8x32xf32>
    %269 = arith.mulf %260, %213 : vector<8x32xf32>
    %270 = arith.mulf %254, %262 : vector<8x32xf32>
    %271 = arith.addf %269, %270 : vector<8x32xf32>
    %272 = math.tanh %271 : vector<8x32xf32>
    %273 = arith.mulf %268, %272 : vector<8x32xf32>
    %cst_65 = arith.constant dense<0.000000e+00> : vector<8x128xf32>
    %274 = tpu.matmul %273, %11, %cst_65 {dimension_numbers = #tpu.dot_dimension_numbers<[1], [0], [0], [1], [0, 0, 1, 1], [], []>} : vector<8x32xf32>, vector<32x128xf32>, vector<8x128xf32> -> vector<8x128xf32>
    %275 = vector.broadcast %12 : vector<1x128xf32> to vector<8x128xf32>
    %276 = arith.addf %274, %275 : vector<8x128xf32>
    %cst_66 = arith.constant dense<0.000000e+00> : vector<8x128xf32>
    %277 = tpu.matmul %245, %10, %cst_66 {dimension_numbers = #tpu.dot_dimension_numbers<[1], [0], [0], [1], [0, 0, 1, 1], [], []>} : vector<8x32xf32>, vector<32x128xf32>, vector<8x128xf32> -> vector<8x128xf32>
    %278 = arith.addf %276, %277 : vector<8x128xf32>
    %279 = vector.extract_strided_slice %278 {offsets = [0, 0], sizes = [8, 32], strides = [1, 1]} : vector<8x128xf32> to vector<8x32xf32>
    %280 = arith.negf %279 : vector<8x32xf32>
    %281 = math.exp %280 : vector<8x32xf32>
    %cst_67 = arith.constant 1.000000e+00 : f32
    %282 = vector.broadcast %cst_67 : f32 to vector<8x32xf32>
    %283 = arith.addf %282, %281 : vector<8x32xf32>
    %284 = arith.divf %282, %283 : vector<8x32xf32>
    %285 = vector.extract_strided_slice %278 {offsets = [0, 32], sizes = [8, 32], strides = [1, 1]} : vector<8x128xf32> to vector<8x32xf32>
    %286 = arith.negf %285 : vector<8x32xf32>
    %287 = math.exp %286 : vector<8x32xf32>
    %cst_68 = arith.constant 1.000000e+00 : f32
    %288 = vector.broadcast %cst_68 : f32 to vector<8x32xf32>
    %289 = arith.addf %288, %287 : vector<8x32xf32>
    %290 = arith.divf %288, %289 : vector<8x32xf32>
    %291 = vector.extract_strided_slice %278 {offsets = [0, 64], sizes = [8, 32], strides = [1, 1]} : vector<8x128xf32> to vector<8x32xf32>
    %292 = math.tanh %291 : vector<8x32xf32>
    %293 = vector.extract_strided_slice %278 {offsets = [0, 96], sizes = [8, 32], strides = [1, 1]} : vector<8x128xf32> to vector<8x32xf32>
    %294 = arith.negf %293 : vector<8x32xf32>
    %295 = math.exp %294 : vector<8x32xf32>
    %cst_69 = arith.constant 1.000000e+00 : f32
    %296 = vector.broadcast %cst_69 : f32 to vector<8x32xf32>
    %297 = arith.addf %296, %295 : vector<8x32xf32>
    %298 = arith.divf %296, %297 : vector<8x32xf32>
    %299 = arith.mulf %290, %243 : vector<8x32xf32>
    %300 = arith.mulf %284, %292 : vector<8x32xf32>
    %301 = arith.addf %299, %300 : vector<8x32xf32>
    %302 = math.tanh %301 : vector<8x32xf32>
    %303 = arith.mulf %298, %302 : vector<8x32xf32>
    %c40 = arith.constant 40 : index
    %c0_70 = arith.constant 0 : index
    %304 = vector.load %arg11[%c40, %c0_70] : memref<96x128xf32, #tpu.memory_space<vmem>>, vector<8x128xf32>
    %cst_71 = arith.constant dense<0.000000e+00> : vector<8x128xf32>
    %305 = tpu.matmul %273, %9, %cst_71 {dimension_numbers = #tpu.dot_dimension_numbers<[1], [0], [0], [1], [0, 0, 1, 1], [], []>} : vector<8x32xf32>, vector<32x128xf32>, vector<8x128xf32> -> vector<8x128xf32>
    %306 = arith.addf %304, %305 : vector<8x128xf32>
    %307 = vector.extract_strided_slice %306 {offsets = [0, 0], sizes = [8, 32], strides = [1, 1]} : vector<8x128xf32> to vector<8x32xf32>
    %308 = arith.negf %307 : vector<8x32xf32>
    %309 = math.exp %308 : vector<8x32xf32>
    %cst_72 = arith.constant 1.000000e+00 : f32
    %310 = vector.broadcast %cst_72 : f32 to vector<8x32xf32>
    %311 = arith.addf %310, %309 : vector<8x32xf32>
    %312 = arith.divf %310, %311 : vector<8x32xf32>
    %313 = vector.extract_strided_slice %306 {offsets = [0, 32], sizes = [8, 32], strides = [1, 1]} : vector<8x128xf32> to vector<8x32xf32>
    %314 = arith.negf %313 : vector<8x32xf32>
    %315 = math.exp %314 : vector<8x32xf32>
    %cst_73 = arith.constant 1.000000e+00 : f32
    %316 = vector.broadcast %cst_73 : f32 to vector<8x32xf32>
    %317 = arith.addf %316, %315 : vector<8x32xf32>
    %318 = arith.divf %316, %317 : vector<8x32xf32>
    %319 = vector.extract_strided_slice %306 {offsets = [0, 64], sizes = [8, 32], strides = [1, 1]} : vector<8x128xf32> to vector<8x32xf32>
    %320 = math.tanh %319 : vector<8x32xf32>
    %321 = vector.extract_strided_slice %306 {offsets = [0, 96], sizes = [8, 32], strides = [1, 1]} : vector<8x128xf32> to vector<8x32xf32>
    %322 = arith.negf %321 : vector<8x32xf32>
    %323 = math.exp %322 : vector<8x32xf32>
    %cst_74 = arith.constant 1.000000e+00 : f32
    %324 = vector.broadcast %cst_74 : f32 to vector<8x32xf32>
    %325 = arith.addf %324, %323 : vector<8x32xf32>
    %326 = arith.divf %324, %325 : vector<8x32xf32>
    %327 = arith.mulf %318, %271 : vector<8x32xf32>
    %328 = arith.mulf %312, %320 : vector<8x32xf32>
    %329 = arith.addf %327, %328 : vector<8x32xf32>
    %330 = math.tanh %329 : vector<8x32xf32>
    %331 = arith.mulf %326, %330 : vector<8x32xf32>
    %cst_75 = arith.constant dense<0.000000e+00> : vector<8x128xf32>
    %332 = tpu.matmul %331, %11, %cst_75 {dimension_numbers = #tpu.dot_dimension_numbers<[1], [0], [0], [1], [0, 0, 1, 1], [], []>} : vector<8x32xf32>, vector<32x128xf32>, vector<8x128xf32> -> vector<8x128xf32>
    %333 = vector.broadcast %12 : vector<1x128xf32> to vector<8x128xf32>
    %334 = arith.addf %332, %333 : vector<8x128xf32>
    %cst_76 = arith.constant dense<0.000000e+00> : vector<8x128xf32>
    %335 = tpu.matmul %303, %10, %cst_76 {dimension_numbers = #tpu.dot_dimension_numbers<[1], [0], [0], [1], [0, 0, 1, 1], [], []>} : vector<8x32xf32>, vector<32x128xf32>, vector<8x128xf32> -> vector<8x128xf32>
    %336 = arith.addf %334, %335 : vector<8x128xf32>
    %337 = vector.extract_strided_slice %336 {offsets = [0, 0], sizes = [8, 32], strides = [1, 1]} : vector<8x128xf32> to vector<8x32xf32>
    %338 = arith.negf %337 : vector<8x32xf32>
    %339 = math.exp %338 : vector<8x32xf32>
    %cst_77 = arith.constant 1.000000e+00 : f32
    %340 = vector.broadcast %cst_77 : f32 to vector<8x32xf32>
    %341 = arith.addf %340, %339 : vector<8x32xf32>
    %342 = arith.divf %340, %341 : vector<8x32xf32>
    %343 = vector.extract_strided_slice %336 {offsets = [0, 32], sizes = [8, 32], strides = [1, 1]} : vector<8x128xf32> to vector<8x32xf32>
    %344 = arith.negf %343 : vector<8x32xf32>
    %345 = math.exp %344 : vector<8x32xf32>
    %cst_78 = arith.constant 1.000000e+00 : f32
    %346 = vector.broadcast %cst_78 : f32 to vector<8x32xf32>
    %347 = arith.addf %346, %345 : vector<8x32xf32>
    %348 = arith.divf %346, %347 : vector<8x32xf32>
    %349 = vector.extract_strided_slice %336 {offsets = [0, 64], sizes = [8, 32], strides = [1, 1]} : vector<8x128xf32> to vector<8x32xf32>
    %350 = math.tanh %349 : vector<8x32xf32>
    %351 = vector.extract_strided_slice %336 {offsets = [0, 96], sizes = [8, 32], strides = [1, 1]} : vector<8x128xf32> to vector<8x32xf32>
    %352 = arith.negf %351 : vector<8x32xf32>
    %353 = math.exp %352 : vector<8x32xf32>
    %cst_79 = arith.constant 1.000000e+00 : f32
    %354 = vector.broadcast %cst_79 : f32 to vector<8x32xf32>
    %355 = arith.addf %354, %353 : vector<8x32xf32>
    %356 = arith.divf %354, %355 : vector<8x32xf32>
    %357 = arith.mulf %348, %301 : vector<8x32xf32>
    %358 = arith.mulf %342, %350 : vector<8x32xf32>
    %359 = arith.addf %357, %358 : vector<8x32xf32>
    %360 = math.tanh %359 : vector<8x32xf32>
    %361 = arith.mulf %356, %360 : vector<8x32xf32>
    %c48 = arith.constant 48 : index
    %c0_80 = arith.constant 0 : index
    %362 = vector.load %arg11[%c48, %c0_80] : memref<96x128xf32, #tpu.memory_space<vmem>>, vector<8x128xf32>
    %cst_81 = arith.constant dense<0.000000e+00> : vector<8x128xf32>
    %363 = tpu.matmul %331, %9, %cst_81 {dimension_numbers = #tpu.dot_dimension_numbers<[1], [0], [0], [1], [0, 0, 1, 1], [], []>} : vector<8x32xf32>, vector<32x128xf32>, vector<8x128xf32> -> vector<8x128xf32>
    %364 = arith.addf %362, %363 : vector<8x128xf32>
    %365 = vector.extract_strided_slice %364 {offsets = [0, 0], sizes = [8, 32], strides = [1, 1]} : vector<8x128xf32> to vector<8x32xf32>
    %366 = arith.negf %365 : vector<8x32xf32>
    %367 = math.exp %366 : vector<8x32xf32>
    %cst_82 = arith.constant 1.000000e+00 : f32
    %368 = vector.broadcast %cst_82 : f32 to vector<8x32xf32>
    %369 = arith.addf %368, %367 : vector<8x32xf32>
    %370 = arith.divf %368, %369 : vector<8x32xf32>
    %371 = vector.extract_strided_slice %364 {offsets = [0, 32], sizes = [8, 32], strides = [1, 1]} : vector<8x128xf32> to vector<8x32xf32>
    %372 = arith.negf %371 : vector<8x32xf32>
    %373 = math.exp %372 : vector<8x32xf32>
    %cst_83 = arith.constant 1.000000e+00 : f32
    %374 = vector.broadcast %cst_83 : f32 to vector<8x32xf32>
    %375 = arith.addf %374, %373 : vector<8x32xf32>
    %376 = arith.divf %374, %375 : vector<8x32xf32>
    %377 = vector.extract_strided_slice %364 {offsets = [0, 64], sizes = [8, 32], strides = [1, 1]} : vector<8x128xf32> to vector<8x32xf32>
    %378 = math.tanh %377 : vector<8x32xf32>
    %379 = vector.extract_strided_slice %364 {offsets = [0, 96], sizes = [8, 32], strides = [1, 1]} : vector<8x128xf32> to vector<8x32xf32>
    %380 = arith.negf %379 : vector<8x32xf32>
    %381 = math.exp %380 : vector<8x32xf32>
    %cst_84 = arith.constant 1.000000e+00 : f32
    %382 = vector.broadcast %cst_84 : f32 to vector<8x32xf32>
    %383 = arith.addf %382, %381 : vector<8x32xf32>
    %384 = arith.divf %382, %383 : vector<8x32xf32>
    %385 = arith.mulf %376, %329 : vector<8x32xf32>
    %386 = arith.mulf %370, %378 : vector<8x32xf32>
    %387 = arith.addf %385, %386 : vector<8x32xf32>
    %388 = math.tanh %387 : vector<8x32xf32>
    %389 = arith.mulf %384, %388 : vector<8x32xf32>
    %cst_85 = arith.constant dense<0.000000e+00> : vector<8x128xf32>
    %390 = tpu.matmul %389, %11, %cst_85 {dimension_numbers = #tpu.dot_dimension_numbers<[1], [0], [0], [1], [0, 0, 1, 1], [], []>} : vector<8x32xf32>, vector<32x128xf32>, vector<8x128xf32> -> vector<8x128xf32>
    %391 = vector.broadcast %12 : vector<1x128xf32> to vector<8x128xf32>
    %392 = arith.addf %390, %391 : vector<8x128xf32>
    %cst_86 = arith.constant dense<0.000000e+00> : vector<8x128xf32>
    %393 = tpu.matmul %361, %10, %cst_86 {dimension_numbers = #tpu.dot_dimension_numbers<[1], [0], [0], [1], [0, 0, 1, 1], [], []>} : vector<8x32xf32>, vector<32x128xf32>, vector<8x128xf32> -> vector<8x128xf32>
    %394 = arith.addf %392, %393 : vector<8x128xf32>
    %395 = vector.extract_strided_slice %394 {offsets = [0, 0], sizes = [8, 32], strides = [1, 1]} : vector<8x128xf32> to vector<8x32xf32>
    %396 = arith.negf %395 : vector<8x32xf32>
    %397 = math.exp %396 : vector<8x32xf32>
    %cst_87 = arith.constant 1.000000e+00 : f32
    %398 = vector.broadcast %cst_87 : f32 to vector<8x32xf32>
    %399 = arith.addf %398, %397 : vector<8x32xf32>
    %400 = arith.divf %398, %399 : vector<8x32xf32>
    %401 = vector.extract_strided_slice %394 {offsets = [0, 32], sizes = [8, 32], strides = [1, 1]} : vector<8x128xf32> to vector<8x32xf32>
    %402 = arith.negf %401 : vector<8x32xf32>
    %403 = math.exp %402 : vector<8x32xf32>
    %cst_88 = arith.constant 1.000000e+00 : f32
    %404 = vector.broadcast %cst_88 : f32 to vector<8x32xf32>
    %405 = arith.addf %404, %403 : vector<8x32xf32>
    %406 = arith.divf %404, %405 : vector<8x32xf32>
    %407 = vector.extract_strided_slice %394 {offsets = [0, 64], sizes = [8, 32], strides = [1, 1]} : vector<8x128xf32> to vector<8x32xf32>
    %408 = math.tanh %407 : vector<8x32xf32>
    %409 = vector.extract_strided_slice %394 {offsets = [0, 96], sizes = [8, 32], strides = [1, 1]} : vector<8x128xf32> to vector<8x32xf32>
    %410 = arith.negf %409 : vector<8x32xf32>
    %411 = math.exp %410 : vector<8x32xf32>
    %cst_89 = arith.constant 1.000000e+00 : f32
    %412 = vector.broadcast %cst_89 : f32 to vector<8x32xf32>
    %413 = arith.addf %412, %411 : vector<8x32xf32>
    %414 = arith.divf %412, %413 : vector<8x32xf32>
    %415 = arith.mulf %406, %359 : vector<8x32xf32>
    %416 = arith.mulf %400, %408 : vector<8x32xf32>
    %417 = arith.addf %415, %416 : vector<8x32xf32>
    %418 = math.tanh %417 : vector<8x32xf32>
    %419 = arith.mulf %414, %418 : vector<8x32xf32>
    %c56 = arith.constant 56 : index
    %c0_90 = arith.constant 0 : index
    %420 = vector.load %arg11[%c56, %c0_90] : memref<96x128xf32, #tpu.memory_space<vmem>>, vector<8x128xf32>
    %cst_91 = arith.constant dense<0.000000e+00> : vector<8x128xf32>
    %421 = tpu.matmul %389, %9, %cst_91 {dimension_numbers = #tpu.dot_dimension_numbers<[1], [0], [0], [1], [0, 0, 1, 1], [], []>} : vector<8x32xf32>, vector<32x128xf32>, vector<8x128xf32> -> vector<8x128xf32>
    %422 = arith.addf %420, %421 : vector<8x128xf32>
    %423 = vector.extract_strided_slice %422 {offsets = [0, 0], sizes = [8, 32], strides = [1, 1]} : vector<8x128xf32> to vector<8x32xf32>
    %424 = arith.negf %423 : vector<8x32xf32>
    %425 = math.exp %424 : vector<8x32xf32>
    %cst_92 = arith.constant 1.000000e+00 : f32
    %426 = vector.broadcast %cst_92 : f32 to vector<8x32xf32>
    %427 = arith.addf %426, %425 : vector<8x32xf32>
    %428 = arith.divf %426, %427 : vector<8x32xf32>
    %429 = vector.extract_strided_slice %422 {offsets = [0, 32], sizes = [8, 32], strides = [1, 1]} : vector<8x128xf32> to vector<8x32xf32>
    %430 = arith.negf %429 : vector<8x32xf32>
    %431 = math.exp %430 : vector<8x32xf32>
    %cst_93 = arith.constant 1.000000e+00 : f32
    %432 = vector.broadcast %cst_93 : f32 to vector<8x32xf32>
    %433 = arith.addf %432, %431 : vector<8x32xf32>
    %434 = arith.divf %432, %433 : vector<8x32xf32>
    %435 = vector.extract_strided_slice %422 {offsets = [0, 64], sizes = [8, 32], strides = [1, 1]} : vector<8x128xf32> to vector<8x32xf32>
    %436 = math.tanh %435 : vector<8x32xf32>
    %437 = vector.extract_strided_slice %422 {offsets = [0, 96], sizes = [8, 32], strides = [1, 1]} : vector<8x128xf32> to vector<8x32xf32>
    %438 = arith.negf %437 : vector<8x32xf32>
    %439 = math.exp %438 : vector<8x32xf32>
    %cst_94 = arith.constant 1.000000e+00 : f32
    %440 = vector.broadcast %cst_94 : f32 to vector<8x32xf32>
    %441 = arith.addf %440, %439 : vector<8x32xf32>
    %442 = arith.divf %440, %441 : vector<8x32xf32>
    %443 = arith.mulf %434, %387 : vector<8x32xf32>
    %444 = arith.mulf %428, %436 : vector<8x32xf32>
    %445 = arith.addf %443, %444 : vector<8x32xf32>
    %446 = math.tanh %445 : vector<8x32xf32>
    %447 = arith.mulf %442, %446 : vector<8x32xf32>
    %cst_95 = arith.constant dense<0.000000e+00> : vector<8x128xf32>
    %448 = tpu.matmul %447, %11, %cst_95 {dimension_numbers = #tpu.dot_dimension_numbers<[1], [0], [0], [1], [0, 0, 1, 1], [], []>} : vector<8x32xf32>, vector<32x128xf32>, vector<8x128xf32> -> vector<8x128xf32>
    %449 = vector.broadcast %12 : vector<1x128xf32> to vector<8x128xf32>
    %450 = arith.addf %448, %449 : vector<8x128xf32>
    %cst_96 = arith.constant dense<0.000000e+00> : vector<8x128xf32>
    %451 = tpu.matmul %419, %10, %cst_96 {dimension_numbers = #tpu.dot_dimension_numbers<[1], [0], [0], [1], [0, 0, 1, 1], [], []>} : vector<8x32xf32>, vector<32x128xf32>, vector<8x128xf32> -> vector<8x128xf32>
    %452 = arith.addf %450, %451 : vector<8x128xf32>
    %453 = vector.extract_strided_slice %452 {offsets = [0, 0], sizes = [8, 32], strides = [1, 1]} : vector<8x128xf32> to vector<8x32xf32>
    %454 = arith.negf %453 : vector<8x32xf32>
    %455 = math.exp %454 : vector<8x32xf32>
    %cst_97 = arith.constant 1.000000e+00 : f32
    %456 = vector.broadcast %cst_97 : f32 to vector<8x32xf32>
    %457 = arith.addf %456, %455 : vector<8x32xf32>
    %458 = arith.divf %456, %457 : vector<8x32xf32>
    %459 = vector.extract_strided_slice %452 {offsets = [0, 32], sizes = [8, 32], strides = [1, 1]} : vector<8x128xf32> to vector<8x32xf32>
    %460 = arith.negf %459 : vector<8x32xf32>
    %461 = math.exp %460 : vector<8x32xf32>
    %cst_98 = arith.constant 1.000000e+00 : f32
    %462 = vector.broadcast %cst_98 : f32 to vector<8x32xf32>
    %463 = arith.addf %462, %461 : vector<8x32xf32>
    %464 = arith.divf %462, %463 : vector<8x32xf32>
    %465 = vector.extract_strided_slice %452 {offsets = [0, 64], sizes = [8, 32], strides = [1, 1]} : vector<8x128xf32> to vector<8x32xf32>
    %466 = math.tanh %465 : vector<8x32xf32>
    %467 = vector.extract_strided_slice %452 {offsets = [0, 96], sizes = [8, 32], strides = [1, 1]} : vector<8x128xf32> to vector<8x32xf32>
    %468 = arith.negf %467 : vector<8x32xf32>
    %469 = math.exp %468 : vector<8x32xf32>
    %cst_99 = arith.constant 1.000000e+00 : f32
    %470 = vector.broadcast %cst_99 : f32 to vector<8x32xf32>
    %471 = arith.addf %470, %469 : vector<8x32xf32>
    %472 = arith.divf %470, %471 : vector<8x32xf32>
    %473 = arith.mulf %464, %417 : vector<8x32xf32>
    %474 = arith.mulf %458, %466 : vector<8x32xf32>
    %475 = arith.addf %473, %474 : vector<8x32xf32>
    %476 = math.tanh %475 : vector<8x32xf32>
    %477 = arith.mulf %472, %476 : vector<8x32xf32>
    %c64 = arith.constant 64 : index
    %c0_100 = arith.constant 0 : index
    %478 = vector.load %arg11[%c64, %c0_100] : memref<96x128xf32, #tpu.memory_space<vmem>>, vector<8x128xf32>
    %cst_101 = arith.constant dense<0.000000e+00> : vector<8x128xf32>
    %479 = tpu.matmul %447, %9, %cst_101 {dimension_numbers = #tpu.dot_dimension_numbers<[1], [0], [0], [1], [0, 0, 1, 1], [], []>} : vector<8x32xf32>, vector<32x128xf32>, vector<8x128xf32> -> vector<8x128xf32>
    %480 = arith.addf %478, %479 : vector<8x128xf32>
    %481 = vector.extract_strided_slice %480 {offsets = [0, 0], sizes = [8, 32], strides = [1, 1]} : vector<8x128xf32> to vector<8x32xf32>
    %482 = arith.negf %481 : vector<8x32xf32>
    %483 = math.exp %482 : vector<8x32xf32>
    %cst_102 = arith.constant 1.000000e+00 : f32
    %484 = vector.broadcast %cst_102 : f32 to vector<8x32xf32>
    %485 = arith.addf %484, %483 : vector<8x32xf32>
    %486 = arith.divf %484, %485 : vector<8x32xf32>
    %487 = vector.extract_strided_slice %480 {offsets = [0, 32], sizes = [8, 32], strides = [1, 1]} : vector<8x128xf32> to vector<8x32xf32>
    %488 = arith.negf %487 : vector<8x32xf32>
    %489 = math.exp %488 : vector<8x32xf32>
    %cst_103 = arith.constant 1.000000e+00 : f32
    %490 = vector.broadcast %cst_103 : f32 to vector<8x32xf32>
    %491 = arith.addf %490, %489 : vector<8x32xf32>
    %492 = arith.divf %490, %491 : vector<8x32xf32>
    %493 = vector.extract_strided_slice %480 {offsets = [0, 64], sizes = [8, 32], strides = [1, 1]} : vector<8x128xf32> to vector<8x32xf32>
    %494 = math.tanh %493 : vector<8x32xf32>
    %495 = vector.extract_strided_slice %480 {offsets = [0, 96], sizes = [8, 32], strides = [1, 1]} : vector<8x128xf32> to vector<8x32xf32>
    %496 = arith.negf %495 : vector<8x32xf32>
    %497 = math.exp %496 : vector<8x32xf32>
    %cst_104 = arith.constant 1.000000e+00 : f32
    %498 = vector.broadcast %cst_104 : f32 to vector<8x32xf32>
    %499 = arith.addf %498, %497 : vector<8x32xf32>
    %500 = arith.divf %498, %499 : vector<8x32xf32>
    %501 = arith.mulf %492, %445 : vector<8x32xf32>
    %502 = arith.mulf %486, %494 : vector<8x32xf32>
    %503 = arith.addf %501, %502 : vector<8x32xf32>
    %504 = math.tanh %503 : vector<8x32xf32>
    %505 = arith.mulf %500, %504 : vector<8x32xf32>
    %cst_105 = arith.constant dense<0.000000e+00> : vector<8x128xf32>
    %506 = tpu.matmul %505, %11, %cst_105 {dimension_numbers = #tpu.dot_dimension_numbers<[1], [0], [0], [1], [0, 0, 1, 1], [], []>} : vector<8x32xf32>, vector<32x128xf32>, vector<8x128xf32> -> vector<8x128xf32>
    %507 = vector.broadcast %12 : vector<1x128xf32> to vector<8x128xf32>
    %508 = arith.addf %506, %507 : vector<8x128xf32>
    %cst_106 = arith.constant dense<0.000000e+00> : vector<8x128xf32>
    %509 = tpu.matmul %477, %10, %cst_106 {dimension_numbers = #tpu.dot_dimension_numbers<[1], [0], [0], [1], [0, 0, 1, 1], [], []>} : vector<8x32xf32>, vector<32x128xf32>, vector<8x128xf32> -> vector<8x128xf32>
    %510 = arith.addf %508, %509 : vector<8x128xf32>
    %511 = vector.extract_strided_slice %510 {offsets = [0, 0], sizes = [8, 32], strides = [1, 1]} : vector<8x128xf32> to vector<8x32xf32>
    %512 = arith.negf %511 : vector<8x32xf32>
    %513 = math.exp %512 : vector<8x32xf32>
    %cst_107 = arith.constant 1.000000e+00 : f32
    %514 = vector.broadcast %cst_107 : f32 to vector<8x32xf32>
    %515 = arith.addf %514, %513 : vector<8x32xf32>
    %516 = arith.divf %514, %515 : vector<8x32xf32>
    %517 = vector.extract_strided_slice %510 {offsets = [0, 32], sizes = [8, 32], strides = [1, 1]} : vector<8x128xf32> to vector<8x32xf32>
    %518 = arith.negf %517 : vector<8x32xf32>
    %519 = math.exp %518 : vector<8x32xf32>
    %cst_108 = arith.constant 1.000000e+00 : f32
    %520 = vector.broadcast %cst_108 : f32 to vector<8x32xf32>
    %521 = arith.addf %520, %519 : vector<8x32xf32>
    %522 = arith.divf %520, %521 : vector<8x32xf32>
    %523 = vector.extract_strided_slice %510 {offsets = [0, 64], sizes = [8, 32], strides = [1, 1]} : vector<8x128xf32> to vector<8x32xf32>
    %524 = math.tanh %523 : vector<8x32xf32>
    %525 = vector.extract_strided_slice %510 {offsets = [0, 96], sizes = [8, 32], strides = [1, 1]} : vector<8x128xf32> to vector<8x32xf32>
    %526 = arith.negf %525 : vector<8x32xf32>
    %527 = math.exp %526 : vector<8x32xf32>
    %cst_109 = arith.constant 1.000000e+00 : f32
    %528 = vector.broadcast %cst_109 : f32 to vector<8x32xf32>
    %529 = arith.addf %528, %527 : vector<8x32xf32>
    %530 = arith.divf %528, %529 : vector<8x32xf32>
    %531 = arith.mulf %522, %475 : vector<8x32xf32>
    %532 = arith.mulf %516, %524 : vector<8x32xf32>
    %533 = arith.addf %531, %532 : vector<8x32xf32>
    %534 = math.tanh %533 : vector<8x32xf32>
    %535 = arith.mulf %530, %534 : vector<8x32xf32>
    %c72 = arith.constant 72 : index
    %c0_110 = arith.constant 0 : index
    %536 = vector.load %arg11[%c72, %c0_110] : memref<96x128xf32, #tpu.memory_space<vmem>>, vector<8x128xf32>
    %cst_111 = arith.constant dense<0.000000e+00> : vector<8x128xf32>
    %537 = tpu.matmul %505, %9, %cst_111 {dimension_numbers = #tpu.dot_dimension_numbers<[1], [0], [0], [1], [0, 0, 1, 1], [], []>} : vector<8x32xf32>, vector<32x128xf32>, vector<8x128xf32> -> vector<8x128xf32>
    %538 = arith.addf %536, %537 : vector<8x128xf32>
    %539 = vector.extract_strided_slice %538 {offsets = [0, 0], sizes = [8, 32], strides = [1, 1]} : vector<8x128xf32> to vector<8x32xf32>
    %540 = arith.negf %539 : vector<8x32xf32>
    %541 = math.exp %540 : vector<8x32xf32>
    %cst_112 = arith.constant 1.000000e+00 : f32
    %542 = vector.broadcast %cst_112 : f32 to vector<8x32xf32>
    %543 = arith.addf %542, %541 : vector<8x32xf32>
    %544 = arith.divf %542, %543 : vector<8x32xf32>
    %545 = vector.extract_strided_slice %538 {offsets = [0, 32], sizes = [8, 32], strides = [1, 1]} : vector<8x128xf32> to vector<8x32xf32>
    %546 = arith.negf %545 : vector<8x32xf32>
    %547 = math.exp %546 : vector<8x32xf32>
    %cst_113 = arith.constant 1.000000e+00 : f32
    %548 = vector.broadcast %cst_113 : f32 to vector<8x32xf32>
    %549 = arith.addf %548, %547 : vector<8x32xf32>
    %550 = arith.divf %548, %549 : vector<8x32xf32>
    %551 = vector.extract_strided_slice %538 {offsets = [0, 64], sizes = [8, 32], strides = [1, 1]} : vector<8x128xf32> to vector<8x32xf32>
    %552 = math.tanh %551 : vector<8x32xf32>
    %553 = vector.extract_strided_slice %538 {offsets = [0, 96], sizes = [8, 32], strides = [1, 1]} : vector<8x128xf32> to vector<8x32xf32>
    %554 = arith.negf %553 : vector<8x32xf32>
    %555 = math.exp %554 : vector<8x32xf32>
    %cst_114 = arith.constant 1.000000e+00 : f32
    %556 = vector.broadcast %cst_114 : f32 to vector<8x32xf32>
    %557 = arith.addf %556, %555 : vector<8x32xf32>
    %558 = arith.divf %556, %557 : vector<8x32xf32>
    %559 = arith.mulf %550, %503 : vector<8x32xf32>
    %560 = arith.mulf %544, %552 : vector<8x32xf32>
    %561 = arith.addf %559, %560 : vector<8x32xf32>
    %562 = math.tanh %561 : vector<8x32xf32>
    %563 = arith.mulf %558, %562 : vector<8x32xf32>
    %cst_115 = arith.constant dense<0.000000e+00> : vector<8x128xf32>
    %564 = tpu.matmul %563, %11, %cst_115 {dimension_numbers = #tpu.dot_dimension_numbers<[1], [0], [0], [1], [0, 0, 1, 1], [], []>} : vector<8x32xf32>, vector<32x128xf32>, vector<8x128xf32> -> vector<8x128xf32>
    %565 = vector.broadcast %12 : vector<1x128xf32> to vector<8x128xf32>
    %566 = arith.addf %564, %565 : vector<8x128xf32>
    %cst_116 = arith.constant dense<0.000000e+00> : vector<8x128xf32>
    %567 = tpu.matmul %535, %10, %cst_116 {dimension_numbers = #tpu.dot_dimension_numbers<[1], [0], [0], [1], [0, 0, 1, 1], [], []>} : vector<8x32xf32>, vector<32x128xf32>, vector<8x128xf32> -> vector<8x128xf32>
    %568 = arith.addf %566, %567 : vector<8x128xf32>
    %569 = vector.extract_strided_slice %568 {offsets = [0, 0], sizes = [8, 32], strides = [1, 1]} : vector<8x128xf32> to vector<8x32xf32>
    %570 = arith.negf %569 : vector<8x32xf32>
    %571 = math.exp %570 : vector<8x32xf32>
    %cst_117 = arith.constant 1.000000e+00 : f32
    %572 = vector.broadcast %cst_117 : f32 to vector<8x32xf32>
    %573 = arith.addf %572, %571 : vector<8x32xf32>
    %574 = arith.divf %572, %573 : vector<8x32xf32>
    %575 = vector.extract_strided_slice %568 {offsets = [0, 32], sizes = [8, 32], strides = [1, 1]} : vector<8x128xf32> to vector<8x32xf32>
    %576 = arith.negf %575 : vector<8x32xf32>
    %577 = math.exp %576 : vector<8x32xf32>
    %cst_118 = arith.constant 1.000000e+00 : f32
    %578 = vector.broadcast %cst_118 : f32 to vector<8x32xf32>
    %579 = arith.addf %578, %577 : vector<8x32xf32>
    %580 = arith.divf %578, %579 : vector<8x32xf32>
    %581 = vector.extract_strided_slice %568 {offsets = [0, 64], sizes = [8, 32], strides = [1, 1]} : vector<8x128xf32> to vector<8x32xf32>
    %582 = math.tanh %581 : vector<8x32xf32>
    %583 = vector.extract_strided_slice %568 {offsets = [0, 96], sizes = [8, 32], strides = [1, 1]} : vector<8x128xf32> to vector<8x32xf32>
    %584 = arith.negf %583 : vector<8x32xf32>
    %585 = math.exp %584 : vector<8x32xf32>
    %cst_119 = arith.constant 1.000000e+00 : f32
    %586 = vector.broadcast %cst_119 : f32 to vector<8x32xf32>
    %587 = arith.addf %586, %585 : vector<8x32xf32>
    %588 = arith.divf %586, %587 : vector<8x32xf32>
    %589 = arith.mulf %580, %533 : vector<8x32xf32>
    %590 = arith.mulf %574, %582 : vector<8x32xf32>
    %591 = arith.addf %589, %590 : vector<8x32xf32>
    %592 = math.tanh %591 : vector<8x32xf32>
    %593 = arith.mulf %588, %592 : vector<8x32xf32>
    %c80 = arith.constant 80 : index
    %c0_120 = arith.constant 0 : index
    %594 = vector.load %arg11[%c80, %c0_120] : memref<96x128xf32, #tpu.memory_space<vmem>>, vector<8x128xf32>
    %cst_121 = arith.constant dense<0.000000e+00> : vector<8x128xf32>
    %595 = tpu.matmul %563, %9, %cst_121 {dimension_numbers = #tpu.dot_dimension_numbers<[1], [0], [0], [1], [0, 0, 1, 1], [], []>} : vector<8x32xf32>, vector<32x128xf32>, vector<8x128xf32> -> vector<8x128xf32>
    %596 = arith.addf %594, %595 : vector<8x128xf32>
    %597 = vector.extract_strided_slice %596 {offsets = [0, 0], sizes = [8, 32], strides = [1, 1]} : vector<8x128xf32> to vector<8x32xf32>
    %598 = arith.negf %597 : vector<8x32xf32>
    %599 = math.exp %598 : vector<8x32xf32>
    %cst_122 = arith.constant 1.000000e+00 : f32
    %600 = vector.broadcast %cst_122 : f32 to vector<8x32xf32>
    %601 = arith.addf %600, %599 : vector<8x32xf32>
    %602 = arith.divf %600, %601 : vector<8x32xf32>
    %603 = vector.extract_strided_slice %596 {offsets = [0, 32], sizes = [8, 32], strides = [1, 1]} : vector<8x128xf32> to vector<8x32xf32>
    %604 = arith.negf %603 : vector<8x32xf32>
    %605 = math.exp %604 : vector<8x32xf32>
    %cst_123 = arith.constant 1.000000e+00 : f32
    %606 = vector.broadcast %cst_123 : f32 to vector<8x32xf32>
    %607 = arith.addf %606, %605 : vector<8x32xf32>
    %608 = arith.divf %606, %607 : vector<8x32xf32>
    %609 = vector.extract_strided_slice %596 {offsets = [0, 64], sizes = [8, 32], strides = [1, 1]} : vector<8x128xf32> to vector<8x32xf32>
    %610 = math.tanh %609 : vector<8x32xf32>
    %611 = vector.extract_strided_slice %596 {offsets = [0, 96], sizes = [8, 32], strides = [1, 1]} : vector<8x128xf32> to vector<8x32xf32>
    %612 = arith.negf %611 : vector<8x32xf32>
    %613 = math.exp %612 : vector<8x32xf32>
    %cst_124 = arith.constant 1.000000e+00 : f32
    %614 = vector.broadcast %cst_124 : f32 to vector<8x32xf32>
    %615 = arith.addf %614, %613 : vector<8x32xf32>
    %616 = arith.divf %614, %615 : vector<8x32xf32>
    %617 = arith.mulf %608, %561 : vector<8x32xf32>
    %618 = arith.mulf %602, %610 : vector<8x32xf32>
    %619 = arith.addf %617, %618 : vector<8x32xf32>
    %620 = math.tanh %619 : vector<8x32xf32>
    %621 = arith.mulf %616, %620 : vector<8x32xf32>
    %cst_125 = arith.constant dense<0.000000e+00> : vector<8x128xf32>
    %622 = tpu.matmul %621, %11, %cst_125 {dimension_numbers = #tpu.dot_dimension_numbers<[1], [0], [0], [1], [0, 0, 1, 1], [], []>} : vector<8x32xf32>, vector<32x128xf32>, vector<8x128xf32> -> vector<8x128xf32>
    %623 = vector.broadcast %12 : vector<1x128xf32> to vector<8x128xf32>
    %624 = arith.addf %622, %623 : vector<8x128xf32>
    %cst_126 = arith.constant dense<0.000000e+00> : vector<8x128xf32>
    %625 = tpu.matmul %593, %10, %cst_126 {dimension_numbers = #tpu.dot_dimension_numbers<[1], [0], [0], [1], [0, 0, 1, 1], [], []>} : vector<8x32xf32>, vector<32x128xf32>, vector<8x128xf32> -> vector<8x128xf32>
    %626 = arith.addf %624, %625 : vector<8x128xf32>
    %627 = vector.extract_strided_slice %626 {offsets = [0, 0], sizes = [8, 32], strides = [1, 1]} : vector<8x128xf32> to vector<8x32xf32>
    %628 = arith.negf %627 : vector<8x32xf32>
    %629 = math.exp %628 : vector<8x32xf32>
    %cst_127 = arith.constant 1.000000e+00 : f32
    %630 = vector.broadcast %cst_127 : f32 to vector<8x32xf32>
    %631 = arith.addf %630, %629 : vector<8x32xf32>
    %632 = arith.divf %630, %631 : vector<8x32xf32>
    %633 = vector.extract_strided_slice %626 {offsets = [0, 32], sizes = [8, 32], strides = [1, 1]} : vector<8x128xf32> to vector<8x32xf32>
    %634 = arith.negf %633 : vector<8x32xf32>
    %635 = math.exp %634 : vector<8x32xf32>
    %cst_128 = arith.constant 1.000000e+00 : f32
    %636 = vector.broadcast %cst_128 : f32 to vector<8x32xf32>
    %637 = arith.addf %636, %635 : vector<8x32xf32>
    %638 = arith.divf %636, %637 : vector<8x32xf32>
    %639 = vector.extract_strided_slice %626 {offsets = [0, 64], sizes = [8, 32], strides = [1, 1]} : vector<8x128xf32> to vector<8x32xf32>
    %640 = math.tanh %639 : vector<8x32xf32>
    %641 = vector.extract_strided_slice %626 {offsets = [0, 96], sizes = [8, 32], strides = [1, 1]} : vector<8x128xf32> to vector<8x32xf32>
    %642 = arith.negf %641 : vector<8x32xf32>
    %643 = math.exp %642 : vector<8x32xf32>
    %cst_129 = arith.constant 1.000000e+00 : f32
    %644 = vector.broadcast %cst_129 : f32 to vector<8x32xf32>
    %645 = arith.addf %644, %643 : vector<8x32xf32>
    %646 = arith.divf %644, %645 : vector<8x32xf32>
    %647 = arith.mulf %638, %591 : vector<8x32xf32>
    %648 = arith.mulf %632, %640 : vector<8x32xf32>
    %649 = arith.addf %647, %648 : vector<8x32xf32>
    %650 = math.tanh %649 : vector<8x32xf32>
    %651 = arith.mulf %646, %650 : vector<8x32xf32>
    %c88 = arith.constant 88 : index
    %c0_130 = arith.constant 0 : index
    %652 = vector.load %arg11[%c88, %c0_130] : memref<96x128xf32, #tpu.memory_space<vmem>>, vector<8x128xf32>
    %cst_131 = arith.constant dense<0.000000e+00> : vector<8x128xf32>
    %653 = tpu.matmul %621, %9, %cst_131 {dimension_numbers = #tpu.dot_dimension_numbers<[1], [0], [0], [1], [0, 0, 1, 1], [], []>} : vector<8x32xf32>, vector<32x128xf32>, vector<8x128xf32> -> vector<8x128xf32>
    %654 = arith.addf %652, %653 : vector<8x128xf32>
    %655 = vector.extract_strided_slice %654 {offsets = [0, 0], sizes = [8, 32], strides = [1, 1]} : vector<8x128xf32> to vector<8x32xf32>
    %656 = arith.negf %655 : vector<8x32xf32>
    %657 = math.exp %656 : vector<8x32xf32>
    %cst_132 = arith.constant 1.000000e+00 : f32
    %658 = vector.broadcast %cst_132 : f32 to vector<8x32xf32>
    %659 = arith.addf %658, %657 : vector<8x32xf32>
    %660 = arith.divf %658, %659 : vector<8x32xf32>
    %661 = vector.extract_strided_slice %654 {offsets = [0, 32], sizes = [8, 32], strides = [1, 1]} : vector<8x128xf32> to vector<8x32xf32>
    %662 = arith.negf %661 : vector<8x32xf32>
    %663 = math.exp %662 : vector<8x32xf32>
    %cst_133 = arith.constant 1.000000e+00 : f32
    %664 = vector.broadcast %cst_133 : f32 to vector<8x32xf32>
    %665 = arith.addf %664, %663 : vector<8x32xf32>
    %666 = arith.divf %664, %665 : vector<8x32xf32>
    %667 = vector.extract_strided_slice %654 {offsets = [0, 64], sizes = [8, 32], strides = [1, 1]} : vector<8x128xf32> to vector<8x32xf32>
    %668 = math.tanh %667 : vector<8x32xf32>
    %669 = vector.extract_strided_slice %654 {offsets = [0, 96], sizes = [8, 32], strides = [1, 1]} : vector<8x128xf32> to vector<8x32xf32>
    %670 = arith.negf %669 : vector<8x32xf32>
    %671 = math.exp %670 : vector<8x32xf32>
    %cst_134 = arith.constant 1.000000e+00 : f32
    %672 = vector.broadcast %cst_134 : f32 to vector<8x32xf32>
    %673 = arith.addf %672, %671 : vector<8x32xf32>
    %674 = arith.divf %672, %673 : vector<8x32xf32>
    %675 = arith.mulf %666, %619 : vector<8x32xf32>
    %676 = arith.mulf %660, %668 : vector<8x32xf32>
    %677 = arith.addf %675, %676 : vector<8x32xf32>
    %678 = math.tanh %677 : vector<8x32xf32>
    %679 = arith.mulf %674, %678 : vector<8x32xf32>
    %cst_135 = arith.constant dense<0.000000e+00> : vector<8x128xf32>
    %680 = tpu.matmul %679, %11, %cst_135 {dimension_numbers = #tpu.dot_dimension_numbers<[1], [0], [0], [1], [0, 0, 1, 1], [], []>} : vector<8x32xf32>, vector<32x128xf32>, vector<8x128xf32> -> vector<8x128xf32>
    %681 = vector.broadcast %12 : vector<1x128xf32> to vector<8x128xf32>
    %682 = arith.addf %680, %681 : vector<8x128xf32>
    %cst_136 = arith.constant dense<0.000000e+00> : vector<8x128xf32>
    %683 = tpu.matmul %651, %10, %cst_136 {dimension_numbers = #tpu.dot_dimension_numbers<[1], [0], [0], [1], [0, 0, 1, 1], [], []>} : vector<8x32xf32>, vector<32x128xf32>, vector<8x128xf32> -> vector<8x128xf32>
    %684 = arith.addf %682, %683 : vector<8x128xf32>
    %685 = vector.extract_strided_slice %684 {offsets = [0, 0], sizes = [8, 32], strides = [1, 1]} : vector<8x128xf32> to vector<8x32xf32>
    %686 = arith.negf %685 : vector<8x32xf32>
    %687 = math.exp %686 : vector<8x32xf32>
    %cst_137 = arith.constant 1.000000e+00 : f32
    %688 = vector.broadcast %cst_137 : f32 to vector<8x32xf32>
    %689 = arith.addf %688, %687 : vector<8x32xf32>
    %690 = arith.divf %688, %689 : vector<8x32xf32>
    %691 = vector.extract_strided_slice %684 {offsets = [0, 32], sizes = [8, 32], strides = [1, 1]} : vector<8x128xf32> to vector<8x32xf32>
    %692 = arith.negf %691 : vector<8x32xf32>
    %693 = math.exp %692 : vector<8x32xf32>
    %cst_138 = arith.constant 1.000000e+00 : f32
    %694 = vector.broadcast %cst_138 : f32 to vector<8x32xf32>
    %695 = arith.addf %694, %693 : vector<8x32xf32>
    %696 = arith.divf %694, %695 : vector<8x32xf32>
    %697 = vector.extract_strided_slice %684 {offsets = [0, 64], sizes = [8, 32], strides = [1, 1]} : vector<8x128xf32> to vector<8x32xf32>
    %698 = math.tanh %697 : vector<8x32xf32>
    %699 = vector.extract_strided_slice %684 {offsets = [0, 96], sizes = [8, 32], strides = [1, 1]} : vector<8x128xf32> to vector<8x32xf32>
    %700 = arith.negf %699 : vector<8x32xf32>
    %701 = math.exp %700 : vector<8x32xf32>
    %cst_139 = arith.constant 1.000000e+00 : f32
    %702 = vector.broadcast %cst_139 : f32 to vector<8x32xf32>
    %703 = arith.addf %702, %701 : vector<8x32xf32>
    %704 = arith.divf %702, %703 : vector<8x32xf32>
    %705 = arith.mulf %696, %649 : vector<8x32xf32>
    %706 = arith.mulf %690, %698 : vector<8x32xf32>
    %707 = arith.addf %705, %706 : vector<8x32xf32>
    %708 = math.tanh %707 : vector<8x32xf32>
    %709 = arith.mulf %704, %708 : vector<8x32xf32>
    %c0_140 = arith.constant 0 : index
    %c0_141 = arith.constant 0 : index
    %710 = vector.load %arg8[%c0_140, %c0_141] : memref<32x8xf32, #tpu.memory_space<vmem>>, vector<32x8xf32>
    %cst_142 = arith.constant dense<0.000000e+00> : vector<8x8xf32>
    %711 = tpu.matmul %709, %710, %cst_142 {dimension_numbers = #tpu.dot_dimension_numbers<[1], [0], [0], [1], [0, 0, 1, 1], [], []>} : vector<8x32xf32>, vector<32x8xf32>, vector<8x8xf32> -> vector<8x8xf32>
    %c0_143 = arith.constant 0 : index
    %c0_144 = arith.constant 0 : index
    %712 = vector.load %arg9[%c0_143, %c0_144] : memref<1x8xf32, #tpu.memory_space<vmem>>, vector<1x8xf32>
    %713 = vector.broadcast %712 : vector<1x8xf32> to vector<8x8xf32>
    %714 = arith.addf %711, %713 : vector<8x8xf32>
    %cst_145 = arith.constant 2.000000e+01 : f32
    %715 = vector.broadcast %cst_145 : f32 to vector<8x8xf32>
    %716 = arith.cmpf ogt, %714, %715 : vector<8x8xf32>
    %cst_146 = arith.constant 2.000000e+01 : f32
    %717 = vector.broadcast %cst_146 : f32 to vector<8x8xf32>
    %718 = arith.minimumf %714, %717 : vector<8x8xf32>
    %719 = math.exp %718 : vector<8x8xf32>
    %720 = math.log1p %719 : vector<8x8xf32>
    %721 = arith.select %716, %714, %720 : vector<8x8xi1>, vector<8x8xf32>
    %c0_147 = arith.constant 0 : index
    %c0_148 = arith.constant 0 : index
    %722 = vector.load %arg10[%c0_147, %c0_148] : memref<8x8xf32, #tpu.memory_space<vmem>>, vector<8x8xf32>
    tpu.vector_store %arg10[%c0_147, %c0_148], %721 {strides = array<i32>} : memref<8x8xf32, #tpu.memory_space<vmem>>, vector<8x8xf32>,
    return
  }
}

</mosaic_0001>

<llo_original>
// kernel: tpu_custom_call.1
$region0: #{tpu_custom_call.1}
  #allocation0 [shape = 'u32[]', space=smem, size = 0x4, offset = 0x4, fixed_abs, tag = 'smem constant byte address 0x4 - core index']
  #allocation1 [shape = 'u32[144,128]{1,0:T(1,128)}', space=vmem, size = 0x12000, scoped, tag = 'internal scratch']
  #allocation2 [shape = 'f32[96,128]{1,0:T(8,128)}', space=vmem, size = 0xc000, scoped, tag = 'scratch operand']
  %s0 = inlined_call_operand.vmem [shape: f32[96,9], index: 0, kind: input, shape index: {}]
  %s1 = inlined_call_operand.vmem [shape: f32[9,32], index: 1, kind: input, shape index: {}]
  %s2 = inlined_call_operand.vmem [shape: f32[32,128], index: 2, kind: input, shape index: {}]
  %s3 = inlined_call_operand.vmem [shape: f32[32,128], index: 3, kind: input, shape index: {}]
  %s4 = inlined_call_operand.vmem [shape: f32[1,128], index: 4, kind: input, shape index: {}]
  %s5 = inlined_call_operand.vmem [shape: f32[32,128], index: 5, kind: input, shape index: {}]
  %s6 = inlined_call_operand.vmem [shape: f32[32,128], index: 6, kind: input, shape index: {}]
  %s7 = inlined_call_operand.vmem [shape: f32[1,128], index: 7, kind: input, shape index: {}]
  %s8 = inlined_call_operand.vmem [shape: f32[32,8], index: 8, kind: input, shape index: {}]
  %s9 = inlined_call_operand.vmem [shape: f32[1,8], index: 9, kind: input, shape index: {}]
  %s10 = inlined_call_operand.hbm [shape: f32[8,8], index: 10, kind: output, shape index: {}]
  %s11 = sld [smem:[#allocation0]]
  $region50: #{tpu_custom_call.1} parent=0
    _
  %s13 = ssub.s32 1, %s11
  %s14 = scalar_select 0, %s13, %s11
  $region1: #{tpu_custom_call.1} parent=0
    #allocation3 [shape = 'u8[4096]{0}', space=vmem, size = 0x1000, scoped, tag = 'output window, operand 0, single buffered']
    #allocation4 [shape = 's32[1]{0}', space=sflag, size = 0x4, scoped, tag = 'scoped memory for tpu_custom_call.1']
    %15 = vsyncpa [#allocation4], 0
    // Predicated region
    $region2: #{tpu_custom_call.1} parent=1 // pred_check
      _
    $region3: #{tpu_custom_call.1} parent=1 // pred_check_branch
      %17 = sbr.rel (0) target = $region5
    $region4: #{tpu_custom_call.1} parent=1 // pred_region
      _
    $region5: #{tpu_custom_call.1} parent=1 // pred_fallthru
      _
    // Predicated region
    $region6: #{tpu_custom_call.1} parent=1 // pred_check
      _
    $region7: #{tpu_custom_call.1} parent=1 // pred_check_branch
      %19 = sbr.rel (0) target = $region9
    $region8: #{tpu_custom_call.1} parent=1 // pred_region
      _
    $region9: #{tpu_custom_call.1} parent=1 // pred_fallthru
      _
    // Predicated region
    $region10: #{tpu_custom_call.1} parent=1 // pred_check
      _
    $region11: #{tpu_custom_call.1} parent=1 // pred_check_branch
      %21 = sbr.rel (0) target = $region13
    $region12: #{tpu_custom_call.1} parent=1 // pred_region
      _
    $region13: #{tpu_custom_call.1} parent=1 // pred_fallthru
      _
    // Predicated region
    $region14: #{tpu_custom_call.1} parent=1 // pred_check
      _
    $region15: #{tpu_custom_call.1} parent=1 // pred_check_branch
      %23 = sbr.rel (0) target = $region17
    $region16: #{tpu_custom_call.1} parent=1 // pred_region
      _
    $region17: #{tpu_custom_call.1} parent=1 // pred_fallthru
      _
    // Predicated region
    $region18: #{tpu_custom_call.1} parent=1 // pred_check
      _
    $region19: #{tpu_custom_call.1} parent=1 // pred_check_branch
      %25 = sbr.rel (0) target = $region21
    $region20: #{tpu_custom_call.1} parent=1 // pred_region
      _
    $region21: #{tpu_custom_call.1} parent=1 // pred_fallthru
      _
    // Predicated region
    $region22: #{tpu_custom_call.1} parent=1 // pred_check
      _
    $region23: #{tpu_custom_call.1} parent=1 // pred_check_branch
      %27 = sbr.rel (0) target = $region25
    $region24: #{tpu_custom_call.1} parent=1 // pred_region
      _
    $region25: #{tpu_custom_call.1} parent=1 // pred_fallthru
      _
    // Predicated region
    $region26: #{tpu_custom_call.1} parent=1 // pred_check
      _
    $region27: #{tpu_custom_call.1} parent=1 // pred_check_branch
      %29 = sbr.rel (0) target = $region29
    $region28: #{tpu_custom_call.1} parent=1 // pred_region
      _
    $region29: #{tpu_custom_call.1} parent=1 // pred_fallthru
      _
    // Predicated region
    $region30: #{tpu_custom_call.1} parent=1 // pred_check
      _
    $region31: #{tpu_custom_call.1} parent=1 // pred_check_branch
      %31 = sbr.rel (0) target = $region33
    $region32: #{tpu_custom_call.1} parent=1 // pred_region
      _
    $region33: #{tpu_custom_call.1} parent=1 // pred_fallthru
      _
    // Predicated region
    $region34: #{tpu_custom_call.1} parent=1 // pred_check
      _
    $region35: #{tpu_custom_call.1} parent=1 // pred_check_branch
      %33 = sbr.rel (0) target = $region37
    $region36: #{tpu_custom_call.1} parent=1 // pred_region
      _
    $region37: #{tpu_custom_call.1} parent=1 // pred_fallthru
      _
    // Predicated region
    $region38: #{tpu_custom_call.1} parent=1 // pred_check
      _
    $region39: #{tpu_custom_call.1} parent=1 // pred_check_branch
      %35 = sbr.rel (0) target = $region41
    $region40: #{tpu_custom_call.1} parent=1 // pred_region
      _
    $region41: #{tpu_custom_call.1} parent=1 // pred_fallthru
      _
    %v36 = vld [vmem:[%s0] sm:$0xff]
    %v37 = vld [vmem:[%s0 + $0x8] sm:$0xff]
    %v38 = vld [vmem:[%s0 + $0x10] sm:$0xff]
    %v39 = vld [vmem:[%s0 + $0x18] sm:$0xff]
    %v40 = vld [vmem:[%s0 + $0x20] sm:$0xff]
    %v41 = vld [vmem:[%s0 + $0x28] sm:$0xff]
    %v42 = vld [vmem:[%s0 + $0x30] sm:$0xff]
    %v43 = vld [vmem:[%s0 + $0x38] sm:$0xff]
    %v44 = vld [vmem:[%s0 + $0x40] sm:$0xff]
    %v45 = vld [vmem:[%s0 + $0x48] sm:$0xff]
    %v46 = vld [vmem:[%s0 + $0x50] sm:$0xff]
    %v47 = vld [vmem:[%s0 + $0x58] sm:$0xff]
    %v48 = vld [vmem:[%s1] sm:$0xff]
    %v49 = vld [vmem:[%s1 + $0x8] sm:$0x1]
    %vm50 = vcmask 72704
    %v52 = vsel %vm50, %v36, 0
    %v55 = vsel %vm50, %v37, 0
    %v58 = vsel %vm50, %v38, 0
    %v61 = vsel %vm50, %v39, 0
    %v64 = vsel %vm50, %v40, 0
    %v67 = vsel %vm50, %v41, 0
    %v70 = vsel %vm50, %v42, 0
    %v73 = vsel %vm50, %v43, 0
    %v76 = vsel %vm50, %v44, 0
    %v79 = vsel %vm50, %v45, 0
    %v82 = vsel %vm50, %v46, 0
    %v85 = vsel %vm50, %v47, 0
    %vm87 = vcmask 1040384
    %v89 = vsel %vm87, %v49, 0
    %91 = vmatprep.subr.mxu0 0.0
    %92 = vmatpush1.msra.mxu0 0.0
    %93 = vmatprep.subr.mxu0 0.0
    %94 = vmatpush1.msra.mxu0 0.0
    %95 = vmatprep.subr.mxu0 0.0
    %96 = vmatpush1.msra.mxu0 0.0
    %97 = vmatprep.subr.mxu0 0.0
    %98 = vmatpush1.msra.mxu0 0.0
    %99 = vmatprep.subr.mxu0 0.0
    %100 = vmatpush1.msra.mxu0 0.0
    %101 = vmatprep.subr.mxu0 0.0
    %102 = vmatpush1.msra.mxu0 0.0
    %103 = vmatprep.subr.mxu0 0.0
    %104 = vmatpush1.msra.mxu0 0.0
    %105 = vmatprep.subr.mxu0 0.0
    %106 = vmatpush1.msra.mxu0 0.0
    %107 = vmatprep.subr.mxu0 0.0
    %108 = vmatpush1.msra.mxu0 0.0
    %109 = vmatprep.subr.mxu0 0.0
    %110 = vmatpush1.msra.mxu0 0.0
    %111 = vmatprep.subr.mxu0 0.0
    %112 = vmatpush1.msra.mxu0 0.0
    %113 = vmatprep.subr.mxu0 0.0
    %114 = vmatpush1.msra.mxu0 0.0
    %115 = vmatprep.subr.mxu0 0.0
    %116 = vmatpush1.msra.mxu0 0.0
    %117 = vmatprep.subr.mxu0 0.0
    %118 = vmatpush1.msra.mxu0 0.0
    %119 = vmatprep.subr.mxu0 0.0
    %120 = vmatpush1.msra.mxu0 %v89
    %121 = vmatprep.subr.mxu0 0.0
    %122 = vmatpush1.msra.mxu0 %v48
    %123 = vmatprep.subr.mxu0 0.0
    %124 = vmatpush2.msra.mxu0 0.0
    %125 = vmatprep.subr.mxu0 0.0
    %126 = vmatpush2.msra.mxu0 0.0
    %127 = vmatprep.subr.mxu0 0.0
    %128 = vmatpush2.msra.mxu0 0.0
    %129 = vmatprep.subr.mxu0 0.0
    %130 = vmatpush2.msra.mxu0 0.0
    %131 = vmatprep.subr.mxu0 0.0
    %132 = vmatpush2.msra.mxu0 0.0
    %133 = vmatprep.subr.mxu0 0.0
    %134 = vmatpush2.msra.mxu0 0.0
    %135 = vmatprep.subr.mxu0 0.0
    %136 = vmatpush2.msra.mxu0 0.0
    %137 = vmatprep.subr.mxu0 0.0
    %138 = vmatpush2.msra.mxu0 0.0
    %139 = vmatprep.subr.mxu0 0.0
    %140 = vmatpush2.msra.mxu0 0.0
    %141 = vmatprep.subr.mxu0 0.0
    %142 = vmatpush2.msra.mxu0 0.0
    %143 = vmatprep.subr.mxu0 0.0
    %144 = vmatpush2.msra.mxu0 0.0
    %145 = vmatprep.subr.mxu0 0.0
    %146 = vmatpush2.msra.mxu0 0.0
    %147 = vmatprep.subr.mxu0 0.0
    %148 = vmatpush2.msra.mxu0 0.0
    %149 = vmatprep.subr.mxu0 0.0
    %150 = vmatpush2.msra.mxu0 0.0
    %151 = vmatprep.subr.mxu0 0.0
    %152 = vmatpush2.msra.mxu0 0.0
    %153 = vmatprep.subr.mxu0 0.0
    %154 = vmatpush2.msra.mxu0 0.0
    %155 = vmatprep.mubr.f32.mxu0 0.0
    %156 = vmatmul.mubr.f32.gmra.mxu0 %v52
    %v157 = vpop.f32.mrf.mxu0
    %v158 = vadd.f32 0.0, %v157
    %v159 = vpop.f32.mrf.mxu0
    %160 = vmatprep.mubr.f32.mxu0 0.0
    %161 = vmatmul.mubr.f32.gmra.mxu0 %v55
    %v162 = vpop.f32.mrf.mxu0
    %v163 = vadd.f32 0.0, %v162
    %v164 = vpop.f32.mrf.mxu0
    %165 = vmatprep.mubr.f32.mxu0 0.0
    %166 = vmatmul.mubr.f32.gmra.mxu0 %v58
    %v167 = vpop.f32.mrf.mxu0
    %v168 = vadd.f32 0.0, %v167
    %v169 = vpop.f32.mrf.mxu0
    %170 = vmatprep.mubr.f32.mxu0 0.0
    %171 = vmatmul.mubr.f32.gmra.mxu0 %v61
    %v172 = vpop.f32.mrf.mxu0
    %v173 = vadd.f32 0.0, %v172
    %v174 = vpop.f32.mrf.mxu0
    %175 = vmatprep.mubr.f32.mxu0 0.0
    %176 = vmatmul.mubr.f32.gmra.mxu0 %v64
    %v177 = vpop.f32.mrf.mxu0
    %v178 = vadd.f32 0.0, %v177
    %v179 = vpop.f32.mrf.mxu0
    %180 = vmatprep.mubr.f32.mxu0 0.0
    %181 = vmatmul.mubr.f32.gmra.mxu0 %v67
    %v182 = vpop.f32.mrf.mxu0
    %v183 = vadd.f32 0.0, %v182
    %v184 = vpop.f32.mrf.mxu0
    %185 = vmatprep.mubr.f32.mxu0 0.0
    %186 = vmatmul.mubr.f32.gmra.mxu0 %v70
    %v187 = vpop.f32.mrf.mxu0
    %v188 = vadd.f32 0.0, %v187
    %v189 = vpop.f32.mrf.mxu0
    %190 = vmatprep.mubr.f32.mxu0 0.0
    %191 = vmatmul.mubr.f32.gmra.mxu0 %v73
    %v192 = vpop.f32.mrf.mxu0
    %v193 = vadd.f32 0.0, %v192
    %v194 = vpop.f32.mrf.mxu0
    %195 = vmatprep.mubr.f32.mxu0 0.0
    %196 = vmatmul.mubr.f32.gmra.mxu0 %v76
    %v197 = vpop.f32.mrf.mxu0
    %v198 = vadd.f32 0.0, %v197
    %v199 = vpop.f32.mrf.mxu0
    %200 = vmatprep.mubr.f32.mxu0 0.0
    %201 = vmatmul.mubr.f32.gmra.mxu0 %v79
    %v202 = vpop.f32.mrf.mxu0
    %v203 = vadd.f32 0.0, %v202
    %v204 = vpop.f32.mrf.mxu0
    %205 = vmatprep.mubr.f32.mxu0 0.0
    %206 = vmatmul.mubr.f32.gmra.mxu0 %v82
    %v207 = vpop.f32.mrf.mxu0
    %v208 = vadd.f32 0.0, %v207
    %v209 = vpop.f32.mrf.mxu0
    %210 = vmatprep.mubr.f32.mxu0 0.0
    %211 = vmatmul.mubr.f32.gmra.mxu0 %v85
    %v212 = vpop.f32.mrf.mxu0
    %v213 = vadd.f32 0.0, %v212
    %v214 = vpop.f32.mrf.mxu0
    %215 = vdwg.mxu0
    %v216 = vld [vmem:[%s2] sm:$0xff]
    %v217 = vld [vmem:[%s2 + $0x8] sm:$0xff]
    %v218 = vld [vmem:[%s2 + $0x10] sm:$0xff]
    %v219 = vld [vmem:[%s2 + $0x18] sm:$0xff]
    %v220 = vld [vmem:[%s4] sm:$0x1]
    %v222 = vlaneseq
    %v223 = vshrl.u32 %v222, 7
    %v224 = vsub.s32 0, %v223
    %v225 = vrot.slane %v220, %v224
    %vm227 = vcmask 261120
    %v229 = vsel %vm227, %v158, 0
    %v232 = vsel %vm227, %v163, 0
    %v235 = vsel %vm227, %v168, 0
    %v238 = vsel %vm227, %v173, 0
    %v241 = vsel %vm227, %v178, 0
    %v244 = vsel %vm227, %v183, 0
    %v247 = vsel %vm227, %v188, 0
    %v250 = vsel %vm227, %v193, 0
    %v253 = vsel %vm227, %v198, 0
    %v256 = vsel %vm227, %v203, 0
    %v259 = vsel %vm227, %v208, 0
    %v262 = vsel %vm227, %v213, 0
    %264 = vmatprep.subr.mxu0 0.0
    %265 = vmatpush1.msra.mxu0 0.0
    %266 = vmatprep.subr.mxu0 0.0
    %267 = vmatpush1.msra.mxu0 0.0
    %268 = vmatprep.subr.mxu0 0.0
    %269 = vmatpush1.msra.mxu0 0.0
    %270 = vmatprep.subr.mxu0 0.0
    %271 = vmatpush1.msra.mxu0 0.0
    %272 = vmatprep.subr.mxu0 0.0
    %273 = vmatpush1.msra.mxu0 0.0
    %274 = vmatprep.subr.mxu0 0.0
    %275 = vmatpush1.msra.mxu0 0.0
    %276 = vmatprep.subr.mxu0 0.0
    %277 = vmatpush1.msra.mxu0 0.0
    %278 = vmatprep.subr.mxu0 0.0
    %279 = vmatpush1.msra.mxu0 0.0
    %280 = vmatprep.subr.mxu0 0.0
    %281 = vmatpush1.msra.mxu0 0.0
    %282 = vmatprep.subr.mxu0 0.0
    %283 = vmatpush1.msra.mxu0 0.0
    %284 = vmatprep.subr.mxu0 0.0
    %285 = vmatpush1.msra.mxu0 0.0
    %286 = vmatprep.subr.mxu0 0.0
    %287 = vmatpush1.msra.mxu0 0.0
    %288 = vmatprep.subr.mxu0 0.0
    %289 = vmatpush1.msra.mxu0 %v219
    %290 = vmatprep.subr.mxu0 0.0
    %291 = vmatpush1.msra.mxu0 %v218
    %292 = vmatprep.subr.mxu0 0.0
    %293 = vmatpush1.msra.mxu0 %v217
    %294 = vmatprep.subr.mxu0 0.0
    %295 = vmatpush1.msra.mxu0 %v216
    %296 = vmatprep.subr.mxu0 0.0
    %297 = vmatpush2.msra.mxu0 0.0
    %298 = vmatprep.subr.mxu0 0.0
    %299 = vmatpush2.msra.mxu0 0.0
    %300 = vmatprep.subr.mxu0 0.0
    %301 = vmatpush2.msra.mxu0 0.0
    %302 = vmatprep.subr.mxu0 0.0
    %303 = vmatpush2.msra.mxu0 0.0
    %304 = vmatprep.subr.mxu0 0.0
    %305 = vmatpush2.msra.mxu0 0.0
    %306 = vmatprep.subr.mxu0 0.0
    %307 = vmatpush2.msra.mxu0 0.0
    %308 = vmatprep.subr.mxu0 0.0
    %309 = vmatpush2.msra.mxu0 0.0
    %310 = vmatprep.subr.mxu0 0.0
    %311 = vmatpush2.msra.mxu0 0.0
    %312 = vmatprep.subr.mxu0 0.0
    %313 = vmatpush2.msra.mxu0 0.0
    %314 = vmatprep.subr.mxu0 0.0
    %315 = vmatpush2.msra.mxu0 0.0
    %316 = vmatprep.subr.mxu0 0.0
    %317 = vmatpush2.msra.mxu0 0.0
    %318 = vmatprep.subr.mxu0 0.0
    %319 = vmatpush2.msra.mxu0 0.0
    %320 = vmatprep.subr.mxu0 0.0
    %321 = vmatpush2.msra.mxu0 0.0
    %322 = vmatprep.subr.mxu0 0.0
    %323 = vmatpush2.msra.mxu0 0.0
    %324 = vmatprep.subr.mxu0 0.0
    %325 = vmatpush2.msra.mxu0 0.0
    %326 = vmatprep.subr.mxu0 0.0
    %327 = vmatpush2.msra.mxu0 0.0
    %328 = vmatprep.mubr.f32.mxu0 0.0
    %329 = vmatmul.mubr.f32.gmra.mxu0 %v229
    %v330 = vpop.f32.mrf.mxu0
    %v331 = vadd.f32 %v225, %v330
    %v332 = vpop.f32.mrf.mxu0
    %333 = vmatprep.mubr.f32.mxu0 0.0
    %334 = vmatmul.mubr.f32.gmra.mxu0 %v232
    %v335 = vpop.f32.mrf.mxu0
    %v336 = vadd.f32 %v225, %v335
    %v337 = vpop.f32.mrf.mxu0
    %338 = vmatprep.mubr.f32.mxu0 0.0
    %339 = vmatmul.mubr.f32.gmra.mxu0 %v235
    %v340 = vpop.f32.mrf.mxu0
    %v341 = vadd.f32 %v225, %v340
    %v342 = vpop.f32.mrf.mxu0
    %343 = vmatprep.mubr.f32.mxu0 0.0
    %344 = vmatmul.mubr.f32.gmra.mxu0 %v238
    %v345 = vpop.f32.mrf.mxu0
    %v346 = vadd.f32 %v225, %v345
    %v347 = vpop.f32.mrf.mxu0
    %348 = vmatprep.mubr.f32.mxu0 0.0
    %349 = vmatmul.mubr.f32.gmra.mxu0 %v241
    %v350 = vpop.f32.mrf.mxu0
    %v351 = vadd.f32 %v225, %v350
    %v352 = vpop.f32.mrf.mxu0
    %353 = vmatprep.mubr.f32.mxu0 0.0
    %354 = vmatmul.mubr.f32.gmra.mxu0 %v244
    %v355 = vpop.f32.mrf.mxu0
    %v356 = vadd.f32 %v225, %v355
    %v357 = vpop.f32.mrf.mxu0
    %358 = vmatprep.mubr.f32.mxu0 0.0
    %359 = vmatmul.mubr.f32.gmra.mxu0 %v247
    %v360 = vpop.f32.mrf.mxu0
    %v361 = vadd.f32 %v225, %v360
    %v362 = vpop.f32.mrf.mxu0
    %363 = vmatprep.mubr.f32.mxu0 0.0
    %364 = vmatmul.mubr.f32.gmra.mxu0 %v250
    %v365 = vpop.f32.mrf.mxu0
    %v366 = vadd.f32 %v225, %v365
    %v367 = vpop.f32.mrf.mxu0
    %368 = vmatprep.mubr.f32.mxu0 0.0
    %369 = vmatmul.mubr.f32.gmra.mxu0 %v253
    %v370 = vpop.f32.mrf.mxu0
    %v371 = vadd.f32 %v225, %v370
    %v372 = vpop.f32.mrf.mxu0
    %373 = vmatprep.mubr.f32.mxu0 0.0
    %374 = vmatmul.mubr.f32.gmra.mxu0 %v256
    %v375 = vpop.f32.mrf.mxu0
    %v376 = vadd.f32 %v225, %v375
    %v377 = vpop.f32.mrf.mxu0
    %378 = vmatprep.mubr.f32.mxu0 0.0
    %379 = vmatmul.mubr.f32.gmra.mxu0 %v259
    %v380 = vpop.f32.mrf.mxu0
    %v381 = vadd.f32 %v225, %v380
    %v382 = vpop.f32.mrf.mxu0
    %383 = vmatprep.mubr.f32.mxu0 0.0
    %384 = vmatmul.mubr.f32.gmra.mxu0 %v262
    %v385 = vpop.f32.mrf.mxu0
    %v386 = vadd.f32 %v225, %v385
    %v387 = vpop.f32.mrf.mxu0
    %388 = vdwg.mxu0
    %389 = vst [vmem:[#allocation2] sm:$0xff] %v331
    %390 = vst [vmem:[#allocation2 + $0x8] sm:$0xff] %v336
    %391 = vst [vmem:[#allocation2 + $0x10] sm:$0xff] %v341
    %392 = vst [vmem:[#allocation2 + $0x18] sm:$0xff] %v346
    %393 = vst [vmem:[#allocation2 + $0x20] sm:$0xff] %v351
    %394 = vst [vmem:[#allocation2 + $0x28] sm:$0xff] %v356
    %395 = vst [vmem:[#allocation2 + $0x30] sm:$0xff] %v361
    %396 = vst [vmem:[#allocation2 + $0x38] sm:$0xff] %v366
    %397 = vst [vmem:[#allocation2 + $0x40] sm:$0xff] %v371
    %398 = vst [vmem:[#allocation2 + $0x48] sm:$0xff] %v376
    %399 = vst [vmem:[#allocation2 + $0x50] sm:$0xff] %v381
    %400 = vst [vmem:[#allocation2 + $0x58] sm:$0xff] %v386
    %v401 = vld [vmem:[%s3] sm:$0xff]
    %v402 = vld [vmem:[%s3 + $0x8] sm:$0xff]
    %v403 = vld [vmem:[%s3 + $0x10] sm:$0xff]
    %v404 = vld [vmem:[%s3 + $0x18] sm:$0xff]
    %v405 = vld [vmem:[%s6] sm:$0xff]
    %v406 = vld [vmem:[%s6 + $0x8] sm:$0xff]
    %v407 = vld [vmem:[%s6 + $0x10] sm:$0xff]
    %v408 = vld [vmem:[%s6 + $0x18] sm:$0xff]
    %v409 = vld [vmem:[%s5] sm:$0xff]
    %v410 = vld [vmem:[%s5 + $0x8] sm:$0xff]
    %v411 = vld [vmem:[%s5 + $0x10] sm:$0xff]
    %v412 = vld [vmem:[%s5 + $0x18] sm:$0xff]
    %v413 = vld [vmem:[%s7] sm:$0x1]
    %v414 = vld [vmem:[#allocation2] sm:$0xff]
    %v416 = vsel %vm227, 0.0, 0
    %418 = vmatprep.subr.mxu0 0.0
    %419 = vmatpush1.msra.mxu0 0.0
    %420 = vmatprep.subr.mxu0 0.0
    %421 = vmatpush1.msra.mxu0 0.0
    %422 = vmatprep.subr.mxu0 0.0
    %423 = vmatpush1.msra.mxu0 0.0
    %424 = vmatprep.subr.mxu0 0.0
    %425 = vmatpush1.msra.mxu0 0.0
    %426 = vmatprep.subr.mxu0 0.0
    %427 = vmatpush1.msra.mxu0 0.0
    %428 = vmatprep.subr.mxu0 0.0
    %429 = vmatpush1.msra.mxu0 0.0
    %430 = vmatprep.subr.mxu0 0.0
    %431 = vmatpush1.msra.mxu0 0.0
    %432 = vmatprep.subr.mxu0 0.0
    %433 = vmatpush1.msra.mxu0 0.0
    %434 = vmatprep.subr.mxu0 0.0
    %435 = vmatpush1.msra.mxu0 0.0
    %436 = vmatprep.subr.mxu0 0.0
    %437 = vmatpush1.msra.mxu0 0.0
    %438 = vmatprep.subr.mxu0 0.0
    %439 = vmatpush1.msra.mxu0 0.0
    %440 = vmatprep.subr.mxu0 0.0
    %441 = vmatpush1.msra.mxu0 0.0
    %442 = vmatprep.subr.mxu0 0.0
    %443 = vmatpush1.msra.mxu0 %v404
    %444 = vmatprep.subr.mxu0 0.0
    %445 = vmatpush1.msra.mxu0 %v403
    %446 = vmatprep.subr.mxu0 0.0
    %447 = vmatpush1.msra.mxu0 %v402
    %448 = vmatprep.subr.mxu0 0.0
    %449 = vmatpush1.msra.mxu0 %v401
    %450 = vmatprep.subr.mxu0 0.0
    %451 = vmatpush2.msra.mxu0 0.0
    %452 = vmatprep.subr.mxu0 0.0
    %453 = vmatpush2.msra.mxu0 0.0
    %454 = vmatprep.subr.mxu0 0.0
    %455 = vmatpush2.msra.mxu0 0.0
    %456 = vmatprep.subr.mxu0 0.0
    %457 = vmatpush2.msra.mxu0 0.0
    %458 = vmatprep.subr.mxu0 0.0
    %459 = vmatpush2.msra.mxu0 0.0
    %460 = vmatprep.subr.mxu0 0.0
    %461 = vmatpush2.msra.mxu0 0.0
    %462 = vmatprep.subr.mxu0 0.0
    %463 = vmatpush2.msra.mxu0 0.0
    %464 = vmatprep.subr.mxu0 0.0
    %465 = vmatpush2.msra.mxu0 0.0
    %466 = vmatprep.subr.mxu0 0.0
    %467 = vmatpush2.msra.mxu0 0.0
    %468 = vmatprep.subr.mxu0 0.0
    %469 = vmatpush2.msra.mxu0 0.0
    %470 = vmatprep.subr.mxu0 0.0
    %471 = vmatpush2.msra.mxu0 0.0
    %472 = vmatprep.subr.mxu0 0.0
    %473 = vmatpush2.msra.mxu0 0.0
    %474 = vmatprep.subr.mxu0 0.0
    %475 = vmatpush2.msra.mxu0 0.0
    %476 = vmatprep.subr.mxu0 0.0
    %477 = vmatpush2.msra.mxu0 0.0
    %478 = vmatprep.subr.mxu0 0.0
    %479 = vmatpush2.msra.mxu0 0.0
    %480 = vmatprep.subr.mxu0 0.0
    %481 = vmatpush2.msra.mxu0 0.0
    %482 = vmatprep.mubr.f32.mxu0 0.0
    %483 = vmatmul.mubr.f32.gmra.mxu0 %v416
    %v484 = vpop.f32.mrf.mxu0
    %v485 = vadd.f32 0.0, %v484
    %v486 = vpop.f32.mrf.mxu0
    %487 = vdwg.mxu0
    %v488 = vadd.f32 %v414, %v485
    %v489 = vxor.u32 %v488, 2147483648
    %v490 = vmul.f32 %v489, 1.442695
    %v491 = vpow.pop %v490
    %v492 = vadd.f32 %v491, 1.0
    %v493 = vrcp.pop %v492
    %v494 = vmul.f32 1.0, %v493
    %v495 = vtanh.pop %v488
    %v496 = vmul.f32 %v494, 0.0
    %498 = vrot.lane.b32.xlu0 %v495, 64
    %v499 = vpop.permute.xlu0 %498
    %v501 = vmul.f32 %v494, %v499
    %503 = vrot.lane.b32.xlu0 %v501, 32
    %v504 = vpop.permute.xlu0 %503
    %v506 = vadd.f32 %v496, %v504
    %v507 = vtanh.pop %v506
    %509 = vrot.lane.b32.xlu0 %v507, 64
    %v510 = vpop.permute.xlu0 %509
    %v512 = vmul.f32 %v494, %v510
    %v514 = vlaneseq
    %v515 = vshrl.u32 %v514, 7
    %v516 = vsub.s32 0, %v515
    %v517 = vrot.slane %v413, %v516
    %520 = vrot.lane.b32.xlu0 %v512, 32
    %v521 = vpop.permute.xlu0 %520
    %v522 = vsel %vm227, %v521, 0
    %524 = vmatprep.subr.mxu0 0.0
    %525 = vmatpush1.msra.mxu0 0.0
    %526 = vmatprep.subr.mxu0 0.0
    %527 = vmatpush1.msra.mxu0 0.0
    %528 = vmatprep.subr.mxu0 0.0
    %529 = vmatpush1.msra.mxu0 0.0
    %530 = vmatprep.subr.mxu0 0.0
    %531 = vmatpush1.msra.mxu0 0.0
    %532 = vmatprep.subr.mxu0 0.0
    %533 = vmatpush1.msra.mxu0 0.0
    %534 = vmatprep.subr.mxu0 0.0
    %535 = vmatpush1.msra.mxu0 0.0
    %536 = vmatprep.subr.mxu0 0.0
    %537 = vmatpush1.msra.mxu0 0.0
    %538 = vmatprep.subr.mxu0 0.0
    %539 = vmatpush1.msra.mxu0 0.0
    %540 = vmatprep.subr.mxu0 0.0
    %541 = vmatpush1.msra.mxu0 0.0
    %542 = vmatprep.subr.mxu0 0.0
    %543 = vmatpush1.msra.mxu0 0.0
    %544 = vmatprep.subr.mxu0 0.0
    %545 = vmatpush1.msra.mxu0 0.0
    %546 = vmatprep.subr.mxu0 0.0
    %547 = vmatpush1.msra.mxu0 0.0
    %548 = vmatprep.subr.mxu0 0.0
    %549 = vmatpush1.msra.mxu0 %v412
    %550 = vmatprep.subr.mxu0 0.0
    %551 = vmatpush1.msra.mxu0 %v411
    %552 = vmatprep.subr.mxu0 0.0
    %553 = vmatpush1.msra.mxu0 %v410
    %554 = vmatprep.subr.mxu0 0.0
    %555 = vmatpush1.msra.mxu0 %v409
    %556 = vmatprep.subr.mxu0 0.0
    %557 = vmatpush2.msra.mxu0 0.0
    %558 = vmatprep.subr.mxu0 0.0
    %559 = vmatpush2.msra.mxu0 0.0
    %560 = vmatprep.subr.mxu0 0.0
    %561 = vmatpush2.msra.mxu0 0.0
    %562 = vmatprep.subr.mxu0 0.0
    %563 = vmatpush2.msra.mxu0 0.0
    %564 = vmatprep.subr.mxu0 0.0
    %565 = vmatpush2.msra.mxu0 0.0
    %566 = vmatprep.subr.mxu0 0.0
    %567 = vmatpush2.msra.mxu0 0.0
    %568 = vmatprep.subr.mxu0 0.0
    %569 = vmatpush2.msra.mxu0 0.0
    %570 = vmatprep.subr.mxu0 0.0
    %571 = vmatpush2.msra.mxu0 0.0
    %572 = vmatprep.subr.mxu0 0.0
    %573 = vmatpush2.msra.mxu0 0.0
    %574 = vmatprep.subr.mxu0 0.0
    %575 = vmatpush2.msra.mxu0 0.0
    %576 = vmatprep.subr.mxu0 0.0
    %577 = vmatpush2.msra.mxu0 0.0
    %578 = vmatprep.subr.mxu0 0.0
    %579 = vmatpush2.msra.mxu0 0.0
    %580 = vmatprep.subr.mxu0 0.0
    %581 = vmatpush2.msra.mxu0 0.0
    %582 = vmatprep.subr.mxu0 0.0
    %583 = vmatpush2.msra.mxu0 0.0
    %584 = vmatprep.subr.mxu0 0.0
    %585 = vmatpush2.msra.mxu0 0.0
    %586 = vmatprep.subr.mxu0 0.0
    %587 = vmatpush2.msra.mxu0 0.0
    %588 = vmatprep.mubr.f32.mxu0 0.0
    %589 = vmatmul.mubr.f32.gmra.mxu0 %v522
    %v590 = vpop.f32.mrf.mxu0
    %v591 = vadd.f32 %v517, %v590
    %v592 = vpop.f32.mrf.mxu0
    %593 = vdwg.mxu0
    %594 = vmatprep.subr.mxu0 0.0
    %595 = vmatpush1.msra.mxu0 0.0
    %596 = vmatprep.subr.mxu0 0.0
    %597 = vmatpush1.msra.mxu0 0.0
    %598 = vmatprep.subr.mxu0 0.0
    %599 = vmatpush1.msra.mxu0 0.0
    %600 = vmatprep.subr.mxu0 0.0
    %601 = vmatpush1.msra.mxu0 0.0
    %602 = vmatprep.subr.mxu0 0.0
    %603 = vmatpush1.msra.mxu0 0.0
    %604 = vmatprep.subr.mxu0 0.0
    %605 = vmatpush1.msra.mxu0 0.0
    %606 = vmatprep.subr.mxu0 0.0
    %607 = vmatpush1.msra.mxu0 0.0
    %608 = vmatprep.subr.mxu0 0.0
    %609 = vmatpush1.msra.mxu0 0.0
    %610 = vmatprep.subr.mxu0 0.0
    %611 = vmatpush1.msra.mxu0 0.0
    %612 = vmatprep.subr.mxu0 0.0
    %613 = vmatpush1.msra.mxu0 0.0
    %614 = vmatprep.subr.mxu0 0.0
    %615 = vmatpush1.msra.mxu0 0.0
    %616 = vmatprep.subr.mxu0 0.0
    %617 = vmatpush1.msra.mxu0 0.0
    %618 = vmatprep.subr.mxu0 0.0
    %619 = vmatpush1.msra.mxu0 %v408
    %620 = vmatprep.subr.mxu0 0.0
    %621 = vmatpush1.msra.mxu0 %v407
    %622 = vmatprep.subr.mxu0 0.0
    %623 = vmatpush1.msra.mxu0 %v406
    %624 = vmatprep.subr.mxu0 0.0
    %625 = vmatpush1.msra.mxu0 %v405
    %626 = vmatprep.subr.mxu0 0.0
    %627 = vmatpush2.msra.mxu0 0.0
    %628 = vmatprep.subr.mxu0 0.0
    %629 = vmatpush2.msra.mxu0 0.0
    %630 = vmatprep.subr.mxu0 0.0
    %631 = vmatpush2.msra.mxu0 0.0
    %632 = vmatprep.subr.mxu0 0.0
    %633 = vmatpush2.msra.mxu0 0.0
    %634 = vmatprep.subr.mxu0 0.0
    %635 = vmatpush2.msra.mxu0 0.0
    %636 = vmatprep.subr.mxu0 0.0
    %637 = vmatpush2.msra.mxu0 0.0
    %638 = vmatprep.subr.mxu0 0.0
    %639 = vmatpush2.msra.mxu0 0.0
    %640 = vmatprep.subr.mxu0 0.0
    %641 = vmatpush2.msra.mxu0 0.0
    %642 = vmatprep.subr.mxu0 0.0
    %643 = vmatpush2.msra.mxu0 0.0
    %644 = vmatprep.subr.mxu0 0.0
    %645 = vmatpush2.msra.mxu0 0.0
    %646 = vmatprep.subr.mxu0 0.0
    %647 = vmatpush2.msra.mxu0 0.0
    %648 = vmatprep.subr.mxu0 0.0
    %649 = vmatpush2.msra.mxu0 0.0
    %650 = vmatprep.subr.mxu0 0.0
    %651 = vmatpush2.msra.mxu0 0.0
    %652 = vmatprep.subr.mxu0 0.0
    %653 = vmatpush2.msra.mxu0 0.0
    %654 = vmatprep.subr.mxu0 0.0
    %655 = vmatpush2.msra.mxu0 0.0
    %656 = vmatprep.subr.mxu0 0.0
    %657 = vmatpush2.msra.mxu0 0.0
    %658 = vmatprep.mubr.f32.mxu0 0.0
    %659 = vmatmul.mubr.f32.gmra.mxu0 %v416
    %v660 = vpop.f32.mrf.mxu0
    %v661 = vadd.f32 0.0, %v660
    %v662 = vpop.f32.mrf.mxu0
    %663 = vdwg.mxu0
    %v664 = vadd.f32 %v591, %v661
    %v665 = vxor.u32 %v664, 2147483648
    %v666 = vmul.f32 %v665, 1.442695
    %v667 = vpow.pop %v666
    %v668 = vadd.f32 %v667, 1.0
    %v669 = vrcp.pop %v668
    %v670 = vmul.f32 1.0, %v669
    %v671 = vtanh.pop %v664
    %v672 = vmul.f32 %v670, 0.0
    %674 = vrot.lane.b32.xlu0 %v671, 64
    %v675 = vpop.permute.xlu0 %674
    %v677 = vmul.f32 %v670, %v675
    %679 = vrot.lane.b32.xlu0 %v677, 32
    %v680 = vpop.permute.xlu0 %679
    %v682 = vadd.f32 %v672, %v680
    %v683 = vtanh.pop %v682
    %685 = vrot.lane.b32.xlu0 %v683, 64
    %v686 = vpop.permute.xlu0 %685
    %v688 = vmul.f32 %v670, %v686
    %v689 = vld [vmem:[#allocation2 + $0x8] sm:$0xff]
    %690 = vmatprep.subr.mxu0 0.0
    %691 = vmatpush1.msra.mxu0 0.0
    %692 = vmatprep.subr.mxu0 0.0
    %693 = vmatpush1.msra.mxu0 0.0
    %694 = vmatprep.subr.mxu0 0.0
    %695 = vmatpush1.msra.mxu0 0.0
    %696 = vmatprep.subr.mxu0 0.0
    %697 = vmatpush1.msra.mxu0 0.0
    %698 = vmatprep.subr.mxu0 0.0
    %699 = vmatpush1.msra.mxu0 0.0
    %700 = vmatprep.subr.mxu0 0.0
    %701 = vmatpush1.msra.mxu0 0.0
    %702 = vmatprep.subr.mxu0 0.0
    %703 = vmatpush1.msra.mxu0 0.0
    %704 = vmatprep.subr.mxu0 0.0
    %705 = vmatpush1.msra.mxu0 0.0
    %706 = vmatprep.subr.mxu0 0.0
    %707 = vmatpush1.msra.mxu0 0.0
    %708 = vmatprep.subr.mxu0 0.0
    %709 = vmatpush1.msra.mxu0 0.0
    %710 = vmatprep.subr.mxu0 0.0
    %711 = vmatpush1.msra.mxu0 0.0
    %712 = vmatprep.subr.mxu0 0.0
    %713 = vmatpush1.msra.mxu0 0.0
    %714 = vmatprep.subr.mxu0 0.0
    %715 = vmatpush1.msra.mxu0 %v404
    %716 = vmatprep.subr.mxu0 0.0
    %717 = vmatpush1.msra.mxu0 %v403
    %718 = vmatprep.subr.mxu0 0.0
    %719 = vmatpush1.msra.mxu0 %v402
    %720 = vmatprep.subr.mxu0 0.0
    %721 = vmatpush1.msra.mxu0 %v401
    %722 = vmatprep.subr.mxu0 0.0
    %723 = vmatpush2.msra.mxu0 0.0
    %724 = vmatprep.subr.mxu0 0.0
    %725 = vmatpush2.msra.mxu0 0.0
    %726 = vmatprep.subr.mxu0 0.0
    %727 = vmatpush2.msra.mxu0 0.0
    %728 = vmatprep.subr.mxu0 0.0
    %729 = vmatpush2.msra.mxu0 0.0
    %730 = vmatprep.subr.mxu0 0.0
    %731 = vmatpush2.msra.mxu0 0.0
    %732 = vmatprep.subr.mxu0 0.0
    %733 = vmatpush2.msra.mxu0 0.0
    %734 = vmatprep.subr.mxu0 0.0
    %735 = vmatpush2.msra.mxu0 0.0
    %736 = vmatprep.subr.mxu0 0.0
    %737 = vmatpush2.msra.mxu0 0.0
    %738 = vmatprep.subr.mxu0 0.0
    %739 = vmatpush2.msra.mxu0 0.0
    %740 = vmatprep.subr.mxu0 0.0
    %741 = vmatpush2.msra.mxu0 0.0
    %742 = vmatprep.subr.mxu0 0.0
    %743 = vmatpush2.msra.mxu0 0.0
    %744 = vmatprep.subr.mxu0 0.0
    %745 = vmatpush2.msra.mxu0 0.0
    %746 = vmatprep.subr.mxu0 0.0
    %747 = vmatpush2.msra.mxu0 0.0
    %748 = vmatprep.subr.mxu0 0.0
    %749 = vmatpush2.msra.mxu0 0.0
    %750 = vmatprep.subr.mxu0 0.0
    %751 = vmatpush2.msra.mxu0 0.0
    %752 = vmatprep.subr.mxu0 0.0
    %753 = vmatpush2.msra.mxu0 0.0
    %754 = vmatprep.mubr.f32.mxu0 0.0
    %755 = vmatmul.mubr.f32.gmra.mxu0 %v522
    %v756 = vpop.f32.mrf.mxu0
    %v757 = vadd.f32 0.0, %v756
    %v758 = vpop.f32.mrf.mxu0
    %759 = vdwg.mxu0
    %v760 = vadd.f32 %v689, %v757
    %v761 = vxor.u32 %v760, 2147483648
    %v762 = vmul.f32 %v761, 1.442695
    %v763 = vpow.pop %v762
    %v764 = vadd.f32 %v763, 1.0
    %v765 = vrcp.pop %v764
    %v766 = vmul.f32 1.0, %v765
    %v767 = vtanh.pop %v760
    %v768 = vmul.f32 %v766, %v506
    %770 = vrot.lane.b32.xlu0 %v767, 64
    %v771 = vpop.permute.xlu0 %770
    %v773 = vmul.f32 %v766, %v771
    %775 = vrot.lane.b32.xlu0 %v773, 32
    %v776 = vpop.permute.xlu0 %775
    %v778 = vadd.f32 %v768, %v776
    %v779 = vtanh.pop %v778
    %781 = vrot.lane.b32.xlu0 %v779, 64
    %v782 = vpop.permute.xlu0 %781
    %v784 = vmul.f32 %v766, %v782
    %786 = vrot.lane.b32.xlu0 %v784, 32
    %v787 = vpop.permute.xlu0 %786
    %v788 = vsel %vm227, %v787, 0
    %790 = vmatprep.subr.mxu0 0.0
    %791 = vmatpush1.msra.mxu0 0.0
    %792 = vmatprep.subr.mxu0 0.0
    %793 = vmatpush1.msra.mxu0 0.0
    %794 = vmatprep.subr.mxu0 0.0
    %795 = vmatpush1.msra.mxu0 0.0
    %796 = vmatprep.subr.mxu0 0.0
    %797 = vmatpush1.msra.mxu0 0.0
    %798 = vmatprep.subr.mxu0 0.0
    %799 = vmatpush1.msra.mxu0 0.0
    %800 = vmatprep.subr.mxu0 0.0
    %801 = vmatpush1.msra.mxu0 0.0
    %802 = vmatprep.subr.mxu0 0.0
    %803 = vmatpush1.msra.mxu0 0.0
    %804 = vmatprep.subr.mxu0 0.0
    %805 = vmatpush1.msra.mxu0 0.0
    %806 = vmatprep.subr.mxu0 0.0
    %807 = vmatpush1.msra.mxu0 0.0
    %808 = vmatprep.subr.mxu0 0.0
    %809 = vmatpush1.msra.mxu0 0.0
    %810 = vmatprep.subr.mxu0 0.0
    %811 = vmatpush1.msra.mxu0 0.0
    %812 = vmatprep.subr.mxu0 0.0
    %813 = vmatpush1.msra.mxu0 0.0
    %814 = vmatprep.subr.mxu0 0.0
    %815 = vmatpush1.msra.mxu0 %v412
    %816 = vmatprep.subr.mxu0 0.0
    %817 = vmatpush1.msra.mxu0 %v411
    %818 = vmatprep.subr.mxu0 0.0
    %819 = vmatpush1.msra.mxu0 %v410
    %820 = vmatprep.subr.mxu0 0.0
    %821 = vmatpush1.msra.mxu0 %v409
    %822 = vmatprep.subr.mxu0 0.0
    %823 = vmatpush2.msra.mxu0 0.0
    %824 = vmatprep.subr.mxu0 0.0
    %825 = vmatpush2.msra.mxu0 0.0
    %826 = vmatprep.subr.mxu0 0.0
    %827 = vmatpush2.msra.mxu0 0.0
    %828 = vmatprep.subr.mxu0 0.0
    %829 = vmatpush2.msra.mxu0 0.0
    %830 = vmatprep.subr.mxu0 0.0
    %831 = vmatpush2.msra.mxu0 0.0
    %832 = vmatprep.subr.mxu0 0.0
    %833 = vmatpush2.msra.mxu0 0.0
    %834 = vmatprep.subr.mxu0 0.0
    %835 = vmatpush2.msra.mxu0 0.0
    %836 = vmatprep.subr.mxu0 0.0
    %837 = vmatpush2.msra.mxu0 0.0
    %838 = vmatprep.subr.mxu0 0.0
    %839 = vmatpush2.msra.mxu0 0.0
    %840 = vmatprep.subr.mxu0 0.0
    %841 = vmatpush2.msra.mxu0 0.0
    %842 = vmatprep.subr.mxu0 0.0
    %843 = vmatpush2.msra.mxu0 0.0
    %844 = vmatprep.subr.mxu0 0.0
    %845 = vmatpush2.msra.mxu0 0.0
    %846 = vmatprep.subr.mxu0 0.0
    %847 = vmatpush2.msra.mxu0 0.0
    %848 = vmatprep.subr.mxu0 0.0
    %849 = vmatpush2.msra.mxu0 0.0
    %850 = vmatprep.subr.mxu0 0.0
    %851 = vmatpush2.msra.mxu0 0.0
    %852 = vmatprep.subr.mxu0 0.0
    %853 = vmatpush2.msra.mxu0 0.0
    %854 = vmatprep.mubr.f32.mxu0 0.0
    %855 = vmatmul.mubr.f32.gmra.mxu0 %v788
    %v856 = vpop.f32.mrf.mxu0
    %v857 = vadd.f32 %v517, %v856
    %v858 = vpop.f32.mrf.mxu0
    %859 = vdwg.mxu0
    %861 = vrot.lane.b32.xlu0 %v688, 32
    %v862 = vpop.permute.xlu0 %861
    %v863 = vsel %vm227, %v862, 0
    %865 = vmatprep.subr.mxu0 0.0
    %866 = vmatpush1.msra.mxu0 0.0
    %867 = vmatprep.subr.mxu0 0.0
    %868 = vmatpush1.msra.mxu0 0.0
    %869 = vmatprep.subr.mxu0 0.0
    %870 = vmatpush1.msra.mxu0 0.0
    %871 = vmatprep.subr.mxu0 0.0
    %872 = vmatpush1.msra.mxu0 0.0
    %873 = vmatprep.subr.mxu0 0.0
    %874 = vmatpush1.msra.mxu0 0.0
    %875 = vmatprep.subr.mxu0 0.0
    %876 = vmatpush1.msra.mxu0 0.0
    %877 = vmatprep.subr.mxu0 0.0
    %878 = vmatpush1.msra.mxu0 0.0
    %879 = vmatprep.subr.mxu0 0.0
    %880 = vmatpush1.msra.mxu0 0.0
    %881 = vmatprep.subr.mxu0 0.0
    %882 = vmatpush1.msra.mxu0 0.0
    %883 = vmatprep.subr.mxu0 0.0
    %884 = vmatpush1.msra.mxu0 0.0
    %885 = vmatprep.subr.mxu0 0.0
    %886 = vmatpush1.msra.mxu0 0.0
    %887 = vmatprep.subr.mxu0 0.0
    %888 = vmatpush1.msra.mxu0 0.0
    %889 = vmatprep.subr.mxu0 0.0
    %890 = vmatpush1.msra.mxu0 %v408
    %891 = vmatprep.subr.mxu0 0.0
    %892 = vmatpush1.msra.mxu0 %v407
    %893 = vmatprep.subr.mxu0 0.0
    %894 = vmatpush1.msra.mxu0 %v406
    %895 = vmatprep.subr.mxu0 0.0
    %896 = vmatpush1.msra.mxu0 %v405
    %897 = vmatprep.subr.mxu0 0.0
    %898 = vmatpush2.msra.mxu0 0.0
    %899 = vmatprep.subr.mxu0 0.0
    %900 = vmatpush2.msra.mxu0 0.0
    %901 = vmatprep.subr.mxu0 0.0
    %902 = vmatpush2.msra.mxu0 0.0
    %903 = vmatprep.subr.mxu0 0.0
    %904 = vmatpush2.msra.mxu0 0.0
    %905 = vmatprep.subr.mxu0 0.0
    %906 = vmatpush2.msra.mxu0 0.0
    %907 = vmatprep.subr.mxu0 0.0
    %908 = vmatpush2.msra.mxu0 0.0
    %909 = vmatprep.subr.mxu0 0.0
    %910 = vmatpush2.msra.mxu0 0.0
    %911 = vmatprep.subr.mxu0 0.0
    %912 = vmatpush2.msra.mxu0 0.0
    %913 = vmatprep.subr.mxu0 0.0
    %914 = vmatpush2.msra.mxu0 0.0
    %915 = vmatprep.subr.mxu0 0.0
    %916 = vmatpush2.msra.mxu0 0.0
    %917 = vmatprep.subr.mxu0 0.0
    %918 = vmatpush2.msra.mxu0 0.0
    %919 = vmatprep.subr.mxu0 0.0
    %920 = vmatpush2.msra.mxu0 0.0
    %921 = vmatprep.subr.mxu0 0.0
    %922 = vmatpush2.msra.mxu0 0.0
    %923 = vmatprep.subr.mxu0 0.0
    %924 = vmatpush2.msra.mxu0 0.0
    %925 = vmatprep.subr.mxu0 0.0
    %926 = vmatpush2.msra.mxu0 0.0
    %927 = vmatprep.subr.mxu0 0.0
    %928 = vmatpush2.msra.mxu0 0.0
    %929 = vmatprep.mubr.f32.mxu0 0.0
    %930 = vmatmul.mubr.f32.gmra.mxu0 %v863
    %v931 = vpop.f32.mrf.mxu0
    %v932 = vadd.f32 0.0, %v931
    %v933 = vpop.f32.mrf.mxu0
    %934 = vdwg.mxu0
    %v935 = vadd.f32 %v857, %v932
    %v936 = vxor.u32 %v935, 2147483648
    %v937 = vmul.f32 %v936, 1.442695
    %v938 = vpow.pop %v937
    %v939 = vadd.f32 %v938, 1.0
    %v940 = vrcp.pop %v939
    %v941 = vmul.f32 1.0, %v940
    %v942 = vtanh.pop %v935
    %v943 = vmul.f32 %v941, %v682
    %945 = vrot.lane.b32.xlu0 %v942, 64
    %v946 = vpop.permute.xlu0 %945
    %v948 = vmul.f32 %v941, %v946
    %950 = vrot.lane.b32.xlu0 %v948, 32
    %v951 = vpop.permute.xlu0 %950
    %v953 = vadd.f32 %v943, %v951
    %v954 = vtanh.pop %v953
    %956 = vrot.lane.b32.xlu0 %v954, 64
    %v957 = vpop.permute.xlu0 %956
    %v959 = vmul.f32 %v941, %v957
    %v960 = vld [vmem:[#allocation2 + $0x10] sm:$0xff]
    %961 = vmatprep.subr.mxu0 0.0
    %962 = vmatpush1.msra.mxu0 0.0
    %963 = vmatprep.subr.mxu0 0.0
    %964 = vmatpush1.msra.mxu0 0.0
    %965 = vmatprep.subr.mxu0 0.0
    %966 = vmatpush1.msra.mxu0 0.0
    %967 = vmatprep.subr.mxu0 0.0
    %968 = vmatpush1.msra.mxu0 0.0
    %969 = vmatprep.subr.mxu0 0.0
    %970 = vmatpush1.msra.mxu0 0.0
    %971 = vmatprep.subr.mxu0 0.0
    %972 = vmatpush1.msra.mxu0 0.0
    %973 = vmatprep.subr.mxu0 0.0
    %974 = vmatpush1.msra.mxu0 0.0
    %975 = vmatprep.subr.mxu0 0.0
    %976 = vmatpush1.msra.mxu0 0.0
    %977 = vmatprep.subr.mxu0 0.0
    %978 = vmatpush1.msra.mxu0 0.0
    %979 = vmatprep.subr.mxu0 0.0
    %980 = vmatpush1.msra.mxu0 0.0
    %981 = vmatprep.subr.mxu0 0.0
    %982 = vmatpush1.msra.mxu0 0.0
    %983 = vmatprep.subr.mxu0 0.0
    %984 = vmatpush1.msra.mxu0 0.0
    %985 = vmatprep.subr.mxu0 0.0
    %986 = vmatpush1.msra.mxu0 %v404
    %987 = vmatprep.subr.mxu0 0.0
    %988 = vmatpush1.msra.mxu0 %v403
    %989 = vmatprep.subr.mxu0 0.0
    %990 = vmatpush1.msra.mxu0 %v402
    %991 = vmatprep.subr.mxu0 0.0
    %992 = vmatpush1.msra.mxu0 %v401
    %993 = vmatprep.subr.mxu0 0.0
    %994 = vmatpush2.msra.mxu0 0.0
    %995 = vmatprep.subr.mxu0 0.0
    %996 = vmatpush2.msra.mxu0 0.0
    %997 = vmatprep.subr.mxu0 0.0
    %998 = vmatpush2.msra.mxu0 0.0
    %999 = vmatprep.subr.mxu0 0.0
    %1000 = vmatpush2.msra.mxu0 0.0
    %1001 = vmatprep.subr.mxu0 0.0
    %1002 = vmatpush2.msra.mxu0 0.0
    %1003 = vmatprep.subr.mxu0 0.0
    %1004 = vmatpush2.msra.mxu0 0.0
    %1005 = vmatprep.subr.mxu0 0.0
    %1006 = vmatpush2.msra.mxu0 0.0
    %1007 = vmatprep.subr.mxu0 0.0
    %1008 = vmatpush2.msra.mxu0 0.0
    %1009 = vmatprep.subr.mxu0 0.0
    %1010 = vmatpush2.msra.mxu0 0.0
    %1011 = vmatprep.subr.mxu0 0.0
    %1012 = vmatpush2.msra.mxu0 0.0
    %1013 = vmatprep.subr.mxu0 0.0
    %1014 = vmatpush2.msra.mxu0 0.0
    %1015 = vmatprep.subr.mxu0 0.0
    %1016 = vmatpush2.msra.mxu0 0.0
    %1017 = vmatprep.subr.mxu0 0.0
    %1018 = vmatpush2.msra.mxu0 0.0
    %1019 = vmatprep.subr.mxu0 0.0
    %1020 = vmatpush2.msra.mxu0 0.0
    %1021 = vmatprep.subr.mxu0 0.0
    %1022 = vmatpush2.msra.mxu0 0.0
    %1023 = vmatprep.subr.mxu0 0.0
    %1024 = vmatpush2.msra.mxu0 0.0
    %1025 = vmatprep.mubr.f32.mxu0 0.0
    %1026 = vmatmul.mubr.f32.gmra.mxu0 %v788
    %v1027 = vpop.f32.mrf.mxu0
    %v1028 = vadd.f32 0.0, %v1027
    %v1029 = vpop.f32.mrf.mxu0
    %1030 = vdwg.mxu0
    %v1031 = vadd.f32 %v960, %v1028
    %v1032 = vxor.u32 %v1031, 2147483648
    %v1033 = vmul.f32 %v1032, 1.442695
    %v1034 = vpow.pop %v1033
    %v1035 = vadd.f32 %v1034, 1.0
    %v1036 = vrcp.pop %v1035
    %v1037 = vmul.f32 1.0, %v1036
    %v1038 = vtanh.pop %v1031
    %v1039 = vmul.f32 %v1037, %v778
    %1041 = vrot.lane.b32.xlu0 %v1038, 64
    %v1042 = vpop.permute.xlu0 %1041
    %v1044 = vmul.f32 %v1037, %v1042
    %1046 = vrot.lane.b32.xlu0 %v1044, 32
    %v1047 = vpop.permute.xlu0 %1046
    %v1049 = vadd.f32 %v1039, %v1047
    %v1050 = vtanh.pop %v1049
    %1052 = vrot.lane.b32.xlu0 %v1050, 64
    %v1053 = vpop.permute.xlu0 %1052
    %v1055 = vmul.f32 %v1037, %v1053
    %1057 = vrot.lane.b32.xlu0 %v1055, 32
    %v1058 = vpop.permute.xlu0 %1057
    %v1059 = vsel %vm227, %v1058, 0
    %1061 = vmatprep.subr.mxu0 0.0
    %1062 = vmatpush1.msra.mxu0 0.0
    %1063 = vmatprep.subr.mxu0 0.0
    %1064 = vmatpush1.msra.mxu0 0.0
    %1065 = vmatprep.subr.mxu0 0.0
    %1066 = vmatpush1.msra.mxu0 0.0
    %1067 = vmatprep.subr.mxu0 0.0
    %1068 = vmatpush1.msra.mxu0 0.0
    %1069 = vmatprep.subr.mxu0 0.0
    %1070 = vmatpush1.msra.mxu0 0.0
    %1071 = vmatprep.subr.mxu0 0.0
    %1072 = vmatpush1.msra.mxu0 0.0
    %1073 = vmatprep.subr.mxu0 0.0
    %1074 = vmatpush1.msra.mxu0 0.0
    %1075 = vmatprep.subr.mxu0 0.0
    %1076 = vmatpush1.msra.mxu0 0.0
    %1077 = vmatprep.subr.mxu0 0.0
    %1078 = vmatpush1.msra.mxu0 0.0
    %1079 = vmatprep.subr.mxu0 0.0
    %1080 = vmatpush1.msra.mxu0 0.0
    %1081 = vmatprep.subr.mxu0 0.0
    %1082 = vmatpush1.msra.mxu0 0.0
    %1083 = vmatprep.subr.mxu0 0.0
    %1084 = vmatpush1.msra.mxu0 0.0
    %1085 = vmatprep.subr.mxu0 0.0
    %1086 = vmatpush1.msra.mxu0 %v412
    %1087 = vmatprep.subr.mxu0 0.0
    %1088 = vmatpush1.msra.mxu0 %v411
    %1089 = vmatprep.subr.mxu0 0.0
    %1090 = vmatpush1.msra.mxu0 %v410
    %1091 = vmatprep.subr.mxu0 0.0
    %1092 = vmatpush1.msra.mxu0 %v409
    %1093 = vmatprep.subr.mxu0 0.0
    %1094 = vmatpush2.msra.mxu0 0.0
    %1095 = vmatprep.subr.mxu0 0.0
    %1096 = vmatpush2.msra.mxu0 0.0
    %1097 = vmatprep.subr.mxu0 0.0
    %1098 = vmatpush2.msra.mxu0 0.0
    %1099 = vmatprep.subr.mxu0 0.0
    %1100 = vmatpush2.msra.mxu0 0.0
    %1101 = vmatprep.subr.mxu0 0.0
    %1102 = vmatpush2.msra.mxu0 0.0
    %1103 = vmatprep.subr.mxu0 0.0
    %1104 = vmatpush2.msra.mxu0 0.0
    %1105 = vmatprep.subr.mxu0 0.0
    %1106 = vmatpush2.msra.mxu0 0.0
    %1107 = vmatprep.subr.mxu0 0.0
    %1108 = vmatpush2.msra.mxu0 0.0
    %1109 = vmatprep.subr.mxu0 0.0
    %1110 = vmatpush2.msra.mxu0 0.0
    %1111 = vmatprep.subr.mxu0 0.0
    %1112 = vmatpush2.msra.mxu0 0.0
    %1113 = vmatprep.subr.mxu0 0.0
    %1114 = vmatpush2.msra.mxu0 0.0
    %1115 = vmatprep.subr.mxu0 0.0
    %1116 = vmatpush2.msra.mxu0 0.0
    %1117 = vmatprep.subr.mxu0 0.0
    %1118 = vmatpush2.msra.mxu0 0.0
    %1119 = vmatprep.subr.mxu0 0.0
    %1120 = vmatpush2.msra.mxu0 0.0
    %1121 = vmatprep.subr.mxu0 0.0
    %1122 = vmatpush2.msra.mxu0 0.0
    %1123 = vmatprep.subr.mxu0 0.0
    %1124 = vmatpush2.msra.mxu0 0.0
    %1125 = vmatprep.mubr.f32.mxu0 0.0
    %1126 = vmatmul.mubr.f32.gmra.mxu0 %v1059
    %v1127 = vpop.f32.mrf.mxu0
    %v1128 = vadd.f32 %v517, %v1127
    %v1129 = vpop.f32.mrf.mxu0
    %1130 = vdwg.mxu0
    %1132 = vrot.lane.b32.xlu0 %v959, 32
    %v1133 = vpop.permute.xlu0 %1132
    %v1134 = vsel %vm227, %v1133, 0
    %1136 = vmatprep.subr.mxu0 0.0
    %1137 = vmatpush1.msra.mxu0 0.0
    %1138 = vmatprep.subr.mxu0 0.0
    %1139 = vmatpush1.msra.mxu0 0.0
    %1140 = vmatprep.subr.mxu0 0.0
    %1141 = vmatpush1.msra.mxu0 0.0
    %1142 = vmatprep.subr.mxu0 0.0
    %1143 = vmatpush1.msra.mxu0 0.0
    %1144 = vmatprep.subr.mxu0 0.0
    %1145 = vmatpush1.msra.mxu0 0.0
    %1146 = vmatprep.subr.mxu0 0.0
    %1147 = vmatpush1.msra.mxu0 0.0
    %1148 = vmatprep.subr.mxu0 0.0
    %1149 = vmatpush1.msra.mxu0 0.0
    %1150 = vmatprep.subr.mxu0 0.0
    %1151 = vmatpush1.msra.mxu0 0.0
    %1152 = vmatprep.subr.mxu0 0.0
    %1153 = vmatpush1.msra.mxu0 0.0
    %1154 = vmatprep.subr.mxu0 0.0
    %1155 = vmatpush1.msra.mxu0 0.0
    %1156 = vmatprep.subr.mxu0 0.0
    %1157 = vmatpush1.msra.mxu0 0.0
    %1158 = vmatprep.subr.mxu0 0.0
    %1159 = vmatpush1.msra.mxu0 0.0
    %1160 = vmatprep.subr.mxu0 0.0
    %1161 = vmatpush1.msra.mxu0 %v408
    %1162 = vmatprep.subr.mxu0 0.0
    %1163 = vmatpush1.msra.mxu0 %v407
    %1164 = vmatprep.subr.mxu0 0.0
    %1165 = vmatpush1.msra.mxu0 %v406
    %1166 = vmatprep.subr.mxu0 0.0
    %1167 = vmatpush1.msra.mxu0 %v405
    %1168 = vmatprep.subr.mxu0 0.0
    %1169 = vmatpush2.msra.mxu0 0.0
    %1170 = vmatprep.subr.mxu0 0.0
    %1171 = vmatpush2.msra.mxu0 0.0
    %1172 = vmatprep.subr.mxu0 0.0
    %1173 = vmatpush2.msra.mxu0 0.0
    %1174 = vmatprep.subr.mxu0 0.0
    %1175 = vmatpush2.msra.mxu0 0.0
    %1176 = vmatprep.subr.mxu0 0.0
    %1177 = vmatpush2.msra.mxu0 0.0
    %1178 = vmatprep.subr.mxu0 0.0
    %1179 = vmatpush2.msra.mxu0 0.0
    %1180 = vmatprep.subr.mxu0 0.0
    %1181 = vmatpush2.msra.mxu0 0.0
    %1182 = vmatprep.subr.mxu0 0.0
    %1183 = vmatpush2.msra.mxu0 0.0
    %1184 = vmatprep.subr.mxu0 0.0
    %1185 = vmatpush2.msra.mxu0 0.0
    %1186 = vmatprep.subr.mxu0 0.0
    %1187 = vmatpush2.msra.mxu0 0.0
    %1188 = vmatprep.subr.mxu0 0.0
    %1189 = vmatpush2.msra.mxu0 0.0
    %1190 = vmatprep.subr.mxu0 0.0
    %1191 = vmatpush2.msra.mxu0 0.0
    %1192 = vmatprep.subr.mxu0 0.0
    %1193 = vmatpush2.msra.mxu0 0.0
    %1194 = vmatprep.subr.mxu0 0.0
    %1195 = vmatpush2.msra.mxu0 0.0
    %1196 = vmatprep.subr.mxu0 0.0
    %1197 = vmatpush2.msra.mxu0 0.0
    %1198 = vmatprep.subr.mxu0 0.0
    %1199 = vmatpush2.msra.mxu0 0.0
    %1200 = vmatprep.mubr.f32.mxu0 0.0
    %1201 = vmatmul.mubr.f32.gmra.mxu0 %v1134
    %v1202 = vpop.f32.mrf.mxu0
    %v1203 = vadd.f32 0.0, %v1202
    %v1204 = vpop.f32.mrf.mxu0
    %1205 = vdwg.mxu0
    %v1206 = vadd.f32 %v1128, %v1203
    %v1207 = vxor.u32 %v1206, 2147483648
    %v1208 = vmul.f32 %v1207, 1.442695
    %v1209 = vpow.pop %v1208
    %v1210 = vadd.f32 %v1209, 1.0
    %v1211 = vrcp.pop %v1210
    %v1212 = vmul.f32 1.0, %v1211
    %v1213 = vtanh.pop %v1206
    %v1214 = vmul.f32 %v1212, %v953
    %1216 = vrot.lane.b32.xlu0 %v1213, 64
    %v1217 = vpop.permute.xlu0 %1216
    %v1219 = vmul.f32 %v1212, %v1217
    %1221 = vrot.lane.b32.xlu0 %v1219, 32
    %v1222 = vpop.permute.xlu0 %1221
    %v1224 = vadd.f32 %v1214, %v1222
    %v1225 = vtanh.pop %v1224
    %1227 = vrot.lane.b32.xlu0 %v1225, 64
    %v1228 = vpop.permute.xlu0 %1227
    %v1230 = vmul.f32 %v1212, %v1228
    %v1231 = vld [vmem:[#allocation2 + $0x18] sm:$0xff]
    %1232 = vmatprep.subr.mxu0 0.0
    %1233 = vmatpush1.msra.mxu0 0.0
    %1234 = vmatprep.subr.mxu0 0.0
    %1235 = vmatpush1.msra.mxu0 0.0
    %1236 = vmatprep.subr.mxu0 0.0
    %1237 = vmatpush1.msra.mxu0 0.0
    %1238 = vmatprep.subr.mxu0 0.0
    %1239 = vmatpush1.msra.mxu0 0.0
    %1240 = vmatprep.subr.mxu0 0.0
    %1241 = vmatpush1.msra.mxu0 0.0
    %1242 = vmatprep.subr.mxu0 0.0
    %1243 = vmatpush1.msra.mxu0 0.0
    %1244 = vmatprep.subr.mxu0 0.0
    %1245 = vmatpush1.msra.mxu0 0.0
    %1246 = vmatprep.subr.mxu0 0.0
    %1247 = vmatpush1.msra.mxu0 0.0
    %1248 = vmatprep.subr.mxu0 0.0
    %1249 = vmatpush1.msra.mxu0 0.0
    %1250 = vmatprep.subr.mxu0 0.0
    %1251 = vmatpush1.msra.mxu0 0.0
    %1252 = vmatprep.subr.mxu0 0.0
    %1253 = vmatpush1.msra.mxu0 0.0
    %1254 = vmatprep.subr.mxu0 0.0
    %1255 = vmatpush1.msra.mxu0 0.0
    %1256 = vmatprep.subr.mxu0 0.0
    %1257 = vmatpush1.msra.mxu0 %v404
    %1258 = vmatprep.subr.mxu0 0.0
    %1259 = vmatpush1.msra.mxu0 %v403
    %1260 = vmatprep.subr.mxu0 0.0
    %1261 = vmatpush1.msra.mxu0 %v402
    %1262 = vmatprep.subr.mxu0 0.0
    %1263 = vmatpush1.msra.mxu0 %v401
    %1264 = vmatprep.subr.mxu0 0.0
    %1265 = vmatpush2.msra.mxu0 0.0
    %1266 = vmatprep.subr.mxu0 0.0
    %1267 = vmatpush2.msra.mxu0 0.0
    %1268 = vmatprep.subr.mxu0 0.0
    %1269 = vmatpush2.msra.mxu0 0.0
    %1270 = vmatprep.subr.mxu0 0.0
    %1271 = vmatpush2.msra.mxu0 0.0
    %1272 = vmatprep.subr.mxu0 0.0
    %1273 = vmatpush2.msra.mxu0 0.0
    %1274 = vmatprep.subr.mxu0 0.0
    %1275 = vmatpush2.msra.mxu0 0.0
    %1276 = vmatprep.subr.mxu0 0.0
    %1277 = vmatpush2.msra.mxu0 0.0
    %1278 = vmatprep.subr.mxu0 0.0
    %1279 = vmatpush2.msra.mxu0 0.0
    %1280 = vmatprep.subr.mxu0 0.0
    %1281 = vmatpush2.msra.mxu0 0.0
    %1282 = vmatprep.subr.mxu0 0.0
    %1283 = vmatpush2.msra.mxu0 0.0
    %1284 = vmatprep.subr.mxu0 0.0
    %1285 = vmatpush2.msra.mxu0 0.0
    %1286 = vmatprep.subr.mxu0 0.0
    %1287 = vmatpush2.msra.mxu0 0.0
    %1288 = vmatprep.subr.mxu0 0.0
    %1289 = vmatpush2.msra.mxu0 0.0
    %1290 = vmatprep.subr.mxu0 0.0
    %1291 = vmatpush2.msra.mxu0 0.0
    %1292 = vmatprep.subr.mxu0 0.0
    %1293 = vmatpush2.msra.mxu0 0.0
    %1294 = vmatprep.subr.mxu0 0.0
    %1295 = vmatpush2.msra.mxu0 0.0
    %1296 = vmatprep.mubr.f32.mxu0 0.0
    %1297 = vmatmul.mubr.f32.gmra.mxu0 %v1059
    %v1298 = vpop.f32.mrf.mxu0
    %v1299 = vadd.f32 0.0, %v1298
    %v1300 = vpop.f32.mrf.mxu0
    %1301 = vdwg.mxu0
    %v1302 = vadd.f32 %v1231, %v1299
    %v1303 = vxor.u32 %v1302, 2147483648
    %v1304 = vmul.f32 %v1303, 1.442695
    %v1305 = vpow.pop %v1304
    %v1306 = vadd.f32 %v1305, 1.0
    %v1307 = vrcp.pop %v1306
    %v1308 = vmul.f32 1.0, %v1307
    %v1309 = vtanh.pop %v1302
    %v1310 = vmul.f32 %v1308, %v1049
    %1312 = vrot.lane.b32.xlu0 %v1309, 64
    %v1313 = vpop.permute.xlu0 %1312
    %v1315 = vmul.f32 %v1308, %v1313
    %1317 = vrot.lane.b32.xlu0 %v1315, 32
    %v1318 = vpop.permute.xlu0 %1317
    %v1320 = vadd.f32 %v1310, %v1318
    %v1321 = vtanh.pop %v1320
    %1323 = vrot.lane.b32.xlu0 %v1321, 64
    %v1324 = vpop.permute.xlu0 %1323
    %v1326 = vmul.f32 %v1308, %v1324
    %1328 = vrot.lane.b32.xlu0 %v1326, 32
    %v1329 = vpop.permute.xlu0 %1328
    %v1330 = vsel %vm227, %v1329, 0
    %1332 = vmatprep.subr.mxu0 0.0
    %1333 = vmatpush1.msra.mxu0 0.0
    %1334 = vmatprep.subr.mxu0 0.0
    %1335 = vmatpush1.msra.mxu0 0.0
    %1336 = vmatprep.subr.mxu0 0.0
    %1337 = vmatpush1.msra.mxu0 0.0
    %1338 = vmatprep.subr.mxu0 0.0
    %1339 = vmatpush1.msra.mxu0 0.0
    %1340 = vmatprep.subr.mxu0 0.0
    %1341 = vmatpush1.msra.mxu0 0.0
    %1342 = vmatprep.subr.mxu0 0.0
    %1343 = vmatpush1.msra.mxu0 0.0
    %1344 = vmatprep.subr.mxu0 0.0
    %1345 = vmatpush1.msra.mxu0 0.0
    %1346 = vmatprep.subr.mxu0 0.0
    %1347 = vmatpush1.msra.mxu0 0.0
    %1348 = vmatprep.subr.mxu0 0.0
    %1349 = vmatpush1.msra.mxu0 0.0
    %1350 = vmatprep.subr.mxu0 0.0
    %1351 = vmatpush1.msra.mxu0 0.0
    %1352 = vmatprep.subr.mxu0 0.0
    %1353 = vmatpush1.msra.mxu0 0.0
    %1354 = vmatprep.subr.mxu0 0.0
    %1355 = vmatpush1.msra.mxu0 0.0
    %1356 = vmatprep.subr.mxu0 0.0
    %1357 = vmatpush1.msra.mxu0 %v412
    %1358 = vmatprep.subr.mxu0 0.0
    %1359 = vmatpush1.msra.mxu0 %v411
    %1360 = vmatprep.subr.mxu0 0.0
    %1361 = vmatpush1.msra.mxu0 %v410
    %1362 = vmatprep.subr.mxu0 0.0
    %1363 = vmatpush1.msra.mxu0 %v409
    %1364 = vmatprep.subr.mxu0 0.0
    %1365 = vmatpush2.msra.mxu0 0.0
    %1366 = vmatprep.subr.mxu0 0.0
    %1367 = vmatpush2.msra.mxu0 0.0
    %1368 = vmatprep.subr.mxu0 0.0
    %1369 = vmatpush2.msra.mxu0 0.0
    %1370 = vmatprep.subr.mxu0 0.0
    %1371 = vmatpush2.msra.mxu0 0.0
    %1372 = vmatprep.subr.mxu0 0.0
    %1373 = vmatpush2.msra.mxu0 0.0
    %1374 = vmatprep.subr.mxu0 0.0
    %1375 = vmatpush2.msra.mxu0 0.0
    %1376 = vmatprep.subr.mxu0 0.0
    %1377 = vmatpush2.msra.mxu0 0.0
    %1378 = vmatprep.subr.mxu0 0.0
    %1379 = vmatpush2.msra.mxu0 0.0
    %1380 = vmatprep.subr.mxu0 0.0
    %1381 = vmatpush2.msra.mxu0 0.0
    %1382 = vmatprep.subr.mxu0 0.0
    %1383 = vmatpush2.msra.mxu0 0.0
    %1384 = vmatprep.subr.mxu0 0.0
    %1385 = vmatpush2.msra.mxu0 0.0
    %1386 = vmatprep.subr.mxu0 0.0
    %1387 = vmatpush2.msra.mxu0 0.0
    %1388 = vmatprep.subr.mxu0 0.0
    %1389 = vmatpush2.msra.mxu0 0.0
    %1390 = vmatprep.subr.mxu0 0.0
    %1391 = vmatpush2.msra.mxu0 0.0
    %1392 = vmatprep.subr.mxu0 0.0
    %1393 = vmatpush2.msra.mxu0 0.0
    %1394 = vmatprep.subr.mxu0 0.0
    %1395 = vmatpush2.msra.mxu0 0.0
    %1396 = vmatprep.mubr.f32.mxu0 0.0
    %1397 = vmatmul.mubr.f32.gmra.mxu0 %v1330
    %v1398 = vpop.f32.mrf.mxu0
    %v1399 = vadd.f32 %v517, %v1398
    %v1400 = vpop.f32.mrf.mxu0
    %1401 = vdwg.mxu0
    %1403 = vrot.lane.b32.xlu0 %v1230, 32
    %v1404 = vpop.permute.xlu0 %1403
    %v1405 = vsel %vm227, %v1404, 0
    %1407 = vmatprep.subr.mxu0 0.0
    %1408 = vmatpush1.msra.mxu0 0.0
    %1409 = vmatprep.subr.mxu0 0.0
    %1410 = vmatpush1.msra.mxu0 0.0
    %1411 = vmatprep.subr.mxu0 0.0
    %1412 = vmatpush1.msra.mxu0 0.0
    %1413 = vmatprep.subr.mxu0 0.0
    %1414 = vmatpush1.msra.mxu0 0.0
    %1415 = vmatprep.subr.mxu0 0.0
    %1416 = vmatpush1.msra.mxu0 0.0
    %1417 = vmatprep.subr.mxu0 0.0
    %1418 = vmatpush1.msra.mxu0 0.0
    %1419 = vmatprep.subr.mxu0 0.0
    %1420 = vmatpush1.msra.mxu0 0.0
    %1421 = vmatprep.subr.mxu0 0.0
    %1422 = vmatpush1.msra.mxu0 0.0
    %1423 = vmatprep.subr.mxu0 0.0
    %1424 = vmatpush1.msra.mxu0 0.0
    %1425 = vmatprep.subr.mxu0 0.0
    %1426 = vmatpush1.msra.mxu0 0.0
    %1427 = vmatprep.subr.mxu0 0.0
    %1428 = vmatpush1.msra.mxu0 0.0
    %1429 = vmatprep.subr.mxu0 0.0
    %1430 = vmatpush1.msra.mxu0 0.0
    %1431 = vmatprep.subr.mxu0 0.0
    %1432 = vmatpush1.msra.mxu0 %v408
    %1433 = vmatprep.subr.mxu0 0.0
    %1434 = vmatpush1.msra.mxu0 %v407
    %1435 = vmatprep.subr.mxu0 0.0
    %1436 = vmatpush1.msra.mxu0 %v406
    %1437 = vmatprep.subr.mxu0 0.0
    %1438 = vmatpush1.msra.mxu0 %v405
    %1439 = vmatprep.subr.mxu0 0.0
    %1440 = vmatpush2.msra.mxu0 0.0
    %1441 = vmatprep.subr.mxu0 0.0
    %1442 = vmatpush2.msra.mxu0 0.0
    %1443 = vmatprep.subr.mxu0 0.0
    %1444 = vmatpush2.msra.mxu0 0.0
    %1445 = vmatprep.subr.mxu0 0.0
    %1446 = vmatpush2.msra.mxu0 0.0
    %1447 = vmatprep.subr.mxu0 0.0
    %1448 = vmatpush2.msra.mxu0 0.0
    %1449 = vmatprep.subr.mxu0 0.0
    %1450 = vmatpush2.msra.mxu0 0.0
    %1451 = vmatprep.subr.mxu0 0.0
    %1452 = vmatpush2.msra.mxu0 0.0
    %1453 = vmatprep.subr.mxu0 0.0
    %1454 = vmatpush2.msra.mxu0 0.0
    %1455 = vmatprep.subr.mxu0 0.0
    %1456 = vmatpush2.msra.mxu0 0.0
    %1457 = vmatprep.subr.mxu0 0.0
    %1458 = vmatpush2.msra.mxu0 0.0
    %1459 = vmatprep.subr.mxu0 0.0
    %1460 = vmatpush2.msra.mxu0 0.0
    %1461 = vmatprep.subr.mxu0 0.0
    %1462 = vmatpush2.msra.mxu0 0.0
    %1463 = vmatprep.subr.mxu0 0.0
    %1464 = vmatpush2.msra.mxu0 0.0
    %1465 = vmatprep.subr.mxu0 0.0
    %1466 = vmatpush2.msra.mxu0 0.0
    %1467 = vmatprep.subr.mxu0 0.0
    %1468 = vmatpush2.msra.mxu0 0.0
    %1469 = vmatprep.subr.mxu0 0.0
    %1470 = vmatpush2.msra.mxu0 0.0
    %1471 = vmatprep.mubr.f32.mxu0 0.0
    %1472 = vmatmul.mubr.f32.gmra.mxu0 %v1405
    %v1473 = vpop.f32.mrf.mxu0
    %v1474 = vadd.f32 0.0, %v1473
    %v1475 = vpop.f32.mrf.mxu0
    %1476 = vdwg.mxu0
    %v1477 = vadd.f32 %v1399, %v1474
    %v1478 = vxor.u32 %v1477, 2147483648
    %v1479 = vmul.f32 %v1478, 1.442695
    %v1480 = vpow.pop %v1479
    %v1481 = vadd.f32 %v1480, 1.0
    %v1482 = vrcp.pop %v1481
    %v1483 = vmul.f32 1.0, %v1482
    %v1484 = vtanh.pop %v1477
    %v1485 = vmul.f32 %v1483, %v1224
    %1487 = vrot.lane.b32.xlu0 %v1484, 64
    %v1488 = vpop.permute.xlu0 %1487
    %v1490 = vmul.f32 %v1483, %v1488
    %1492 = vrot.lane.b32.xlu0 %v1490, 32
    %v1493 = vpop.permute.xlu0 %1492
    %v1495 = vadd.f32 %v1485, %v1493
    %v1496 = vtanh.pop %v1495
    %1498 = vrot.lane.b32.xlu0 %v1496, 64
    %v1499 = vpop.permute.xlu0 %1498
    %v1501 = vmul.f32 %v1483, %v1499
    %v1502 = vld [vmem:[#allocation2 + $0x20] sm:$0xff]
    %1503 = vmatprep.subr.mxu0 0.0
    %1504 = vmatpush1.msra.mxu0 0.0
    %1505 = vmatprep.subr.mxu0 0.0
    %1506 = vmatpush1.msra.mxu0 0.0
    %1507 = vmatprep.subr.mxu0 0.0
    %1508 = vmatpush1.msra.mxu0 0.0
    %1509 = vmatprep.subr.mxu0 0.0
    %1510 = vmatpush1.msra.mxu0 0.0
    %1511 = vmatprep.subr.mxu0 0.0
    %1512 = vmatpush1.msra.mxu0 0.0
    %1513 = vmatprep.subr.mxu0 0.0
    %1514 = vmatpush1.msra.mxu0 0.0
    %1515 = vmatprep.subr.mxu0 0.0
    %1516 = vmatpush1.msra.mxu0 0.0
    %1517 = vmatprep.subr.mxu0 0.0
    %1518 = vmatpush1.msra.mxu0 0.0
    %1519 = vmatprep.subr.mxu0 0.0
    %1520 = vmatpush1.msra.mxu0 0.0
    %1521 = vmatprep.subr.mxu0 0.0
    %1522 = vmatpush1.msra.mxu0 0.0
    %1523 = vmatprep.subr.mxu0 0.0
    %1524 = vmatpush1.msra.mxu0 0.0
    %1525 = vmatprep.subr.mxu0 0.0
    %1526 = vmatpush1.msra.mxu0 0.0
    %1527 = vmatprep.subr.mxu0 0.0
    %1528 = vmatpush1.msra.mxu0 %v404
    %1529 = vmatprep.subr.mxu0 0.0
    %1530 = vmatpush1.msra.mxu0 %v403
    %1531 = vmatprep.subr.mxu0 0.0
    %1532 = vmatpush1.msra.mxu0 %v402
    %1533 = vmatprep.subr.mxu0 0.0
    %1534 = vmatpush1.msra.mxu0 %v401
    %1535 = vmatprep.subr.mxu0 0.0
    %1536 = vmatpush2.msra.mxu0 0.0
    %1537 = vmatprep.subr.mxu0 0.0
    %1538 = vmatpush2.msra.mxu0 0.0
    %1539 = vmatprep.subr.mxu0 0.0
    %1540 = vmatpush2.msra.mxu0 0.0
    %1541 = vmatprep.subr.mxu0 0.0
    %1542 = vmatpush2.msra.mxu0 0.0
    %1543 = vmatprep.subr.mxu0 0.0
    %1544 = vmatpush2.msra.mxu0 0.0
    %1545 = vmatprep.subr.mxu0 0.0
    %1546 = vmatpush2.msra.mxu0 0.0
    %1547 = vmatprep.subr.mxu0 0.0
    %1548 = vmatpush2.msra.mxu0 0.0
    %1549 = vmatprep.subr.mxu0 0.0
    %1550 = vmatpush2.msra.mxu0 0.0
    %1551 = vmatprep.subr.mxu0 0.0
    %1552 = vmatpush2.msra.mxu0 0.0
    %1553 = vmatprep.subr.mxu0 0.0
    %1554 = vmatpush2.msra.mxu0 0.0
    %1555 = vmatprep.subr.mxu0 0.0
    %1556 = vmatpush2.msra.mxu0 0.0
    %1557 = vmatprep.subr.mxu0 0.0
    %1558 = vmatpush2.msra.mxu0 0.0
    %1559 = vmatprep.subr.mxu0 0.0
    %1560 = vmatpush2.msra.mxu0 0.0
    %1561 = vmatprep.subr.mxu0 0.0
    %1562 = vmatpush2.msra.mxu0 0.0
    %1563 = vmatprep.subr.mxu0 0.0
    %1564 = vmatpush2.msra.mxu0 0.0
    %1565 = vmatprep.subr.mxu0 0.0
    %1566 = vmatpush2.msra.mxu0 0.0
    %1567 = vmatprep.mubr.f32.mxu0 0.0
    %1568 = vmatmul.mubr.f32.gmra.mxu0 %v1330
    %v1569 = vpop.f32.mrf.mxu0
    %v1570 = vadd.f32 0.0, %v1569
    %v1571 = vpop.f32.mrf.mxu0
    %1572 = vdwg.mxu0
    %v1573 = vadd.f32 %v1502, %v1570
    %v1574 = vxor.u32 %v1573, 2147483648
    %v1575 = vmul.f32 %v1574, 1.442695
    %v1576 = vpow.pop %v1575
    %v1577 = vadd.f32 %v1576, 1.0
    %v1578 = vrcp.pop %v1577
    %v1579 = vmul.f32 1.0, %v1578
    %v1580 = vtanh.pop %v1573
    %v1581 = vmul.f32 %v1579, %v1320
    %1583 = vrot.lane.b32.xlu0 %v1580, 64
    %v1584 = vpop.permute.xlu0 %1583
    %v1586 = vmul.f32 %v1579, %v1584
    %1588 = vrot.lane.b32.xlu0 %v1586, 32
    %v1589 = vpop.permute.xlu0 %1588
    %v1591 = vadd.f32 %v1581, %v1589
    %v1592 = vtanh.pop %v1591
    %1594 = vrot.lane.b32.xlu0 %v1592, 64
    %v1595 = vpop.permute.xlu0 %1594
    %v1597 = vmul.f32 %v1579, %v1595
    %1599 = vrot.lane.b32.xlu0 %v1597, 32
    %v1600 = vpop.permute.xlu0 %1599
    %v1601 = vsel %vm227, %v1600, 0
    %1603 = vmatprep.subr.mxu0 0.0
    %1604 = vmatpush1.msra.mxu0 0.0
    %1605 = vmatprep.subr.mxu0 0.0
    %1606 = vmatpush1.msra.mxu0 0.0
    %1607 = vmatprep.subr.mxu0 0.0
    %1608 = vmatpush1.msra.mxu0 0.0
    %1609 = vmatprep.subr.mxu0 0.0
    %1610 = vmatpush1.msra.mxu0 0.0
    %1611 = vmatprep.subr.mxu0 0.0
    %1612 = vmatpush1.msra.mxu0 0.0
    %1613 = vmatprep.subr.mxu0 0.0
    %1614 = vmatpush1.msra.mxu0 0.0
    %1615 = vmatprep.subr.mxu0 0.0
    %1616 = vmatpush1.msra.mxu0 0.0
    %1617 = vmatprep.subr.mxu0 0.0
    %1618 = vmatpush1.msra.mxu0 0.0
    %1619 = vmatprep.subr.mxu0 0.0
    %1620 = vmatpush1.msra.mxu0 0.0
    %1621 = vmatprep.subr.mxu0 0.0
    %1622 = vmatpush1.msra.mxu0 0.0
    %1623 = vmatprep.subr.mxu0 0.0
    %1624 = vmatpush1.msra.mxu0 0.0
    %1625 = vmatprep.subr.mxu0 0.0
    %1626 = vmatpush1.msra.mxu0 0.0
    %1627 = vmatprep.subr.mxu0 0.0
    %1628 = vmatpush1.msra.mxu0 %v412
    %1629 = vmatprep.subr.mxu0 0.0
    %1630 = vmatpush1.msra.mxu0 %v411
    %1631 = vmatprep.subr.mxu0 0.0
    %1632 = vmatpush1.msra.mxu0 %v410
    %1633 = vmatprep.subr.mxu0 0.0
    %1634 = vmatpush1.msra.mxu0 %v409
    %1635 = vmatprep.subr.mxu0 0.0
    %1636 = vmatpush2.msra.mxu0 0.0
    %1637 = vmatprep.subr.mxu0 0.0
    %1638 = vmatpush2.msra.mxu0 0.0
    %1639 = vmatprep.subr.mxu0 0.0
    %1640 = vmatpush2.msra.mxu0 0.0
    %1641 = vmatprep.subr.mxu0 0.0
    %1642 = vmatpush2.msra.mxu0 0.0
    %1643 = vmatprep.subr.mxu0 0.0
    %1644 = vmatpush2.msra.mxu0 0.0
    %1645 = vmatprep.subr.mxu0 0.0
    %1646 = vmatpush2.msra.mxu0 0.0
    %1647 = vmatprep.subr.mxu0 0.0
    %1648 = vmatpush2.msra.mxu0 0.0
    %1649 = vmatprep.subr.mxu0 0.0
    %1650 = vmatpush2.msra.mxu0 0.0
    %1651 = vmatprep.subr.mxu0 0.0
    %1652 = vmatpush2.msra.mxu0 0.0
    %1653 = vmatprep.subr.mxu0 0.0
    %1654 = vmatpush2.msra.mxu0 0.0
    %1655 = vmatprep.subr.mxu0 0.0
    %1656 = vmatpush2.msra.mxu0 0.0
    %1657 = vmatprep.subr.mxu0 0.0
    %1658 = vmatpush2.msra.mxu0 0.0
    %1659 = vmatprep.subr.mxu0 0.0
    %1660 = vmatpush2.msra.mxu0 0.0
    %1661 = vmatprep.subr.mxu0 0.0
    %1662 = vmatpush2.msra.mxu0 0.0
    %1663 = vmatprep.subr.mxu0 0.0
    %1664 = vmatpush2.msra.mxu0 0.0
    %1665 = vmatprep.subr.mxu0 0.0
    %1666 = vmatpush2.msra.mxu0 0.0
    %1667 = vmatprep.mubr.f32.mxu0 0.0
    %1668 = vmatmul.mubr.f32.gmra.mxu0 %v1601
    %v1669 = vpop.f32.mrf.mxu0
    %v1670 = vadd.f32 %v517, %v1669
    %v1671 = vpop.f32.mrf.mxu0
    %1672 = vdwg.mxu0
    %1674 = vrot.lane.b32.xlu0 %v1501, 32
    %v1675 = vpop.permute.xlu0 %1674
    %v1676 = vsel %vm227, %v1675, 0
    %1678 = vmatprep.subr.mxu0 0.0
    %1679 = vmatpush1.msra.mxu0 0.0
    %1680 = vmatprep.subr.mxu0 0.0
    %1681 = vmatpush1.msra.mxu0 0.0
    %1682 = vmatprep.subr.mxu0 0.0
    %1683 = vmatpush1.msra.mxu0 0.0
    %1684 = vmatprep.subr.mxu0 0.0
    %1685 = vmatpush1.msra.mxu0 0.0
    %1686 = vmatprep.subr.mxu0 0.0
    %1687 = vmatpush1.msra.mxu0 0.0
    %1688 = vmatprep.subr.mxu0 0.0
    %1689 = vmatpush1.msra.mxu0 0.0
    %1690 = vmatprep.subr.mxu0 0.0
    %1691 = vmatpush1.msra.mxu0 0.0
    %1692 = vmatprep.subr.mxu0 0.0
    %1693 = vmatpush1.msra.mxu0 0.0
    %1694 = vmatprep.subr.mxu0 0.0
    %1695 = vmatpush1.msra.mxu0 0.0
    %1696 = vmatprep.subr.mxu0 0.0
    %1697 = vmatpush1.msra.mxu0 0.0
    %1698 = vmatprep.subr.mxu0 0.0
    %1699 = vmatpush1.msra.mxu0 0.0
    %1700 = vmatprep.subr.mxu0 0.0
    %1701 = vmatpush1.msra.mxu0 0.0
    %1702 = vmatprep.subr.mxu0 0.0
    %1703 = vmatpush1.msra.mxu0 %v408
    %1704 = vmatprep.subr.mxu0 0.0
    %1705 = vmatpush1.msra.mxu0 %v407
    %1706 = vmatprep.subr.mxu0 0.0
    %1707 = vmatpush1.msra.mxu0 %v406
    %1708 = vmatprep.subr.mxu0 0.0
    %1709 = vmatpush1.msra.mxu0 %v405
    %1710 = vmatprep.subr.mxu0 0.0
    %1711 = vmatpush2.msra.mxu0 0.0
    %1712 = vmatprep.subr.mxu0 0.0
    %1713 = vmatpush2.msra.mxu0 0.0
    %1714 = vmatprep.subr.mxu0 0.0
    %1715 = vmatpush2.msra.mxu0 0.0
    %1716 = vmatprep.subr.mxu0 0.0
    %1717 = vmatpush2.msra.mxu0 0.0
    %1718 = vmatprep.subr.mxu0 0.0
    %1719 = vmatpush2.msra.mxu0 0.0
    %1720 = vmatprep.subr.mxu0 0.0
    %1721 = vmatpush2.msra.mxu0 0.0
    %1722 = vmatprep.subr.mxu0 0.0
    %1723 = vmatpush2.msra.mxu0 0.0
    %1724 = vmatprep.subr.mxu0 0.0
    %1725 = vmatpush2.msra.mxu0 0.0
    %1726 = vmatprep.subr.mxu0 0.0
    %1727 = vmatpush2.msra.mxu0 0.0
    %1728 = vmatprep.subr.mxu0 0.0
    %1729 = vmatpush2.msra.mxu0 0.0
    %1730 = vmatprep.subr.mxu0 0.0
    %1731 = vmatpush2.msra.mxu0 0.0
    %1732 = vmatprep.subr.mxu0 0.0
    %1733 = vmatpush2.msra.mxu0 0.0
    %1734 = vmatprep.subr.mxu0 0.0
    %1735 = vmatpush2.msra.mxu0 0.0
    %1736 = vmatprep.subr.mxu0 0.0
    %1737 = vmatpush2.msra.mxu0 0.0
    %1738 = vmatprep.subr.mxu0 0.0
    %1739 = vmatpush2.msra.mxu0 0.0
    %1740 = vmatprep.subr.mxu0 0.0
    %1741 = vmatpush2.msra.mxu0 0.0
    %1742 = vmatprep.mubr.f32.mxu0 0.0
    %1743 = vmatmul.mubr.f32.gmra.mxu0 %v1676
    %v1744 = vpop.f32.mrf.mxu0
    %v1745 = vadd.f32 0.0, %v1744
    %v1746 = vpop.f32.mrf.mxu0
    %1747 = vdwg.mxu0
    %v1748 = vadd.f32 %v1670, %v1745
    %v1749 = vxor.u32 %v1748, 2147483648
    %v1750 = vmul.f32 %v1749, 1.442695
    %v1751 = vpow.pop %v1750
    %v1752 = vadd.f32 %v1751, 1.0
    %v1753 = vrcp.pop %v1752
    %v1754 = vmul.f32 1.0, %v1753
    %v1755 = vtanh.pop %v1748
    %v1756 = vmul.f32 %v1754, %v1495
    %1758 = vrot.lane.b32.xlu0 %v1755, 64
    %v1759 = vpop.permute.xlu0 %1758
    %v1761 = vmul.f32 %v1754, %v1759
    %1763 = vrot.lane.b32.xlu0 %v1761, 32
    %v1764 = vpop.permute.xlu0 %1763
    %v1766 = vadd.f32 %v1756, %v1764
    %v1767 = vtanh.pop %v1766
    %1769 = vrot.lane.b32.xlu0 %v1767, 64
    %v1770 = vpop.permute.xlu0 %1769
    %v1772 = vmul.f32 %v1754, %v1770
    %v1773 = vld [vmem:[#allocation2 + $0x28] sm:$0xff]
    %1774 = vmatprep.subr.mxu0 0.0
    %1775 = vmatpush1.msra.mxu0 0.0
    %1776 = vmatprep.subr.mxu0 0.0
    %1777 = vmatpush1.msra.mxu0 0.0
    %1778 = vmatprep.subr.mxu0 0.0
    %1779 = vmatpush1.msra.mxu0 0.0
    %1780 = vmatprep.subr.mxu0 0.0
    %1781 = vmatpush1.msra.mxu0 0.0
    %1782 = vmatprep.subr.mxu0 0.0
    %1783 = vmatpush1.msra.mxu0 0.0
    %1784 = vmatprep.subr.mxu0 0.0
    %1785 = vmatpush1.msra.mxu0 0.0
    %1786 = vmatprep.subr.mxu0 0.0
    %1787 = vmatpush1.msra.mxu0 0.0
    %1788 = vmatprep.subr.mxu0 0.0
    %1789 = vmatpush1.msra.mxu0 0.0
    %1790 = vmatprep.subr.mxu0 0.0
    %1791 = vmatpush1.msra.mxu0 0.0
    %1792 = vmatprep.subr.mxu0 0.0
    %1793 = vmatpush1.msra.mxu0 0.0
    %1794 = vmatprep.subr.mxu0 0.0
    %1795 = vmatpush1.msra.mxu0 0.0
    %1796 = vmatprep.subr.mxu0 0.0
    %1797 = vmatpush1.msra.mxu0 0.0
    %1798 = vmatprep.subr.mxu0 0.0
    %1799 = vmatpush1.msra.mxu0 %v404
    %1800 = vmatprep.subr.mxu0 0.0
    %1801 = vmatpush1.msra.mxu0 %v403
    %1802 = vmatprep.subr.mxu0 0.0
    %1803 = vmatpush1.msra.mxu0 %v402
    %1804 = vmatprep.subr.mxu0 0.0
    %1805 = vmatpush1.msra.mxu0 %v401
    %1806 = vmatprep.subr.mxu0 0.0
    %1807 = vmatpush2.msra.mxu0 0.0
    %1808 = vmatprep.subr.mxu0 0.0
    %1809 = vmatpush2.msra.mxu0 0.0
    %1810 = vmatprep.subr.mxu0 0.0
    %1811 = vmatpush2.msra.mxu0 0.0
    %1812 = vmatprep.subr.mxu0 0.0
    %1813 = vmatpush2.msra.mxu0 0.0
    %1814 = vmatprep.subr.mxu0 0.0
    %1815 = vmatpush2.msra.mxu0 0.0
    %1816 = vmatprep.subr.mxu0 0.0
    %1817 = vmatpush2.msra.mxu0 0.0
    %1818 = vmatprep.subr.mxu0 0.0
    %1819 = vmatpush2.msra.mxu0 0.0
    %1820 = vmatprep.subr.mxu0 0.0
    %1821 = vmatpush2.msra.mxu0 0.0
    %1822 = vmatprep.subr.mxu0 0.0
    %1823 = vmatpush2.msra.mxu0 0.0
    %1824 = vmatprep.subr.mxu0 0.0
    %1825 = vmatpush2.msra.mxu0 0.0
    %1826 = vmatprep.subr.mxu0 0.0
    %1827 = vmatpush2.msra.mxu0 0.0
    %1828 = vmatprep.subr.mxu0 0.0
    %1829 = vmatpush2.msra.mxu0 0.0
    %1830 = vmatprep.subr.mxu0 0.0
    %1831 = vmatpush2.msra.mxu0 0.0
    %1832 = vmatprep.subr.mxu0 0.0
    %1833 = vmatpush2.msra.mxu0 0.0
    %1834 = vmatprep.subr.mxu0 0.0
    %1835 = vmatpush2.msra.mxu0 0.0
    %1836 = vmatprep.subr.mxu0 0.0
    %1837 = vmatpush2.msra.mxu0 0.0
    %1838 = vmatprep.mubr.f32.mxu0 0.0
    %1839 = vmatmul.mubr.f32.gmra.mxu0 %v1601
    %v1840 = vpop.f32.mrf.mxu0
    %v1841 = vadd.f32 0.0, %v1840
    %v1842 = vpop.f32.mrf.mxu0
    %1843 = vdwg.mxu0
    %v1844 = vadd.f32 %v1773, %v1841
    %v1845 = vxor.u32 %v1844, 2147483648
    %v1846 = vmul.f32 %v1845, 1.442695
    %v1847 = vpow.pop %v1846
    %v1848 = vadd.f32 %v1847, 1.0
    %v1849 = vrcp.pop %v1848
    %v1850 = vmul.f32 1.0, %v1849
    %v1851 = vtanh.pop %v1844
    %v1852 = vmul.f32 %v1850, %v1591
    %1854 = vrot.lane.b32.xlu0 %v1851, 64
    %v1855 = vpop.permute.xlu0 %1854
    %v1857 = vmul.f32 %v1850, %v1855
    %1859 = vrot.lane.b32.xlu0 %v1857, 32
    %v1860 = vpop.permute.xlu0 %1859
    %v1862 = vadd.f32 %v1852, %v1860
    %v1863 = vtanh.pop %v1862
    %1865 = vrot.lane.b32.xlu0 %v1863, 64
    %v1866 = vpop.permute.xlu0 %1865
    %v1868 = vmul.f32 %v1850, %v1866
    %1870 = vrot.lane.b32.xlu0 %v1868, 32
    %v1871 = vpop.permute.xlu0 %1870
    %v1872 = vsel %vm227, %v1871, 0
    %1874 = vmatprep.subr.mxu0 0.0
    %1875 = vmatpush1.msra.mxu0 0.0
    %1876 = vmatprep.subr.mxu0 0.0
    %1877 = vmatpush1.msra.mxu0 0.0
    %1878 = vmatprep.subr.mxu0 0.0
    %1879 = vmatpush1.msra.mxu0 0.0
    %1880 = vmatprep.subr.mxu0 0.0
    %1881 = vmatpush1.msra.mxu0 0.0
    %1882 = vmatprep.subr.mxu0 0.0
    %1883 = vmatpush1.msra.mxu0 0.0
    %1884 = vmatprep.subr.mxu0 0.0
    %1885 = vmatpush1.msra.mxu0 0.0
    %1886 = vmatprep.subr.mxu0 0.0
    %1887 = vmatpush1.msra.mxu0 0.0
    %1888 = vmatprep.subr.mxu0 0.0
    %1889 = vmatpush1.msra.mxu0 0.0
    %1890 = vmatprep.subr.mxu0 0.0
    %1891 = vmatpush1.msra.mxu0 0.0
    %1892 = vmatprep.subr.mxu0 0.0
    %1893 = vmatpush1.msra.mxu0 0.0
    %1894 = vmatprep.subr.mxu0 0.0
    %1895 = vmatpush1.msra.mxu0 0.0
    %1896 = vmatprep.subr.mxu0 0.0
    %1897 = vmatpush1.msra.mxu0 0.0
    %1898 = vmatprep.subr.mxu0 0.0
    %1899 = vmatpush1.msra.mxu0 %v412
    %1900 = vmatprep.subr.mxu0 0.0
    %1901 = vmatpush1.msra.mxu0 %v411
    %1902 = vmatprep.subr.mxu0 0.0
    %1903 = vmatpush1.msra.mxu0 %v410
    %1904 = vmatprep.subr.mxu0 0.0
    %1905 = vmatpush1.msra.mxu0 %v409
    %1906 = vmatprep.subr.mxu0 0.0
    %1907 = vmatpush2.msra.mxu0 0.0
    %1908 = vmatprep.subr.mxu0 0.0
    %1909 = vmatpush2.msra.mxu0 0.0
    %1910 = vmatprep.subr.mxu0 0.0
    %1911 = vmatpush2.msra.mxu0 0.0
    %1912 = vmatprep.subr.mxu0 0.0
    %1913 = vmatpush2.msra.mxu0 0.0
    %1914 = vmatprep.subr.mxu0 0.0
    %1915 = vmatpush2.msra.mxu0 0.0
    %1916 = vmatprep.subr.mxu0 0.0
    %1917 = vmatpush2.msra.mxu0 0.0
    %1918 = vmatprep.subr.mxu0 0.0
    %1919 = vmatpush2.msra.mxu0 0.0
    %1920 = vmatprep.subr.mxu0 0.0
    %1921 = vmatpush2.msra.mxu0 0.0
    %1922 = vmatprep.subr.mxu0 0.0
    %1923 = vmatpush2.msra.mxu0 0.0
    %1924 = vmatprep.subr.mxu0 0.0
    %1925 = vmatpush2.msra.mxu0 0.0
    %1926 = vmatprep.subr.mxu0 0.0
    %1927 = vmatpush2.msra.mxu0 0.0
    %1928 = vmatprep.subr.mxu0 0.0
    %1929 = vmatpush2.msra.mxu0 0.0
    %1930 = vmatprep.subr.mxu0 0.0
    %1931 = vmatpush2.msra.mxu0 0.0
    %1932 = vmatprep.subr.mxu0 0.0
    %1933 = vmatpush2.msra.mxu0 0.0
    %1934 = vmatprep.subr.mxu0 0.0
    %1935 = vmatpush2.msra.mxu0 0.0
    %1936 = vmatprep.subr.mxu0 0.0
    %1937 = vmatpush2.msra.mxu0 0.0
    %1938 = vmatprep.mubr.f32.mxu0 0.0
    %1939 = vmatmul.mubr.f32.gmra.mxu0 %v1872
    %v1940 = vpop.f32.mrf.mxu0
    %v1941 = vadd.f32 %v517, %v1940
    %v1942 = vpop.f32.mrf.mxu0
    %1943 = vdwg.mxu0
    %1945 = vrot.lane.b32.xlu0 %v1772, 32
    %v1946 = vpop.permute.xlu0 %1945
    %v1947 = vsel %vm227, %v1946, 0
    %1949 = vmatprep.subr.mxu0 0.0
    %1950 = vmatpush1.msra.mxu0 0.0
    %1951 = vmatprep.subr.mxu0 0.0
    %1952 = vmatpush1.msra.mxu0 0.0
    %1953 = vmatprep.subr.mxu0 0.0
    %1954 = vmatpush1.msra.mxu0 0.0
    %1955 = vmatprep.subr.mxu0 0.0
    %1956 = vmatpush1.msra.mxu0 0.0
    %1957 = vmatprep.subr.mxu0 0.0
    %1958 = vmatpush1.msra.mxu0 0.0
    %1959 = vmatprep.subr.mxu0 0.0
    %1960 = vmatpush1.msra.mxu0 0.0
    %1961 = vmatprep.subr.mxu0 0.0
    %1962 = vmatpush1.msra.mxu0 0.0
    %1963 = vmatprep.subr.mxu0 0.0
    %1964 = vmatpush1.msra.mxu0 0.0
    %1965 = vmatprep.subr.mxu0 0.0
    %1966 = vmatpush1.msra.mxu0 0.0
    %1967 = vmatprep.subr.mxu0 0.0
    %1968 = vmatpush1.msra.mxu0 0.0
    %1969 = vmatprep.subr.mxu0 0.0
    %1970 = vmatpush1.msra.mxu0 0.0
    %1971 = vmatprep.subr.mxu0 0.0
    %1972 = vmatpush1.msra.mxu0 0.0
    %1973 = vmatprep.subr.mxu0 0.0
    %1974 = vmatpush1.msra.mxu0 %v408
    %1975 = vmatprep.subr.mxu0 0.0
    %1976 = vmatpush1.msra.mxu0 %v407
    %1977 = vmatprep.subr.mxu0 0.0
    %1978 = vmatpush1.msra.mxu0 %v406
    %1979 = vmatprep.subr.mxu0 0.0
    %1980 = vmatpush1.msra.mxu0 %v405
    %1981 = vmatprep.subr.mxu0 0.0
    %1982 = vmatpush2.msra.mxu0 0.0
    %1983 = vmatprep.subr.mxu0 0.0
    %1984 = vmatpush2.msra.mxu0 0.0
    %1985 = vmatprep.subr.mxu0 0.0
    %1986 = vmatpush2.msra.mxu0 0.0
    %1987 = vmatprep.subr.mxu0 0.0
    %1988 = vmatpush2.msra.mxu0 0.0
    %1989 = vmatprep.subr.mxu0 0.0
    %1990 = vmatpush2.msra.mxu0 0.0
    %1991 = vmatprep.subr.mxu0 0.0
    %1992 = vmatpush2.msra.mxu0 0.0
    %1993 = vmatprep.subr.mxu0 0.0
    %1994 = vmatpush2.msra.mxu0 0.0
    %1995 = vmatprep.subr.mxu0 0.0
    %1996 = vmatpush2.msra.mxu0 0.0
    %1997 = vmatprep.subr.mxu0 0.0
    %1998 = vmatpush2.msra.mxu0 0.0
    %1999 = vmatprep.subr.mxu0 0.0
    %2000 = vmatpush2.msra.mxu0 0.0
    %2001 = vmatprep.subr.mxu0 0.0
    %2002 = vmatpush2.msra.mxu0 0.0
    %2003 = vmatprep.subr.mxu0 0.0
    %2004 = vmatpush2.msra.mxu0 0.0
    %2005 = vmatprep.subr.mxu0 0.0
    %2006 = vmatpush2.msra.mxu0 0.0
    %2007 = vmatprep.subr.mxu0 0.0
    %2008 = vmatpush2.msra.mxu0 0.0
    %2009 = vmatprep.subr.mxu0 0.0
    %2010 = vmatpush2.msra.mxu0 0.0
    %2011 = vmatprep.subr.mxu0 0.0
    %2012 = vmatpush2.msra.mxu0 0.0
    %2013 = vmatprep.mubr.f32.mxu0 0.0
    %2014 = vmatmul.mubr.f32.gmra.mxu0 %v1947
    %v2015 = vpop.f32.mrf.mxu0
    %v2016 = vadd.f32 0.0, %v2015
    %v2017 = vpop.f32.mrf.mxu0
    %2018 = vdwg.mxu0
    %v2019 = vadd.f32 %v1941, %v2016
    %v2020 = vxor.u32 %v2019, 2147483648
    %v2021 = vmul.f32 %v2020, 1.442695
    %v2022 = vpow.pop %v2021
    %v2023 = vadd.f32 %v2022, 1.0
    %v2024 = vrcp.pop %v2023
    %v2025 = vmul.f32 1.0, %v2024
    %v2026 = vtanh.pop %v2019
    %v2027 = vmul.f32 %v2025, %v1766
    %2029 = vrot.lane.b32.xlu0 %v2026, 64
    %v2030 = vpop.permute.xlu0 %2029
    %v2032 = vmul.f32 %v2025, %v2030
    %2034 = vrot.lane.b32.xlu0 %v2032, 32
    %v2035 = vpop.permute.xlu0 %2034
    %v2037 = vadd.f32 %v2027, %v2035
    %v2038 = vtanh.pop %v2037
    %2040 = vrot.lane.b32.xlu0 %v2038, 64
    %v2041 = vpop.permute.xlu0 %2040
    %v2043 = vmul.f32 %v2025, %v2041
    %v2044 = vld [vmem:[#allocation2 + $0x30] sm:$0xff]
    %2045 = vmatprep.subr.mxu0 0.0
    %2046 = vmatpush1.msra.mxu0 0.0
    %2047 = vmatprep.subr.mxu0 0.0
    %2048 = vmatpush1.msra.mxu0 0.0
    %2049 = vmatprep.subr.mxu0 0.0
    %2050 = vmatpush1.msra.mxu0 0.0
    %2051 = vmatprep.subr.mxu0 0.0
    %2052 = vmatpush1.msra.mxu0 0.0
    %2053 = vmatprep.subr.mxu0 0.0
    %2054 = vmatpush1.msra.mxu0 0.0
    %2055 = vmatprep.subr.mxu0 0.0
    %2056 = vmatpush1.msra.mxu0 0.0
    %2057 = vmatprep.subr.mxu0 0.0
    %2058 = vmatpush1.msra.mxu0 0.0
    %2059 = vmatprep.subr.mxu0 0.0
    %2060 = vmatpush1.msra.mxu0 0.0
    %2061 = vmatprep.subr.mxu0 0.0
    %2062 = vmatpush1.msra.mxu0 0.0
    %2063 = vmatprep.subr.mxu0 0.0
    %2064 = vmatpush1.msra.mxu0 0.0
    %2065 = vmatprep.subr.mxu0 0.0
    %2066 = vmatpush1.msra.mxu0 0.0
    %2067 = vmatprep.subr.mxu0 0.0
    %2068 = vmatpush1.msra.mxu0 0.0
    %2069 = vmatprep.subr.mxu0 0.0
    %2070 = vmatpush1.msra.mxu0 %v404
    %2071 = vmatprep.subr.mxu0 0.0
    %2072 = vmatpush1.msra.mxu0 %v403
    %2073 = vmatprep.subr.mxu0 0.0
    %2074 = vmatpush1.msra.mxu0 %v402
    %2075 = vmatprep.subr.mxu0 0.0
    %2076 = vmatpush1.msra.mxu0 %v401
    %2077 = vmatprep.subr.mxu0 0.0
    %2078 = vmatpush2.msra.mxu0 0.0
    %2079 = vmatprep.subr.mxu0 0.0
    %2080 = vmatpush2.msra.mxu0 0.0
    %2081 = vmatprep.subr.mxu0 0.0
    %2082 = vmatpush2.msra.mxu0 0.0
    %2083 = vmatprep.subr.mxu0 0.0
    %2084 = vmatpush2.msra.mxu0 0.0
    %2085 = vmatprep.subr.mxu0 0.0
    %2086 = vmatpush2.msra.mxu0 0.0
    %2087 = vmatprep.subr.mxu0 0.0
    %2088 = vmatpush2.msra.mxu0 0.0
    %2089 = vmatprep.subr.mxu0 0.0
    %2090 = vmatpush2.msra.mxu0 0.0
    %2091 = vmatprep.subr.mxu0 0.0
    %2092 = vmatpush2.msra.mxu0 0.0
    %2093 = vmatprep.subr.mxu0 0.0
    %2094 = vmatpush2.msra.mxu0 0.0
    %2095 = vmatprep.subr.mxu0 0.0
    %2096 = vmatpush2.msra.mxu0 0.0
    %2097 = vmatprep.subr.mxu0 0.0
    %2098 = vmatpush2.msra.mxu0 0.0
    %2099 = vmatprep.subr.mxu0 0.0
    %2100 = vmatpush2.msra.mxu0 0.0
    %2101 = vmatprep.subr.mxu0 0.0
    %2102 = vmatpush2.msra.mxu0 0.0
    %2103 = vmatprep.subr.mxu0 0.0
    %2104 = vmatpush2.msra.mxu0 0.0
    %2105 = vmatprep.subr.mxu0 0.0
    %2106 = vmatpush2.msra.mxu0 0.0
    %2107 = vmatprep.subr.mxu0 0.0
    %2108 = vmatpush2.msra.mxu0 0.0
    %2109 = vmatprep.mubr.f32.mxu0 0.0
    %2110 = vmatmul.mubr.f32.gmra.mxu0 %v1872
    %v2111 = vpop.f32.mrf.mxu0
    %v2112 = vadd.f32 0.0, %v2111
    %v2113 = vpop.f32.mrf.mxu0
    %2114 = vdwg.mxu0
    %v2115 = vadd.f32 %v2044, %v2112
    %v2116 = vxor.u32 %v2115, 2147483648
    %v2117 = vmul.f32 %v2116, 1.442695
    %v2118 = vpow.pop %v2117
    %v2119 = vadd.f32 %v2118, 1.0
    %v2120 = vrcp.pop %v2119
    %v2121 = vmul.f32 1.0, %v2120
    %v2122 = vtanh.pop %v2115
    %v2123 = vmul.f32 %v2121, %v1862
    %2125 = vrot.lane.b32.xlu0 %v2122, 64
    %v2126 = vpop.permute.xlu0 %2125
    %v2128 = vmul.f32 %v2121, %v2126
    %2130 = vrot.lane.b32.xlu0 %v2128, 32
    %v2131 = vpop.permute.xlu0 %2130
    %v2133 = vadd.f32 %v2123, %v2131
    %v2134 = vtanh.pop %v2133
    %2136 = vrot.lane.b32.xlu0 %v2134, 64
    %v2137 = vpop.permute.xlu0 %2136
    %v2139 = vmul.f32 %v2121, %v2137
    %2141 = vrot.lane.b32.xlu0 %v2139, 32
    %v2142 = vpop.permute.xlu0 %2141
    %v2143 = vsel %vm227, %v2142, 0
    %2145 = vmatprep.subr.mxu0 0.0
    %2146 = vmatpush1.msra.mxu0 0.0
    %2147 = vmatprep.subr.mxu0 0.0
    %2148 = vmatpush1.msra.mxu0 0.0
    %2149 = vmatprep.subr.mxu0 0.0
    %2150 = vmatpush1.msra.mxu0 0.0
    %2151 = vmatprep.subr.mxu0 0.0
    %2152 = vmatpush1.msra.mxu0 0.0
    %2153 = vmatprep.subr.mxu0 0.0
    %2154 = vmatpush1.msra.mxu0 0.0
    %2155 = vmatprep.subr.mxu0 0.0
    %2156 = vmatpush1.msra.mxu0 0.0
    %2157 = vmatprep.subr.mxu0 0.0
    %2158 = vmatpush1.msra.mxu0 0.0
    %2159 = vmatprep.subr.mxu0 0.0
    %2160 = vmatpush1.msra.mxu0 0.0
    %2161 = vmatprep.subr.mxu0 0.0
    %2162 = vmatpush1.msra.mxu0 0.0
    %2163 = vmatprep.subr.mxu0 0.0
    %2164 = vmatpush1.msra.mxu0 0.0
    %2165 = vmatprep.subr.mxu0 0.0
    %2166 = vmatpush1.msra.mxu0 0.0
    %2167 = vmatprep.subr.mxu0 0.0
    %2168 = vmatpush1.msra.mxu0 0.0
    %2169 = vmatprep.subr.mxu0 0.0
    %2170 = vmatpush1.msra.mxu0 %v412
    %2171 = vmatprep.subr.mxu0 0.0
    %2172 = vmatpush1.msra.mxu0 %v411
    %2173 = vmatprep.subr.mxu0 0.0
    %2174 = vmatpush1.msra.mxu0 %v410
    %2175 = vmatprep.subr.mxu0 0.0
    %2176 = vmatpush1.msra.mxu0 %v409
    %2177 = vmatprep.subr.mxu0 0.0
    %2178 = vmatpush2.msra.mxu0 0.0
    %2179 = vmatprep.subr.mxu0 0.0
    %2180 = vmatpush2.msra.mxu0 0.0
    %2181 = vmatprep.subr.mxu0 0.0
    %2182 = vmatpush2.msra.mxu0 0.0
    %2183 = vmatprep.subr.mxu0 0.0
    %2184 = vmatpush2.msra.mxu0 0.0
    %2185 = vmatprep.subr.mxu0 0.0
    %2186 = vmatpush2.msra.mxu0 0.0
    %2187 = vmatprep.subr.mxu0 0.0
    %2188 = vmatpush2.msra.mxu0 0.0
    %2189 = vmatprep.subr.mxu0 0.0
    %2190 = vmatpush2.msra.mxu0 0.0
    %2191 = vmatprep.subr.mxu0 0.0
    %2192 = vmatpush2.msra.mxu0 0.0
    %2193 = vmatprep.subr.mxu0 0.0
    %2194 = vmatpush2.msra.mxu0 0.0
    %2195 = vmatprep.subr.mxu0 0.0
    %2196 = vmatpush2.msra.mxu0 0.0
    %2197 = vmatprep.subr.mxu0 0.0
    %2198 = vmatpush2.msra.mxu0 0.0
    %2199 = vmatprep.subr.mxu0 0.0
    %2200 = vmatpush2.msra.mxu0 0.0
    %2201 = vmatprep.subr.mxu0 0.0
    %2202 = vmatpush2.msra.mxu0 0.0
    %2203 = vmatprep.subr.mxu0 0.0
    %2204 = vmatpush2.msra.mxu0 0.0
    %2205 = vmatprep.subr.mxu0 0.0
    %2206 = vmatpush2.msra.mxu0 0.0
    %2207 = vmatprep.subr.mxu0 0.0
    %2208 = vmatpush2.msra.mxu0 0.0
    %2209 = vmatprep.mubr.f32.mxu0 0.0
    %2210 = vmatmul.mubr.f32.gmra.mxu0 %v2143
    %v2211 = vpop.f32.mrf.mxu0
    %v2212 = vadd.f32 %v517, %v2211
    %v2213 = vpop.f32.mrf.mxu0
    %2214 = vdwg.mxu0
    %2216 = vrot.lane.b32.xlu0 %v2043, 32
    %v2217 = vpop.permute.xlu0 %2216
    %v2218 = vsel %vm227, %v2217, 0
    %2220 = vmatprep.subr.mxu0 0.0
    %2221 = vmatpush1.msra.mxu0 0.0
    %2222 = vmatprep.subr.mxu0 0.0
    %2223 = vmatpush1.msra.mxu0 0.0
    %2224 = vmatprep.subr.mxu0 0.0
    %2225 = vmatpush1.msra.mxu0 0.0
    %2226 = vmatprep.subr.mxu0 0.0
    %2227 = vmatpush1.msra.mxu0 0.0
    %2228 = vmatprep.subr.mxu0 0.0
    %2229 = vmatpush1.msra.mxu0 0.0
    %2230 = vmatprep.subr.mxu0 0.0
    %2231 = vmatpush1.msra.mxu0 0.0
    %2232 = vmatprep.subr.mxu0 0.0
    %2233 = vmatpush1.msra.mxu0 0.0
    %2234 = vmatprep.subr.mxu0 0.0
    %2235 = vmatpush1.msra.mxu0 0.0
    %2236 = vmatprep.subr.mxu0 0.0
    %2237 = vmatpush1.msra.mxu0 0.0
    %2238 = vmatprep.subr.mxu0 0.0
    %2239 = vmatpush1.msra.mxu0 0.0
    %2240 = vmatprep.subr.mxu0 0.0
    %2241 = vmatpush1.msra.mxu0 0.0
    %2242 = vmatprep.subr.mxu0 0.0
    %2243 = vmatpush1.msra.mxu0 0.0
    %2244 = vmatprep.subr.mxu0 0.0
    %2245 = vmatpush1.msra.mxu0 %v408
    %2246 = vmatprep.subr.mxu0 0.0
    %2247 = vmatpush1.msra.mxu0 %v407
    %2248 = vmatprep.subr.mxu0 0.0
    %2249 = vmatpush1.msra.mxu0 %v406
    %2250 = vmatprep.subr.mxu0 0.0
    %2251 = vmatpush1.msra.mxu0 %v405
    %2252 = vmatprep.subr.mxu0 0.0
    %2253 = vmatpush2.msra.mxu0 0.0
    %2254 = vmatprep.subr.mxu0 0.0
    %2255 = vmatpush2.msra.mxu0 0.0
    %2256 = vmatprep.subr.mxu0 0.0
    %2257 = vmatpush2.msra.mxu0 0.0
    %2258 = vmatprep.subr.mxu0 0.0
    %2259 = vmatpush2.msra.mxu0 0.0
    %2260 = vmatprep.subr.mxu0 0.0
    %2261 = vmatpush2.msra.mxu0 0.0
    %2262 = vmatprep.subr.mxu0 0.0
    %2263 = vmatpush2.msra.mxu0 0.0
    %2264 = vmatprep.subr.mxu0 0.0
    %2265 = vmatpush2.msra.mxu0 0.0
    %2266 = vmatprep.subr.mxu0 0.0
    %2267 = vmatpush2.msra.mxu0 0.0
    %2268 = vmatprep.subr.mxu0 0.0
    %2269 = vmatpush2.msra.mxu0 0.0
    %2270 = vmatprep.subr.mxu0 0.0
    %2271 = vmatpush2.msra.mxu0 0.0
    %2272 = vmatprep.subr.mxu0 0.0
    %2273 = vmatpush2.msra.mxu0 0.0
    %2274 = vmatprep.subr.mxu0 0.0
    %2275 = vmatpush2.msra.mxu0 0.0
    %2276 = vmatprep.subr.mxu0 0.0
    %2277 = vmatpush2.msra.mxu0 0.0
    %2278 = vmatprep.subr.mxu0 0.0
    %2279 = vmatpush2.msra.mxu0 0.0
    %2280 = vmatprep.subr.mxu0 0.0
    %2281 = vmatpush2.msra.mxu0 0.0
    %2282 = vmatprep.subr.mxu0 0.0
    %2283 = vmatpush2.msra.mxu0 0.0
    %2284 = vmatprep.mubr.f32.mxu0 0.0
    %2285 = vmatmul.mubr.f32.gmra.mxu0 %v2218
    %v2286 = vpop.f32.mrf.mxu0
    %v2287 = vadd.f32 0.0, %v2286
    %v2288 = vpop.f32.mrf.mxu0
    %2289 = vdwg.mxu0
    %v2290 = vadd.f32 %v2212, %v2287
    %v2291 = vxor.u32 %v2290, 2147483648
    %v2292 = vmul.f32 %v2291, 1.442695
    %v2293 = vpow.pop %v2292
    %v2294 = vadd.f32 %v2293, 1.0
    %v2295 = vrcp.pop %v2294
    %v2296 = vmul.f32 1.0, %v2295
    %v2297 = vtanh.pop %v2290
    %v2298 = vmul.f32 %v2296, %v2037
    %2300 = vrot.lane.b32.xlu0 %v2297, 64
    %v2301 = vpop.permute.xlu0 %2300
    %v2303 = vmul.f32 %v2296, %v2301
    %2305 = vrot.lane.b32.xlu0 %v2303, 32
    %v2306 = vpop.permute.xlu0 %2305
    %v2308 = vadd.f32 %v2298, %v2306
    %v2309 = vtanh.pop %v2308
    %2311 = vrot.lane.b32.xlu0 %v2309, 64
    %v2312 = vpop.permute.xlu0 %2311
    %v2314 = vmul.f32 %v2296, %v2312
    %v2315 = vld [vmem:[#allocation2 + $0x38] sm:$0xff]
    %2316 = vmatprep.subr.mxu0 0.0
    %2317 = vmatpush1.msra.mxu0 0.0
    %2318 = vmatprep.subr.mxu0 0.0
    %2319 = vmatpush1.msra.mxu0 0.0
    %2320 = vmatprep.subr.mxu0 0.0
    %2321 = vmatpush1.msra.mxu0 0.0
    %2322 = vmatprep.subr.mxu0 0.0
    %2323 = vmatpush1.msra.mxu0 0.0
    %2324 = vmatprep.subr.mxu0 0.0
    %2325 = vmatpush1.msra.mxu0 0.0
    %2326 = vmatprep.subr.mxu0 0.0
    %2327 = vmatpush1.msra.mxu0 0.0
    %2328 = vmatprep.subr.mxu0 0.0
    %2329 = vmatpush1.msra.mxu0 0.0
    %2330 = vmatprep.subr.mxu0 0.0
    %2331 = vmatpush1.msra.mxu0 0.0
    %2332 = vmatprep.subr.mxu0 0.0
    %2333 = vmatpush1.msra.mxu0 0.0
    %2334 = vmatprep.subr.mxu0 0.0
    %2335 = vmatpush1.msra.mxu0 0.0
    %2336 = vmatprep.subr.mxu0 0.0
    %2337 = vmatpush1.msra.mxu0 0.0
    %2338 = vmatprep.subr.mxu0 0.0
    %2339 = vmatpush1.msra.mxu0 0.0
    %2340 = vmatprep.subr.mxu0 0.0
    %2341 = vmatpush1.msra.mxu0 %v404
    %2342 = vmatprep.subr.mxu0 0.0
    %2343 = vmatpush1.msra.mxu0 %v403
    %2344 = vmatprep.subr.mxu0 0.0
    %2345 = vmatpush1.msra.mxu0 %v402
    %2346 = vmatprep.subr.mxu0 0.0
    %2347 = vmatpush1.msra.mxu0 %v401
    %2348 = vmatprep.subr.mxu0 0.0
    %2349 = vmatpush2.msra.mxu0 0.0
    %2350 = vmatprep.subr.mxu0 0.0
    %2351 = vmatpush2.msra.mxu0 0.0
    %2352 = vmatprep.subr.mxu0 0.0
    %2353 = vmatpush2.msra.mxu0 0.0
    %2354 = vmatprep.subr.mxu0 0.0
    %2355 = vmatpush2.msra.mxu0 0.0
    %2356 = vmatprep.subr.mxu0 0.0
    %2357 = vmatpush2.msra.mxu0 0.0
    %2358 = vmatprep.subr.mxu0 0.0
    %2359 = vmatpush2.msra.mxu0 0.0
    %2360 = vmatprep.subr.mxu0 0.0
    %2361 = vmatpush2.msra.mxu0 0.0
    %2362 = vmatprep.subr.mxu0 0.0
    %2363 = vmatpush2.msra.mxu0 0.0
    %2364 = vmatprep.subr.mxu0 0.0
    %2365 = vmatpush2.msra.mxu0 0.0
    %2366 = vmatprep.subr.mxu0 0.0
    %2367 = vmatpush2.msra.mxu0 0.0
    %2368 = vmatprep.subr.mxu0 0.0
    %2369 = vmatpush2.msra.mxu0 0.0
    %2370 = vmatprep.subr.mxu0 0.0
    %2371 = vmatpush2.msra.mxu0 0.0
    %2372 = vmatprep.subr.mxu0 0.0
    %2373 = vmatpush2.msra.mxu0 0.0
    %2374 = vmatprep.subr.mxu0 0.0
    %2375 = vmatpush2.msra.mxu0 0.0
    %2376 = vmatprep.subr.mxu0 0.0
    %2377 = vmatpush2.msra.mxu0 0.0
    %2378 = vmatprep.subr.mxu0 0.0
    %2379 = vmatpush2.msra.mxu0 0.0
    %2380 = vmatprep.mubr.f32.mxu0 0.0
    %2381 = vmatmul.mubr.f32.gmra.mxu0 %v2143
    %v2382 = vpop.f32.mrf.mxu0
    %v2383 = vadd.f32 0.0, %v2382
    %v2384 = vpop.f32.mrf.mxu0
    %2385 = vdwg.mxu0
    %v2386 = vadd.f32 %v2315, %v2383
    %v2387 = vxor.u32 %v2386, 2147483648
    %v2388 = vmul.f32 %v2387, 1.442695
    %v2389 = vpow.pop %v2388
    %v2390 = vadd.f32 %v2389, 1.0
    %v2391 = vrcp.pop %v2390
    %v2392 = vmul.f32 1.0, %v2391
    %v2393 = vtanh.pop %v2386
    %v2394 = vmul.f32 %v2392, %v2133
    %2396 = vrot.lane.b32.xlu0 %v2393, 64
    %v2397 = vpop.permute.xlu0 %2396
    %v2399 = vmul.f32 %v2392, %v2397
    %2401 = vrot.lane.b32.xlu0 %v2399, 32
    %v2402 = vpop.permute.xlu0 %2401
    %v2404 = vadd.f32 %v2394, %v2402
    %v2405 = vtanh.pop %v2404
    %2407 = vrot.lane.b32.xlu0 %v2405, 64
    %v2408 = vpop.permute.xlu0 %2407
    %v2410 = vmul.f32 %v2392, %v2408
    %2412 = vrot.lane.b32.xlu0 %v2410, 32
    %v2413 = vpop.permute.xlu0 %2412
    %v2414 = vsel %vm227, %v2413, 0
    %2416 = vmatprep.subr.mxu0 0.0
    %2417 = vmatpush1.msra.mxu0 0.0
    %2418 = vmatprep.subr.mxu0 0.0
    %2419 = vmatpush1.msra.mxu0 0.0
    %2420 = vmatprep.subr.mxu0 0.0
    %2421 = vmatpush1.msra.mxu0 0.0
    %2422 = vmatprep.subr.mxu0 0.0
    %2423 = vmatpush1.msra.mxu0 0.0
    %2424 = vmatprep.subr.mxu0 0.0
    %2425 = vmatpush1.msra.mxu0 0.0
    %2426 = vmatprep.subr.mxu0 0.0
    %2427 = vmatpush1.msra.mxu0 0.0
    %2428 = vmatprep.subr.mxu0 0.0
    %2429 = vmatpush1.msra.mxu0 0.0
    %2430 = vmatprep.subr.mxu0 0.0
    %2431 = vmatpush1.msra.mxu0 0.0
    %2432 = vmatprep.subr.mxu0 0.0
    %2433 = vmatpush1.msra.mxu0 0.0
    %2434 = vmatprep.subr.mxu0 0.0
    %2435 = vmatpush1.msra.mxu0 0.0
    %2436 = vmatprep.subr.mxu0 0.0
    %2437 = vmatpush1.msra.mxu0 0.0
    %2438 = vmatprep.subr.mxu0 0.0
    %2439 = vmatpush1.msra.mxu0 0.0
    %2440 = vmatprep.subr.mxu0 0.0
    %2441 = vmatpush1.msra.mxu0 %v412
    %2442 = vmatprep.subr.mxu0 0.0
    %2443 = vmatpush1.msra.mxu0 %v411
    %2444 = vmatprep.subr.mxu0 0.0
    %2445 = vmatpush1.msra.mxu0 %v410
    %2446 = vmatprep.subr.mxu0 0.0
    %2447 = vmatpush1.msra.mxu0 %v409
    %2448 = vmatprep.subr.mxu0 0.0
    %2449 = vmatpush2.msra.mxu0 0.0
    %2450 = vmatprep.subr.mxu0 0.0
    %2451 = vmatpush2.msra.mxu0 0.0
    %2452 = vmatprep.subr.mxu0 0.0
    %2453 = vmatpush2.msra.mxu0 0.0
    %2454 = vmatprep.subr.mxu0 0.0
    %2455 = vmatpush2.msra.mxu0 0.0
    %2456 = vmatprep.subr.mxu0 0.0
    %2457 = vmatpush2.msra.mxu0 0.0
    %2458 = vmatprep.subr.mxu0 0.0
    %2459 = vmatpush2.msra.mxu0 0.0
    %2460 = vmatprep.subr.mxu0 0.0
    %2461 = vmatpush2.msra.mxu0 0.0
    %2462 = vmatprep.subr.mxu0 0.0
    %2463 = vmatpush2.msra.mxu0 0.0
    %2464 = vmatprep.subr.mxu0 0.0
    %2465 = vmatpush2.msra.mxu0 0.0
    %2466 = vmatprep.subr.mxu0 0.0
    %2467 = vmatpush2.msra.mxu0 0.0
    %2468 = vmatprep.subr.mxu0 0.0
    %2469 = vmatpush2.msra.mxu0 0.0
    %2470 = vmatprep.subr.mxu0 0.0
    %2471 = vmatpush2.msra.mxu0 0.0
    %2472 = vmatprep.subr.mxu0 0.0
    %2473 = vmatpush2.msra.mxu0 0.0
    %2474 = vmatprep.subr.mxu0 0.0
    %2475 = vmatpush2.msra.mxu0 0.0
    %2476 = vmatprep.subr.mxu0 0.0
    %2477 = vmatpush2.msra.mxu0 0.0
    %2478 = vmatprep.subr.mxu0 0.0
    %2479 = vmatpush2.msra.mxu0 0.0
    %2480 = vmatprep.mubr.f32.mxu0 0.0
    %2481 = vmatmul.mubr.f32.gmra.mxu0 %v2414
    %v2482 = vpop.f32.mrf.mxu0
    %v2483 = vadd.f32 %v517, %v2482
    %v2484 = vpop.f32.mrf.mxu0
    %2485 = vdwg.mxu0
    %2487 = vrot.lane.b32.xlu0 %v2314, 32
    %v2488 = vpop.permute.xlu0 %2487
    %v2489 = vsel %vm227, %v2488, 0
    %2491 = vmatprep.subr.mxu0 0.0
    %2492 = vmatpush1.msra.mxu0 0.0
    %2493 = vmatprep.subr.mxu0 0.0
    %2494 = vmatpush1.msra.mxu0 0.0
    %2495 = vmatprep.subr.mxu0 0.0
    %2496 = vmatpush1.msra.mxu0 0.0
    %2497 = vmatprep.subr.mxu0 0.0
    %2498 = vmatpush1.msra.mxu0 0.0
    %2499 = vmatprep.subr.mxu0 0.0
    %2500 = vmatpush1.msra.mxu0 0.0
    %2501 = vmatprep.subr.mxu0 0.0
    %2502 = vmatpush1.msra.mxu0 0.0
    %2503 = vmatprep.subr.mxu0 0.0
    %2504 = vmatpush1.msra.mxu0 0.0
    %2505 = vmatprep.subr.mxu0 0.0
    %2506 = vmatpush1.msra.mxu0 0.0
    %2507 = vmatprep.subr.mxu0 0.0
    %2508 = vmatpush1.msra.mxu0 0.0
    %2509 = vmatprep.subr.mxu0 0.0
    %2510 = vmatpush1.msra.mxu0 0.0
    %2511 = vmatprep.subr.mxu0 0.0
    %2512 = vmatpush1.msra.mxu0 0.0
    %2513 = vmatprep.subr.mxu0 0.0
    %2514 = vmatpush1.msra.mxu0 0.0
    %2515 = vmatprep.subr.mxu0 0.0
    %2516 = vmatpush1.msra.mxu0 %v408
    %2517 = vmatprep.subr.mxu0 0.0
    %2518 = vmatpush1.msra.mxu0 %v407
    %2519 = vmatprep.subr.mxu0 0.0
    %2520 = vmatpush1.msra.mxu0 %v406
    %2521 = vmatprep.subr.mxu0 0.0
    %2522 = vmatpush1.msra.mxu0 %v405
    %2523 = vmatprep.subr.mxu0 0.0
    %2524 = vmatpush2.msra.mxu0 0.0
    %2525 = vmatprep.subr.mxu0 0.0
    %2526 = vmatpush2.msra.mxu0 0.0
    %2527 = vmatprep.subr.mxu0 0.0
    %2528 = vmatpush2.msra.mxu0 0.0
    %2529 = vmatprep.subr.mxu0 0.0
    %2530 = vmatpush2.msra.mxu0 0.0
    %2531 = vmatprep.subr.mxu0 0.0
    %2532 = vmatpush2.msra.mxu0 0.0
    %2533 = vmatprep.subr.mxu0 0.0
    %2534 = vmatpush2.msra.mxu0 0.0
    %2535 = vmatprep.subr.mxu0 0.0
    %2536 = vmatpush2.msra.mxu0 0.0
    %2537 = vmatprep.subr.mxu0 0.0
    %2538 = vmatpush2.msra.mxu0 0.0
    %2539 = vmatprep.subr.mxu0 0.0
    %2540 = vmatpush2.msra.mxu0 0.0
    %2541 = vmatprep.subr.mxu0 0.0
    %2542 = vmatpush2.msra.mxu0 0.0
    %2543 = vmatprep.subr.mxu0 0.0
    %2544 = vmatpush2.msra.mxu0 0.0
    %2545 = vmatprep.subr.mxu0 0.0
    %2546 = vmatpush2.msra.mxu0 0.0
    %2547 = vmatprep.subr.mxu0 0.0
    %2548 = vmatpush2.msra.mxu0 0.0
    %2549 = vmatprep.subr.mxu0 0.0
    %2550 = vmatpush2.msra.mxu0 0.0
    %2551 = vmatprep.subr.mxu0 0.0
    %2552 = vmatpush2.msra.mxu0 0.0
    %2553 = vmatprep.subr.mxu0 0.0
    %2554 = vmatpush2.msra.mxu0 0.0
    %2555 = vmatprep.mubr.f32.mxu0 0.0
    %2556 = vmatmul.mubr.f32.gmra.mxu0 %v2489
    %v2557 = vpop.f32.mrf.mxu0
    %v2558 = vadd.f32 0.0, %v2557
    %v2559 = vpop.f32.mrf.mxu0
    %2560 = vdwg.mxu0
    %v2561 = vadd.f32 %v2483, %v2558
    %v2562 = vxor.u32 %v2561, 2147483648
    %v2563 = vmul.f32 %v2562, 1.442695
    %v2564 = vpow.pop %v2563
    %v2565 = vadd.f32 %v2564, 1.0
    %v2566 = vrcp.pop %v2565
    %v2567 = vmul.f32 1.0, %v2566
    %v2568 = vtanh.pop %v2561
    %v2569 = vmul.f32 %v2567, %v2308
    %2571 = vrot.lane.b32.xlu0 %v2568, 64
    %v2572 = vpop.permute.xlu0 %2571
    %v2574 = vmul.f32 %v2567, %v2572
    %2576 = vrot.lane.b32.xlu0 %v2574, 32
    %v2577 = vpop.permute.xlu0 %2576
    %v2579 = vadd.f32 %v2569, %v2577
    %v2580 = vtanh.pop %v2579
    %2582 = vrot.lane.b32.xlu0 %v2580, 64
    %v2583 = vpop.permute.xlu0 %2582
    %v2585 = vmul.f32 %v2567, %v2583
    %v2586 = vld [vmem:[#allocation2 + $0x40] sm:$0xff]
    %2587 = vmatprep.subr.mxu0 0.0
    %2588 = vmatpush1.msra.mxu0 0.0
    %2589 = vmatprep.subr.mxu0 0.0
    %2590 = vmatpush1.msra.mxu0 0.0
    %2591 = vmatprep.subr.mxu0 0.0
    %2592 = vmatpush1.msra.mxu0 0.0
    %2593 = vmatprep.subr.mxu0 0.0
    %2594 = vmatpush1.msra.mxu0 0.0
    %2595 = vmatprep.subr.mxu0 0.0
    %2596 = vmatpush1.msra.mxu0 0.0
    %2597 = vmatprep.subr.mxu0 0.0
    %2598 = vmatpush1.msra.mxu0 0.0
    %2599 = vmatprep.subr.mxu0 0.0
    %2600 = vmatpush1.msra.mxu0 0.0
    %2601 = vmatprep.subr.mxu0 0.0
    %2602 = vmatpush1.msra.mxu0 0.0
    %2603 = vmatprep.subr.mxu0 0.0
    %2604 = vmatpush1.msra.mxu0 0.0
    %2605 = vmatprep.subr.mxu0 0.0
    %2606 = vmatpush1.msra.mxu0 0.0
    %2607 = vmatprep.subr.mxu0 0.0
    %2608 = vmatpush1.msra.mxu0 0.0
    %2609 = vmatprep.subr.mxu0 0.0
    %2610 = vmatpush1.msra.mxu0 0.0
    %2611 = vmatprep.subr.mxu0 0.0
    %2612 = vmatpush1.msra.mxu0 %v404
    %2613 = vmatprep.subr.mxu0 0.0
    %2614 = vmatpush1.msra.mxu0 %v403
    %2615 = vmatprep.subr.mxu0 0.0
    %2616 = vmatpush1.msra.mxu0 %v402
    %2617 = vmatprep.subr.mxu0 0.0
    %2618 = vmatpush1.msra.mxu0 %v401
    %2619 = vmatprep.subr.mxu0 0.0
    %2620 = vmatpush2.msra.mxu0 0.0
    %2621 = vmatprep.subr.mxu0 0.0
    %2622 = vmatpush2.msra.mxu0 0.0
    %2623 = vmatprep.subr.mxu0 0.0
    %2624 = vmatpush2.msra.mxu0 0.0
    %2625 = vmatprep.subr.mxu0 0.0
    %2626 = vmatpush2.msra.mxu0 0.0
    %2627 = vmatprep.subr.mxu0 0.0
    %2628 = vmatpush2.msra.mxu0 0.0
    %2629 = vmatprep.subr.mxu0 0.0
    %2630 = vmatpush2.msra.mxu0 0.0
    %2631 = vmatprep.subr.mxu0 0.0
    %2632 = vmatpush2.msra.mxu0 0.0
    %2633 = vmatprep.subr.mxu0 0.0
    %2634 = vmatpush2.msra.mxu0 0.0
    %2635 = vmatprep.subr.mxu0 0.0
    %2636 = vmatpush2.msra.mxu0 0.0
    %2637 = vmatprep.subr.mxu0 0.0
    %2638 = vmatpush2.msra.mxu0 0.0
    %2639 = vmatprep.subr.mxu0 0.0
    %2640 = vmatpush2.msra.mxu0 0.0
    %2641 = vmatprep.subr.mxu0 0.0
    %2642 = vmatpush2.msra.mxu0 0.0
    %2643 = vmatprep.subr.mxu0 0.0
    %2644 = vmatpush2.msra.mxu0 0.0
    %2645 = vmatprep.subr.mxu0 0.0
    %2646 = vmatpush2.msra.mxu0 0.0
    %2647 = vmatprep.subr.mxu0 0.0
    %2648 = vmatpush2.msra.mxu0 0.0
    %2649 = vmatprep.subr.mxu0 0.0
    %2650 = vmatpush2.msra.mxu0 0.0
    %2651 = vmatprep.mubr.f32.mxu0 0.0
    %2652 = vmatmul.mubr.f32.gmra.mxu0 %v2414
    %v2653 = vpop.f32.mrf.mxu0
    %v2654 = vadd.f32 0.0, %v2653
    %v2655 = vpop.f32.mrf.mxu0
    %2656 = vdwg.mxu0
    %v2657 = vadd.f32 %v2586, %v2654
    %v2658 = vxor.u32 %v2657, 2147483648
    %v2659 = vmul.f32 %v2658, 1.442695
    %v2660 = vpow.pop %v2659
    %v2661 = vadd.f32 %v2660, 1.0
    %v2662 = vrcp.pop %v2661
    %v2663 = vmul.f32 1.0, %v2662
    %v2664 = vtanh.pop %v2657
    %v2665 = vmul.f32 %v2663, %v2404
    %2667 = vrot.lane.b32.xlu0 %v2664, 64
    %v2668 = vpop.permute.xlu0 %2667
    %v2670 = vmul.f32 %v2663, %v2668
    %2672 = vrot.lane.b32.xlu0 %v2670, 32
    %v2673 = vpop.permute.xlu0 %2672
    %v2675 = vadd.f32 %v2665, %v2673
    %v2676 = vtanh.pop %v2675
    %2678 = vrot.lane.b32.xlu0 %v2676, 64
    %v2679 = vpop.permute.xlu0 %2678
    %v2681 = vmul.f32 %v2663, %v2679
    %2683 = vrot.lane.b32.xlu0 %v2681, 32
    %v2684 = vpop.permute.xlu0 %2683
    %v2685 = vsel %vm227, %v2684, 0
    %2687 = vmatprep.subr.mxu0 0.0
    %2688 = vmatpush1.msra.mxu0 0.0
    %2689 = vmatprep.subr.mxu0 0.0
    %2690 = vmatpush1.msra.mxu0 0.0
    %2691 = vmatprep.subr.mxu0 0.0
    %2692 = vmatpush1.msra.mxu0 0.0
    %2693 = vmatprep.subr.mxu0 0.0
    %2694 = vmatpush1.msra.mxu0 0.0
    %2695 = vmatprep.subr.mxu0 0.0
    %2696 = vmatpush1.msra.mxu0 0.0
    %2697 = vmatprep.subr.mxu0 0.0
    %2698 = vmatpush1.msra.mxu0 0.0
    %2699 = vmatprep.subr.mxu0 0.0
    %2700 = vmatpush1.msra.mxu0 0.0
    %2701 = vmatprep.subr.mxu0 0.0
    %2702 = vmatpush1.msra.mxu0 0.0
    %2703 = vmatprep.subr.mxu0 0.0
    %2704 = vmatpush1.msra.mxu0 0.0
    %2705 = vmatprep.subr.mxu0 0.0
    %2706 = vmatpush1.msra.mxu0 0.0
    %2707 = vmatprep.subr.mxu0 0.0
    %2708 = vmatpush1.msra.mxu0 0.0
    %2709 = vmatprep.subr.mxu0 0.0
    %2710 = vmatpush1.msra.mxu0 0.0
    %2711 = vmatprep.subr.mxu0 0.0
    %2712 = vmatpush1.msra.mxu0 %v412
    %2713 = vmatprep.subr.mxu0 0.0
    %2714 = vmatpush1.msra.mxu0 %v411
    %2715 = vmatprep.subr.mxu0 0.0
    %2716 = vmatpush1.msra.mxu0 %v410
    %2717 = vmatprep.subr.mxu0 0.0
    %2718 = vmatpush1.msra.mxu0 %v409
    %2719 = vmatprep.subr.mxu0 0.0
    %2720 = vmatpush2.msra.mxu0 0.0
    %2721 = vmatprep.subr.mxu0 0.0
    %2722 = vmatpush2.msra.mxu0 0.0
    %2723 = vmatprep.subr.mxu0 0.0
    %2724 = vmatpush2.msra.mxu0 0.0
    %2725 = vmatprep.subr.mxu0 0.0
    %2726 = vmatpush2.msra.mxu0 0.0
    %2727 = vmatprep.subr.mxu0 0.0
    %2728 = vmatpush2.msra.mxu0 0.0
    %2729 = vmatprep.subr.mxu0 0.0
    %2730 = vmatpush2.msra.mxu0 0.0
    %2731 = vmatprep.subr.mxu0 0.0
    %2732 = vmatpush2.msra.mxu0 0.0
    %2733 = vmatprep.subr.mxu0 0.0
    %2734 = vmatpush2.msra.mxu0 0.0
    %2735 = vmatprep.subr.mxu0 0.0
    %2736 = vmatpush2.msra.mxu0 0.0
    %2737 = vmatprep.subr.mxu0 0.0
    %2738 = vmatpush2.msra.mxu0 0.0
    %2739 = vmatprep.subr.mxu0 0.0
    %2740 = vmatpush2.msra.mxu0 0.0
    %2741 = vmatprep.subr.mxu0 0.0
    %2742 = vmatpush2.msra.mxu0 0.0
    %2743 = vmatprep.subr.mxu0 0.0
    %2744 = vmatpush2.msra.mxu0 0.0
    %2745 = vmatprep.subr.mxu0 0.0
    %2746 = vmatpush2.msra.mxu0 0.0
    %2747 = vmatprep.subr.mxu0 0.0
    %2748 = vmatpush2.msra.mxu0 0.0
    %2749 = vmatprep.subr.mxu0 0.0
    %2750 = vmatpush2.msra.mxu0 0.0
    %2751 = vmatprep.mubr.f32.mxu0 0.0
    %2752 = vmatmul.mubr.f32.gmra.mxu0 %v2685
    %v2753 = vpop.f32.mrf.mxu0
    %v2754 = vadd.f32 %v517, %v2753
    %v2755 = vpop.f32.mrf.mxu0
    %2756 = vdwg.mxu0
    %2758 = vrot.lane.b32.xlu0 %v2585, 32
    %v2759 = vpop.permute.xlu0 %2758
    %v2760 = vsel %vm227, %v2759, 0
    %2762 = vmatprep.subr.mxu0 0.0
    %2763 = vmatpush1.msra.mxu0 0.0
    %2764 = vmatprep.subr.mxu0 0.0
    %2765 = vmatpush1.msra.mxu0 0.0
    %2766 = vmatprep.subr.mxu0 0.0
    %2767 = vmatpush1.msra.mxu0 0.0
    %2768 = vmatprep.subr.mxu0 0.0
    %2769 = vmatpush1.msra.mxu0 0.0
    %2770 = vmatprep.subr.mxu0 0.0
    %2771 = vmatpush1.msra.mxu0 0.0
    %2772 = vmatprep.subr.mxu0 0.0
    %2773 = vmatpush1.msra.mxu0 0.0
    %2774 = vmatprep.subr.mxu0 0.0
    %2775 = vmatpush1.msra.mxu0 0.0
    %2776 = vmatprep.subr.mxu0 0.0
    %2777 = vmatpush1.msra.mxu0 0.0
    %2778 = vmatprep.subr.mxu0 0.0
    %2779 = vmatpush1.msra.mxu0 0.0
    %2780 = vmatprep.subr.mxu0 0.0
    %2781 = vmatpush1.msra.mxu0 0.0
    %2782 = vmatprep.subr.mxu0 0.0
    %2783 = vmatpush1.msra.mxu0 0.0
    %2784 = vmatprep.subr.mxu0 0.0
    %2785 = vmatpush1.msra.mxu0 0.0
    %2786 = vmatprep.subr.mxu0 0.0
    %2787 = vmatpush1.msra.mxu0 %v408
    %2788 = vmatprep.subr.mxu0 0.0
    %2789 = vmatpush1.msra.mxu0 %v407
    %2790 = vmatprep.subr.mxu0 0.0
    %2791 = vmatpush1.msra.mxu0 %v406
    %2792 = vmatprep.subr.mxu0 0.0
    %2793 = vmatpush1.msra.mxu0 %v405
    %2794 = vmatprep.subr.mxu0 0.0
    %2795 = vmatpush2.msra.mxu0 0.0
    %2796 = vmatprep.subr.mxu0 0.0
    %2797 = vmatpush2.msra.mxu0 0.0
    %2798 = vmatprep.subr.mxu0 0.0
    %2799 = vmatpush2.msra.mxu0 0.0
    %2800 = vmatprep.subr.mxu0 0.0
    %2801 = vmatpush2.msra.mxu0 0.0
    %2802 = vmatprep.subr.mxu0 0.0
    %2803 = vmatpush2.msra.mxu0 0.0
    %2804 = vmatprep.subr.mxu0 0.0
    %2805 = vmatpush2.msra.mxu0 0.0
    %2806 = vmatprep.subr.mxu0 0.0
    %2807 = vmatpush2.msra.mxu0 0.0
    %2808 = vmatprep.subr.mxu0 0.0
    %2809 = vmatpush2.msra.mxu0 0.0
    %2810 = vmatprep.subr.mxu0 0.0
    %2811 = vmatpush2.msra.mxu0 0.0
    %2812 = vmatprep.subr.mxu0 0.0
    %2813 = vmatpush2.msra.mxu0 0.0
    %2814 = vmatprep.subr.mxu0 0.0
    %2815 = vmatpush2.msra.mxu0 0.0
    %2816 = vmatprep.subr.mxu0 0.0
    %2817 = vmatpush2.msra.mxu0 0.0
    %2818 = vmatprep.subr.mxu0 0.0
    %2819 = vmatpush2.msra.mxu0 0.0
    %2820 = vmatprep.subr.mxu0 0.0
    %2821 = vmatpush2.msra.mxu0 0.0
    %2822 = vmatprep.subr.mxu0 0.0
    %2823 = vmatpush2.msra.mxu0 0.0
    %2824 = vmatprep.subr.mxu0 0.0
    %2825 = vmatpush2.msra.mxu0 0.0
    %2826 = vmatprep.mubr.f32.mxu0 0.0
    %2827 = vmatmul.mubr.f32.gmra.mxu0 %v2760
    %v2828 = vpop.f32.mrf.mxu0
    %v2829 = vadd.f32 0.0, %v2828
    %v2830 = vpop.f32.mrf.mxu0
    %2831 = vdwg.mxu0
    %v2832 = vadd.f32 %v2754, %v2829
    %v2833 = vxor.u32 %v2832, 2147483648
    %v2834 = vmul.f32 %v2833, 1.442695
    %v2835 = vpow.pop %v2834
    %v2836 = vadd.f32 %v2835, 1.0
    %v2837 = vrcp.pop %v2836
    %v2838 = vmul.f32 1.0, %v2837
    %v2839 = vtanh.pop %v2832
    %v2840 = vmul.f32 %v2838, %v2579
    %2842 = vrot.lane.b32.xlu0 %v2839, 64
    %v2843 = vpop.permute.xlu0 %2842
    %v2845 = vmul.f32 %v2838, %v2843
    %2847 = vrot.lane.b32.xlu0 %v2845, 32
    %v2848 = vpop.permute.xlu0 %2847
    %v2850 = vadd.f32 %v2840, %v2848
    %v2851 = vtanh.pop %v2850
    %2853 = vrot.lane.b32.xlu0 %v2851, 64
    %v2854 = vpop.permute.xlu0 %2853
    %v2856 = vmul.f32 %v2838, %v2854
    %v2857 = vld [vmem:[#allocation2 + $0x48] sm:$0xff]
    %2858 = vmatprep.subr.mxu0 0.0
    %2859 = vmatpush1.msra.mxu0 0.0
    %2860 = vmatprep.subr.mxu0 0.0
    %2861 = vmatpush1.msra.mxu0 0.0
    %2862 = vmatprep.subr.mxu0 0.0
    %2863 = vmatpush1.msra.mxu0 0.0
    %2864 = vmatprep.subr.mxu0 0.0
    %2865 = vmatpush1.msra.mxu0 0.0
    %2866 = vmatprep.subr.mxu0 0.0
    %2867 = vmatpush1.msra.mxu0 0.0
    %2868 = vmatprep.subr.mxu0 0.0
    %2869 = vmatpush1.msra.mxu0 0.0
    %2870 = vmatprep.subr.mxu0 0.0
    %2871 = vmatpush1.msra.mxu0 0.0
    %2872 = vmatprep.subr.mxu0 0.0
    %2873 = vmatpush1.msra.mxu0 0.0
    %2874 = vmatprep.subr.mxu0 0.0
    %2875 = vmatpush1.msra.mxu0 0.0
    %2876 = vmatprep.subr.mxu0 0.0
    %2877 = vmatpush1.msra.mxu0 0.0
    %2878 = vmatprep.subr.mxu0 0.0
    %2879 = vmatpush1.msra.mxu0 0.0
    %2880 = vmatprep.subr.mxu0 0.0
    %2881 = vmatpush1.msra.mxu0 0.0
    %2882 = vmatprep.subr.mxu0 0.0
    %2883 = vmatpush1.msra.mxu0 %v404
    %2884 = vmatprep.subr.mxu0 0.0
    %2885 = vmatpush1.msra.mxu0 %v403
    %2886 = vmatprep.subr.mxu0 0.0
    %2887 = vmatpush1.msra.mxu0 %v402
    %2888 = vmatprep.subr.mxu0 0.0
    %2889 = vmatpush1.msra.mxu0 %v401
    %2890 = vmatprep.subr.mxu0 0.0
    %2891 = vmatpush2.msra.mxu0 0.0
    %2892 = vmatprep.subr.mxu0 0.0
    %2893 = vmatpush2.msra.mxu0 0.0
    %2894 = vmatprep.subr.mxu0 0.0
    %2895 = vmatpush2.msra.mxu0 0.0
    %2896 = vmatprep.subr.mxu0 0.0
    %2897 = vmatpush2.msra.mxu0 0.0
    %2898 = vmatprep.subr.mxu0 0.0
    %2899 = vmatpush2.msra.mxu0 0.0
    %2900 = vmatprep.subr.mxu0 0.0
    %2901 = vmatpush2.msra.mxu0 0.0
    %2902 = vmatprep.subr.mxu0 0.0
    %2903 = vmatpush2.msra.mxu0 0.0
    %2904 = vmatprep.subr.mxu0 0.0
    %2905 = vmatpush2.msra.mxu0 0.0
    %2906 = vmatprep.subr.mxu0 0.0
    %2907 = vmatpush2.msra.mxu0 0.0
    %2908 = vmatprep.subr.mxu0 0.0
    %2909 = vmatpush2.msra.mxu0 0.0
    %2910 = vmatprep.subr.mxu0 0.0
    %2911 = vmatpush2.msra.mxu0 0.0
    %2912 = vmatprep.subr.mxu0 0.0
    %2913 = vmatpush2.msra.mxu0 0.0
    %2914 = vmatprep.subr.mxu0 0.0
    %2915 = vmatpush2.msra.mxu0 0.0
    %2916 = vmatprep.subr.mxu0 0.0
    %2917 = vmatpush2.msra.mxu0 0.0
    %2918 = vmatprep.subr.mxu0 0.0
    %2919 = vmatpush2.msra.mxu0 0.0
    %2920 = vmatprep.subr.mxu0 0.0
    %2921 = vmatpush2.msra.mxu0 0.0
    %2922 = vmatprep.mubr.f32.mxu0 0.0
    %2923 = vmatmul.mubr.f32.gmra.mxu0 %v2685
    %v2924 = vpop.f32.mrf.mxu0
    %v2925 = vadd.f32 0.0, %v2924
    %v2926 = vpop.f32.mrf.mxu0
    %2927 = vdwg.mxu0
    %v2928 = vadd.f32 %v2857, %v2925
    %v2929 = vxor.u32 %v2928, 2147483648
    %v2930 = vmul.f32 %v2929, 1.442695
    %v2931 = vpow.pop %v2930
    %v2932 = vadd.f32 %v2931, 1.0
    %v2933 = vrcp.pop %v2932
    %v2934 = vmul.f32 1.0, %v2933
    %v2935 = vtanh.pop %v2928
    %v2936 = vmul.f32 %v2934, %v2675
    %2938 = vrot.lane.b32.xlu0 %v2935, 64
    %v2939 = vpop.permute.xlu0 %2938
    %v2941 = vmul.f32 %v2934, %v2939
    %2943 = vrot.lane.b32.xlu0 %v2941, 32
    %v2944 = vpop.permute.xlu0 %2943
    %v2946 = vadd.f32 %v2936, %v2944
    %v2947 = vtanh.pop %v2946
    %2949 = vrot.lane.b32.xlu0 %v2947, 64
    %v2950 = vpop.permute.xlu0 %2949
    %v2952 = vmul.f32 %v2934, %v2950
    %2954 = vrot.lane.b32.xlu0 %v2952, 32
    %v2955 = vpop.permute.xlu0 %2954
    %v2956 = vsel %vm227, %v2955, 0
    %2958 = vmatprep.subr.mxu0 0.0
    %2959 = vmatpush1.msra.mxu0 0.0
    %2960 = vmatprep.subr.mxu0 0.0
    %2961 = vmatpush1.msra.mxu0 0.0
    %2962 = vmatprep.subr.mxu0 0.0
    %2963 = vmatpush1.msra.mxu0 0.0
    %2964 = vmatprep.subr.mxu0 0.0
    %2965 = vmatpush1.msra.mxu0 0.0
    %2966 = vmatprep.subr.mxu0 0.0
    %2967 = vmatpush1.msra.mxu0 0.0
    %2968 = vmatprep.subr.mxu0 0.0
    %2969 = vmatpush1.msra.mxu0 0.0
    %2970 = vmatprep.subr.mxu0 0.0
    %2971 = vmatpush1.msra.mxu0 0.0
    %2972 = vmatprep.subr.mxu0 0.0
    %2973 = vmatpush1.msra.mxu0 0.0
    %2974 = vmatprep.subr.mxu0 0.0
    %2975 = vmatpush1.msra.mxu0 0.0
    %2976 = vmatprep.subr.mxu0 0.0
    %2977 = vmatpush1.msra.mxu0 0.0
    %2978 = vmatprep.subr.mxu0 0.0
    %2979 = vmatpush1.msra.mxu0 0.0
    %2980 = vmatprep.subr.mxu0 0.0
    %2981 = vmatpush1.msra.mxu0 0.0
    %2982 = vmatprep.subr.mxu0 0.0
    %2983 = vmatpush1.msra.mxu0 %v412
    %2984 = vmatprep.subr.mxu0 0.0
    %2985 = vmatpush1.msra.mxu0 %v411
    %2986 = vmatprep.subr.mxu0 0.0
    %2987 = vmatpush1.msra.mxu0 %v410
    %2988 = vmatprep.subr.mxu0 0.0
    %2989 = vmatpush1.msra.mxu0 %v409
    %2990 = vmatprep.subr.mxu0 0.0
    %2991 = vmatpush2.msra.mxu0 0.0
    %2992 = vmatprep.subr.mxu0 0.0
    %2993 = vmatpush2.msra.mxu0 0.0
    %2994 = vmatprep.subr.mxu0 0.0
    %2995 = vmatpush2.msra.mxu0 0.0
    %2996 = vmatprep.subr.mxu0 0.0
    %2997 = vmatpush2.msra.mxu0 0.0
    %2998 = vmatprep.subr.mxu0 0.0
    %2999 = vmatpush2.msra.mxu0 0.0
    %3000 = vmatprep.subr.mxu0 0.0
    %3001 = vmatpush2.msra.mxu0 0.0
    %3002 = vmatprep.subr.mxu0 0.0
    %3003 = vmatpush2.msra.mxu0 0.0
    %3004 = vmatprep.subr.mxu0 0.0
    %3005 = vmatpush2.msra.mxu0 0.0
    %3006 = vmatprep.subr.mxu0 0.0
    %3007 = vmatpush2.msra.mxu0 0.0
    %3008 = vmatprep.subr.mxu0 0.0
    %3009 = vmatpush2.msra.mxu0 0.0
    %3010 = vmatprep.subr.mxu0 0.0
    %3011 = vmatpush2.msra.mxu0 0.0
    %3012 = vmatprep.subr.mxu0 0.0
    %3013 = vmatpush2.msra.mxu0 0.0
    %3014 = vmatprep.subr.mxu0 0.0
    %3015 = vmatpush2.msra.mxu0 0.0
    %3016 = vmatprep.subr.mxu0 0.0
    %3017 = vmatpush2.msra.mxu0 0.0
    %3018 = vmatprep.subr.mxu0 0.0
    %3019 = vmatpush2.msra.mxu0 0.0
    %3020 = vmatprep.subr.mxu0 0.0
    %3021 = vmatpush2.msra.mxu0 0.0
    %3022 = vmatprep.mubr.f32.mxu0 0.0
    %3023 = vmatmul.mubr.f32.gmra.mxu0 %v2956
    %v3024 = vpop.f32.mrf.mxu0
    %v3025 = vadd.f32 %v517, %v3024
    %v3026 = vpop.f32.mrf.mxu0
    %3027 = vdwg.mxu0
    %3029 = vrot.lane.b32.xlu0 %v2856, 32
    %v3030 = vpop.permute.xlu0 %3029
    %v3031 = vsel %vm227, %v3030, 0
    %3033 = vmatprep.subr.mxu0 0.0
    %3034 = vmatpush1.msra.mxu0 0.0
    %3035 = vmatprep.subr.mxu0 0.0
    %3036 = vmatpush1.msra.mxu0 0.0
    %3037 = vmatprep.subr.mxu0 0.0
    %3038 = vmatpush1.msra.mxu0 0.0
    %3039 = vmatprep.subr.mxu0 0.0
    %3040 = vmatpush1.msra.mxu0 0.0
    %3041 = vmatprep.subr.mxu0 0.0
    %3042 = vmatpush1.msra.mxu0 0.0
    %3043 = vmatprep.subr.mxu0 0.0
    %3044 = vmatpush1.msra.mxu0 0.0
    %3045 = vmatprep.subr.mxu0 0.0
    %3046 = vmatpush1.msra.mxu0 0.0
    %3047 = vmatprep.subr.mxu0 0.0
    %3048 = vmatpush1.msra.mxu0 0.0
    %3049 = vmatprep.subr.mxu0 0.0
    %3050 = vmatpush1.msra.mxu0 0.0
    %3051 = vmatprep.subr.mxu0 0.0
    %3052 = vmatpush1.msra.mxu0 0.0
    %3053 = vmatprep.subr.mxu0 0.0
    %3054 = vmatpush1.msra.mxu0 0.0
    %3055 = vmatprep.subr.mxu0 0.0
    %3056 = vmatpush1.msra.mxu0 0.0
    %3057 = vmatprep.subr.mxu0 0.0
    %3058 = vmatpush1.msra.mxu0 %v408
    %3059 = vmatprep.subr.mxu0 0.0
    %3060 = vmatpush1.msra.mxu0 %v407
    %3061 = vmatprep.subr.mxu0 0.0
    %3062 = vmatpush1.msra.mxu0 %v406
    %3063 = vmatprep.subr.mxu0 0.0
    %3064 = vmatpush1.msra.mxu0 %v405
    %3065 = vmatprep.subr.mxu0 0.0
    %3066 = vmatpush2.msra.mxu0 0.0
    %3067 = vmatprep.subr.mxu0 0.0
    %3068 = vmatpush2.msra.mxu0 0.0
    %3069 = vmatprep.subr.mxu0 0.0
    %3070 = vmatpush2.msra.mxu0 0.0
    %3071 = vmatprep.subr.mxu0 0.0
    %3072 = vmatpush2.msra.mxu0 0.0
    %3073 = vmatprep.subr.mxu0 0.0
    %3074 = vmatpush2.msra.mxu0 0.0
    %3075 = vmatprep.subr.mxu0 0.0
    %3076 = vmatpush2.msra.mxu0 0.0
    %3077 = vmatprep.subr.mxu0 0.0
    %3078 = vmatpush2.msra.mxu0 0.0
    %3079 = vmatprep.subr.mxu0 0.0
    %3080 = vmatpush2.msra.mxu0 0.0
    %3081 = vmatprep.subr.mxu0 0.0
    %3082 = vmatpush2.msra.mxu0 0.0
    %3083 = vmatprep.subr.mxu0 0.0
    %3084 = vmatpush2.msra.mxu0 0.0
    %3085 = vmatprep.subr.mxu0 0.0
    %3086 = vmatpush2.msra.mxu0 0.0
    %3087 = vmatprep.subr.mxu0 0.0
    %3088 = vmatpush2.msra.mxu0 0.0
    %3089 = vmatprep.subr.mxu0 0.0
    %3090 = vmatpush2.msra.mxu0 0.0
    %3091 = vmatprep.subr.mxu0 0.0
    %3092 = vmatpush2.msra.mxu0 0.0
    %3093 = vmatprep.subr.mxu0 0.0
    %3094 = vmatpush2.msra.mxu0 0.0
    %3095 = vmatprep.subr.mxu0 0.0
    %3096 = vmatpush2.msra.mxu0 0.0
    %3097 = vmatprep.mubr.f32.mxu0 0.0
    %3098 = vmatmul.mubr.f32.gmra.mxu0 %v3031
    %v3099 = vpop.f32.mrf.mxu0
    %v3100 = vadd.f32 0.0, %v3099
    %v3101 = vpop.f32.mrf.mxu0
    %3102 = vdwg.mxu0
    %v3103 = vadd.f32 %v3025, %v3100
    %v3104 = vxor.u32 %v3103, 2147483648
    %v3105 = vmul.f32 %v3104, 1.442695
    %v3106 = vpow.pop %v3105
    %v3107 = vadd.f32 %v3106, 1.0
    %v3108 = vrcp.pop %v3107
    %v3109 = vmul.f32 1.0, %v3108
    %v3110 = vtanh.pop %v3103
    %v3111 = vmul.f32 %v3109, %v2850
    %3113 = vrot.lane.b32.xlu0 %v3110, 64
    %v3114 = vpop.permute.xlu0 %3113
    %v3116 = vmul.f32 %v3109, %v3114
    %3118 = vrot.lane.b32.xlu0 %v3116, 32
    %v3119 = vpop.permute.xlu0 %3118
    %v3121 = vadd.f32 %v3111, %v3119
    %v3122 = vtanh.pop %v3121
    %3124 = vrot.lane.b32.xlu0 %v3122, 64
    %v3125 = vpop.permute.xlu0 %3124
    %v3127 = vmul.f32 %v3109, %v3125
    %v3128 = vld [vmem:[#allocation2 + $0x50] sm:$0xff]
    %3129 = vmatprep.subr.mxu0 0.0
    %3130 = vmatpush1.msra.mxu0 0.0
    %3131 = vmatprep.subr.mxu0 0.0
    %3132 = vmatpush1.msra.mxu0 0.0
    %3133 = vmatprep.subr.mxu0 0.0
    %3134 = vmatpush1.msra.mxu0 0.0
    %3135 = vmatprep.subr.mxu0 0.0
    %3136 = vmatpush1.msra.mxu0 0.0
    %3137 = vmatprep.subr.mxu0 0.0
    %3138 = vmatpush1.msra.mxu0 0.0
    %3139 = vmatprep.subr.mxu0 0.0
    %3140 = vmatpush1.msra.mxu0 0.0
    %3141 = vmatprep.subr.mxu0 0.0
    %3142 = vmatpush1.msra.mxu0 0.0
    %3143 = vmatprep.subr.mxu0 0.0
    %3144 = vmatpush1.msra.mxu0 0.0
    %3145 = vmatprep.subr.mxu0 0.0
    %3146 = vmatpush1.msra.mxu0 0.0
    %3147 = vmatprep.subr.mxu0 0.0
    %3148 = vmatpush1.msra.mxu0 0.0
    %3149 = vmatprep.subr.mxu0 0.0
    %3150 = vmatpush1.msra.mxu0 0.0
    %3151 = vmatprep.subr.mxu0 0.0
    %3152 = vmatpush1.msra.mxu0 0.0
    %3153 = vmatprep.subr.mxu0 0.0
    %3154 = vmatpush1.msra.mxu0 %v404
    %3155 = vmatprep.subr.mxu0 0.0
    %3156 = vmatpush1.msra.mxu0 %v403
    %3157 = vmatprep.subr.mxu0 0.0
    %3158 = vmatpush1.msra.mxu0 %v402
    %3159 = vmatprep.subr.mxu0 0.0
    %3160 = vmatpush1.msra.mxu0 %v401
    %3161 = vmatprep.subr.mxu0 0.0
    %3162 = vmatpush2.msra.mxu0 0.0
    %3163 = vmatprep.subr.mxu0 0.0
    %3164 = vmatpush2.msra.mxu0 0.0
    %3165 = vmatprep.subr.mxu0 0.0
    %3166 = vmatpush2.msra.mxu0 0.0
    %3167 = vmatprep.subr.mxu0 0.0
    %3168 = vmatpush2.msra.mxu0 0.0
    %3169 = vmatprep.subr.mxu0 0.0
    %3170 = vmatpush2.msra.mxu0 0.0
    %3171 = vmatprep.subr.mxu0 0.0
    %3172 = vmatpush2.msra.mxu0 0.0
    %3173 = vmatprep.subr.mxu0 0.0
    %3174 = vmatpush2.msra.mxu0 0.0
    %3175 = vmatprep.subr.mxu0 0.0
    %3176 = vmatpush2.msra.mxu0 0.0
    %3177 = vmatprep.subr.mxu0 0.0
    %3178 = vmatpush2.msra.mxu0 0.0
    %3179 = vmatprep.subr.mxu0 0.0
    %3180 = vmatpush2.msra.mxu0 0.0
    %3181 = vmatprep.subr.mxu0 0.0
    %3182 = vmatpush2.msra.mxu0 0.0
    %3183 = vmatprep.subr.mxu0 0.0
    %3184 = vmatpush2.msra.mxu0 0.0
    %3185 = vmatprep.subr.mxu0 0.0
    %3186 = vmatpush2.msra.mxu0 0.0
    %3187 = vmatprep.subr.mxu0 0.0
    %3188 = vmatpush2.msra.mxu0 0.0
    %3189 = vmatprep.subr.mxu0 0.0
    %3190 = vmatpush2.msra.mxu0 0.0
    %3191 = vmatprep.subr.mxu0 0.0
    %3192 = vmatpush2.msra.mxu0 0.0
    %3193 = vmatprep.mubr.f32.mxu0 0.0
    %3194 = vmatmul.mubr.f32.gmra.mxu0 %v2956
    %v3195 = vpop.f32.mrf.mxu0
    %v3196 = vadd.f32 0.0, %v3195
    %v3197 = vpop.f32.mrf.mxu0
    %3198 = vdwg.mxu0
    %v3199 = vadd.f32 %v3128, %v3196
    %v3200 = vxor.u32 %v3199, 2147483648
    %v3201 = vmul.f32 %v3200, 1.442695
    %v3202 = vpow.pop %v3201
    %v3203 = vadd.f32 %v3202, 1.0
    %v3204 = vrcp.pop %v3203
    %v3205 = vmul.f32 1.0, %v3204
    %v3206 = vtanh.pop %v3199
    %v3207 = vmul.f32 %v3205, %v2946
    %3209 = vrot.lane.b32.xlu0 %v3206, 64
    %v3210 = vpop.permute.xlu0 %3209
    %v3212 = vmul.f32 %v3205, %v3210
    %3214 = vrot.lane.b32.xlu0 %v3212, 32
    %v3215 = vpop.permute.xlu0 %3214
    %v3217 = vadd.f32 %v3207, %v3215
    %v3218 = vtanh.pop %v3217
    %3220 = vrot.lane.b32.xlu0 %v3218, 64
    %v3221 = vpop.permute.xlu0 %3220
    %v3223 = vmul.f32 %v3205, %v3221
    %3225 = vrot.lane.b32.xlu0 %v3223, 32
    %v3226 = vpop.permute.xlu0 %3225
    %v3227 = vsel %vm227, %v3226, 0
    %3229 = vmatprep.subr.mxu0 0.0
    %3230 = vmatpush1.msra.mxu0 0.0
    %3231 = vmatprep.subr.mxu0 0.0
    %3232 = vmatpush1.msra.mxu0 0.0
    %3233 = vmatprep.subr.mxu0 0.0
    %3234 = vmatpush1.msra.mxu0 0.0
    %3235 = vmatprep.subr.mxu0 0.0
    %3236 = vmatpush1.msra.mxu0 0.0
    %3237 = vmatprep.subr.mxu0 0.0
    %3238 = vmatpush1.msra.mxu0 0.0
    %3239 = vmatprep.subr.mxu0 0.0
    %3240 = vmatpush1.msra.mxu0 0.0
    %3241 = vmatprep.subr.mxu0 0.0
    %3242 = vmatpush1.msra.mxu0 0.0
    %3243 = vmatprep.subr.mxu0 0.0
    %3244 = vmatpush1.msra.mxu0 0.0
    %3245 = vmatprep.subr.mxu0 0.0
    %3246 = vmatpush1.msra.mxu0 0.0
    %3247 = vmatprep.subr.mxu0 0.0
    %3248 = vmatpush1.msra.mxu0 0.0
    %3249 = vmatprep.subr.mxu0 0.0
    %3250 = vmatpush1.msra.mxu0 0.0
    %3251 = vmatprep.subr.mxu0 0.0
    %3252 = vmatpush1.msra.mxu0 0.0
    %3253 = vmatprep.subr.mxu0 0.0
    %3254 = vmatpush1.msra.mxu0 %v412
    %3255 = vmatprep.subr.mxu0 0.0
    %3256 = vmatpush1.msra.mxu0 %v411
    %3257 = vmatprep.subr.mxu0 0.0
    %3258 = vmatpush1.msra.mxu0 %v410
    %3259 = vmatprep.subr.mxu0 0.0
    %3260 = vmatpush1.msra.mxu0 %v409
    %3261 = vmatprep.subr.mxu0 0.0
    %3262 = vmatpush2.msra.mxu0 0.0
    %3263 = vmatprep.subr.mxu0 0.0
    %3264 = vmatpush2.msra.mxu0 0.0
    %3265 = vmatprep.subr.mxu0 0.0
    %3266 = vmatpush2.msra.mxu0 0.0
    %3267 = vmatprep.subr.mxu0 0.0
    %3268 = vmatpush2.msra.mxu0 0.0
    %3269 = vmatprep.subr.mxu0 0.0
    %3270 = vmatpush2.msra.mxu0 0.0
    %3271 = vmatprep.subr.mxu0 0.0
    %3272 = vmatpush2.msra.mxu0 0.0
    %3273 = vmatprep.subr.mxu0 0.0
    %3274 = vmatpush2.msra.mxu0 0.0
    %3275 = vmatprep.subr.mxu0 0.0
    %3276 = vmatpush2.msra.mxu0 0.0
    %3277 = vmatprep.subr.mxu0 0.0
    %3278 = vmatpush2.msra.mxu0 0.0
    %3279 = vmatprep.subr.mxu0 0.0
    %3280 = vmatpush2.msra.mxu0 0.0
    %3281 = vmatprep.subr.mxu0 0.0
    %3282 = vmatpush2.msra.mxu0 0.0
    %3283 = vmatprep.subr.mxu0 0.0
    %3284 = vmatpush2.msra.mxu0 0.0
    %3285 = vmatprep.subr.mxu0 0.0
    %3286 = vmatpush2.msra.mxu0 0.0
    %3287 = vmatprep.subr.mxu0 0.0
    %3288 = vmatpush2.msra.mxu0 0.0
    %3289 = vmatprep.subr.mxu0 0.0
    %3290 = vmatpush2.msra.mxu0 0.0
    %3291 = vmatprep.subr.mxu0 0.0
    %3292 = vmatpush2.msra.mxu0 0.0
    %3293 = vmatprep.mubr.f32.mxu0 0.0
    %3294 = vmatmul.mubr.f32.gmra.mxu0 %v3227
    %v3295 = vpop.f32.mrf.mxu0
    %v3296 = vadd.f32 %v517, %v3295
    %v3297 = vpop.f32.mrf.mxu0
    %3298 = vdwg.mxu0
    %3300 = vrot.lane.b32.xlu0 %v3127, 32
    %v3301 = vpop.permute.xlu0 %3300
    %v3302 = vsel %vm227, %v3301, 0
    %3304 = vmatprep.subr.mxu0 0.0
    %3305 = vmatpush1.msra.mxu0 0.0
    %3306 = vmatprep.subr.mxu0 0.0
    %3307 = vmatpush1.msra.mxu0 0.0
    %3308 = vmatprep.subr.mxu0 0.0
    %3309 = vmatpush1.msra.mxu0 0.0
    %3310 = vmatprep.subr.mxu0 0.0
    %3311 = vmatpush1.msra.mxu0 0.0
    %3312 = vmatprep.subr.mxu0 0.0
    %3313 = vmatpush1.msra.mxu0 0.0
    %3314 = vmatprep.subr.mxu0 0.0
    %3315 = vmatpush1.msra.mxu0 0.0
    %3316 = vmatprep.subr.mxu0 0.0
    %3317 = vmatpush1.msra.mxu0 0.0
    %3318 = vmatprep.subr.mxu0 0.0
    %3319 = vmatpush1.msra.mxu0 0.0
    %3320 = vmatprep.subr.mxu0 0.0
    %3321 = vmatpush1.msra.mxu0 0.0
    %3322 = vmatprep.subr.mxu0 0.0
    %3323 = vmatpush1.msra.mxu0 0.0
    %3324 = vmatprep.subr.mxu0 0.0
    %3325 = vmatpush1.msra.mxu0 0.0
    %3326 = vmatprep.subr.mxu0 0.0
    %3327 = vmatpush1.msra.mxu0 0.0
    %3328 = vmatprep.subr.mxu0 0.0
    %3329 = vmatpush1.msra.mxu0 %v408
    %3330 = vmatprep.subr.mxu0 0.0
    %3331 = vmatpush1.msra.mxu0 %v407
    %3332 = vmatprep.subr.mxu0 0.0
    %3333 = vmatpush1.msra.mxu0 %v406
    %3334 = vmatprep.subr.mxu0 0.0
    %3335 = vmatpush1.msra.mxu0 %v405
    %3336 = vmatprep.subr.mxu0 0.0
    %3337 = vmatpush2.msra.mxu0 0.0
    %3338 = vmatprep.subr.mxu0 0.0
    %3339 = vmatpush2.msra.mxu0 0.0
    %3340 = vmatprep.subr.mxu0 0.0
    %3341 = vmatpush2.msra.mxu0 0.0
    %3342 = vmatprep.subr.mxu0 0.0
    %3343 = vmatpush2.msra.mxu0 0.0
    %3344 = vmatprep.subr.mxu0 0.0
    %3345 = vmatpush2.msra.mxu0 0.0
    %3346 = vmatprep.subr.mxu0 0.0
    %3347 = vmatpush2.msra.mxu0 0.0
    %3348 = vmatprep.subr.mxu0 0.0
    %3349 = vmatpush2.msra.mxu0 0.0
    %3350 = vmatprep.subr.mxu0 0.0
    %3351 = vmatpush2.msra.mxu0 0.0
    %3352 = vmatprep.subr.mxu0 0.0
    %3353 = vmatpush2.msra.mxu0 0.0
    %3354 = vmatprep.subr.mxu0 0.0
    %3355 = vmatpush2.msra.mxu0 0.0
    %3356 = vmatprep.subr.mxu0 0.0
    %3357 = vmatpush2.msra.mxu0 0.0
    %3358 = vmatprep.subr.mxu0 0.0
    %3359 = vmatpush2.msra.mxu0 0.0
    %3360 = vmatprep.subr.mxu0 0.0
    %3361 = vmatpush2.msra.mxu0 0.0
    %3362 = vmatprep.subr.mxu0 0.0
    %3363 = vmatpush2.msra.mxu0 0.0
    %3364 = vmatprep.subr.mxu0 0.0
    %3365 = vmatpush2.msra.mxu0 0.0
    %3366 = vmatprep.subr.mxu0 0.0
    %3367 = vmatpush2.msra.mxu0 0.0
    %3368 = vmatprep.mubr.f32.mxu0 0.0
    %3369 = vmatmul.mubr.f32.gmra.mxu0 %v3302
    %v3370 = vpop.f32.mrf.mxu0
    %v3371 = vadd.f32 0.0, %v3370
    %v3372 = vpop.f32.mrf.mxu0
    %3373 = vdwg.mxu0
    %v3374 = vadd.f32 %v3296, %v3371
    %v3375 = vxor.u32 %v3374, 2147483648
    %v3376 = vmul.f32 %v3375, 1.442695
    %v3377 = vpow.pop %v3376
    %v3378 = vadd.f32 %v3377, 1.0
    %v3379 = vrcp.pop %v3378
    %v3380 = vmul.f32 1.0, %v3379
    %v3381 = vtanh.pop %v3374
    %v3382 = vmul.f32 %v3380, %v3121
    %3384 = vrot.lane.b32.xlu0 %v3381, 64
    %v3385 = vpop.permute.xlu0 %3384
    %v3387 = vmul.f32 %v3380, %v3385
    %3389 = vrot.lane.b32.xlu0 %v3387, 32
    %v3390 = vpop.permute.xlu0 %3389
    %v3392 = vadd.f32 %v3382, %v3390
    %v3393 = vtanh.pop %v3392
    %3395 = vrot.lane.b32.xlu0 %v3393, 64
    %v3396 = vpop.permute.xlu0 %3395
    %v3398 = vmul.f32 %v3380, %v3396
    %v3399 = vld [vmem:[#allocation2 + $0x58] sm:$0xff]
    %3400 = vmatprep.subr.mxu0 0.0
    %3401 = vmatpush1.msra.mxu0 0.0
    %3402 = vmatprep.subr.mxu0 0.0
    %3403 = vmatpush1.msra.mxu0 0.0
    %3404 = vmatprep.subr.mxu0 0.0
    %3405 = vmatpush1.msra.mxu0 0.0
    %3406 = vmatprep.subr.mxu0 0.0
    %3407 = vmatpush1.msra.mxu0 0.0
    %3408 = vmatprep.subr.mxu0 0.0
    %3409 = vmatpush1.msra.mxu0 0.0
    %3410 = vmatprep.subr.mxu0 0.0
    %3411 = vmatpush1.msra.mxu0 0.0
    %3412 = vmatprep.subr.mxu0 0.0
    %3413 = vmatpush1.msra.mxu0 0.0
    %3414 = vmatprep.subr.mxu0 0.0
    %3415 = vmatpush1.msra.mxu0 0.0
    %3416 = vmatprep.subr.mxu0 0.0
    %3417 = vmatpush1.msra.mxu0 0.0
    %3418 = vmatprep.subr.mxu0 0.0
    %3419 = vmatpush1.msra.mxu0 0.0
    %3420 = vmatprep.subr.mxu0 0.0
    %3421 = vmatpush1.msra.mxu0 0.0
    %3422 = vmatprep.subr.mxu0 0.0
    %3423 = vmatpush1.msra.mxu0 0.0
    %3424 = vmatprep.subr.mxu0 0.0
    %3425 = vmatpush1.msra.mxu0 %v404
    %3426 = vmatprep.subr.mxu0 0.0
    %3427 = vmatpush1.msra.mxu0 %v403
    %3428 = vmatprep.subr.mxu0 0.0
    %3429 = vmatpush1.msra.mxu0 %v402
    %3430 = vmatprep.subr.mxu0 0.0
    %3431 = vmatpush1.msra.mxu0 %v401
    %3432 = vmatprep.subr.mxu0 0.0
    %3433 = vmatpush2.msra.mxu0 0.0
    %3434 = vmatprep.subr.mxu0 0.0
    %3435 = vmatpush2.msra.mxu0 0.0
    %3436 = vmatprep.subr.mxu0 0.0
    %3437 = vmatpush2.msra.mxu0 0.0
    %3438 = vmatprep.subr.mxu0 0.0
    %3439 = vmatpush2.msra.mxu0 0.0
    %3440 = vmatprep.subr.mxu0 0.0
    %3441 = vmatpush2.msra.mxu0 0.0
    %3442 = vmatprep.subr.mxu0 0.0
    %3443 = vmatpush2.msra.mxu0 0.0
    %3444 = vmatprep.subr.mxu0 0.0
    %3445 = vmatpush2.msra.mxu0 0.0
    %3446 = vmatprep.subr.mxu0 0.0
    %3447 = vmatpush2.msra.mxu0 0.0
    %3448 = vmatprep.subr.mxu0 0.0
    %3449 = vmatpush2.msra.mxu0 0.0
    %3450 = vmatprep.subr.mxu0 0.0
    %3451 = vmatpush2.msra.mxu0 0.0
    %3452 = vmatprep.subr.mxu0 0.0
    %3453 = vmatpush2.msra.mxu0 0.0
    %3454 = vmatprep.subr.mxu0 0.0
    %3455 = vmatpush2.msra.mxu0 0.0
    %3456 = vmatprep.subr.mxu0 0.0
    %3457 = vmatpush2.msra.mxu0 0.0
    %3458 = vmatprep.subr.mxu0 0.0
    %3459 = vmatpush2.msra.mxu0 0.0
    %3460 = vmatprep.subr.mxu0 0.0
    %3461 = vmatpush2.msra.mxu0 0.0
    %3462 = vmatprep.subr.mxu0 0.0
    %3463 = vmatpush2.msra.mxu0 0.0
    %3464 = vmatprep.mubr.f32.mxu0 0.0
    %3465 = vmatmul.mubr.f32.gmra.mxu0 %v3227
    %v3466 = vpop.f32.mrf.mxu0
    %v3467 = vadd.f32 0.0, %v3466
    %v3468 = vpop.f32.mrf.mxu0
    %3469 = vdwg.mxu0
    %v3470 = vadd.f32 %v3399, %v3467
    %v3471 = vxor.u32 %v3470, 2147483648
    %v3472 = vmul.f32 %v3471, 1.442695
    %v3473 = vpow.pop %v3472
    %v3474 = vadd.f32 %v3473, 1.0
    %v3475 = vrcp.pop %v3474
    %v3476 = vmul.f32 1.0, %v3475
    %v3477 = vtanh.pop %v3470
    %v3478 = vmul.f32 %v3476, %v3217
    %3480 = vrot.lane.b32.xlu0 %v3477, 64
    %v3481 = vpop.permute.xlu0 %3480
    %v3483 = vmul.f32 %v3476, %v3481
    %3485 = vrot.lane.b32.xlu0 %v3483, 32
    %v3486 = vpop.permute.xlu0 %3485
    %v3488 = vadd.f32 %v3478, %v3486
    %v3489 = vtanh.pop %v3488
    %3491 = vrot.lane.b32.xlu0 %v3489, 64
    %v3492 = vpop.permute.xlu0 %3491
    %v3494 = vmul.f32 %v3476, %v3492
    %3496 = vrot.lane.b32.xlu0 %v3494, 32
    %v3497 = vpop.permute.xlu0 %3496
    %v3498 = vsel %vm227, %v3497, 0
    %3500 = vmatprep.subr.mxu0 0.0
    %3501 = vmatpush1.msra.mxu0 0.0
    %3502 = vmatprep.subr.mxu0 0.0
    %3503 = vmatpush1.msra.mxu0 0.0
    %3504 = vmatprep.subr.mxu0 0.0
    %3505 = vmatpush1.msra.mxu0 0.0
    %3506 = vmatprep.subr.mxu0 0.0
    %3507 = vmatpush1.msra.mxu0 0.0
    %3508 = vmatprep.subr.mxu0 0.0
    %3509 = vmatpush1.msra.mxu0 0.0
    %3510 = vmatprep.subr.mxu0 0.0
    %3511 = vmatpush1.msra.mxu0 0.0
    %3512 = vmatprep.subr.mxu0 0.0
    %3513 = vmatpush1.msra.mxu0 0.0
    %3514 = vmatprep.subr.mxu0 0.0
    %3515 = vmatpush1.msra.mxu0 0.0
    %3516 = vmatprep.subr.mxu0 0.0
    %3517 = vmatpush1.msra.mxu0 0.0
    %3518 = vmatprep.subr.mxu0 0.0
    %3519 = vmatpush1.msra.mxu0 0.0
    %3520 = vmatprep.subr.mxu0 0.0
    %3521 = vmatpush1.msra.mxu0 0.0
    %3522 = vmatprep.subr.mxu0 0.0
    %3523 = vmatpush1.msra.mxu0 0.0
    %3524 = vmatprep.subr.mxu0 0.0
    %3525 = vmatpush1.msra.mxu0 %v412
    %3526 = vmatprep.subr.mxu0 0.0
    %3527 = vmatpush1.msra.mxu0 %v411
    %3528 = vmatprep.subr.mxu0 0.0
    %3529 = vmatpush1.msra.mxu0 %v410
    %3530 = vmatprep.subr.mxu0 0.0
    %3531 = vmatpush1.msra.mxu0 %v409
    %3532 = vmatprep.subr.mxu0 0.0
    %3533 = vmatpush2.msra.mxu0 0.0
    %3534 = vmatprep.subr.mxu0 0.0
    %3535 = vmatpush2.msra.mxu0 0.0
    %3536 = vmatprep.subr.mxu0 0.0
    %3537 = vmatpush2.msra.mxu0 0.0
    %3538 = vmatprep.subr.mxu0 0.0
    %3539 = vmatpush2.msra.mxu0 0.0
    %3540 = vmatprep.subr.mxu0 0.0
    %3541 = vmatpush2.msra.mxu0 0.0
    %3542 = vmatprep.subr.mxu0 0.0
    %3543 = vmatpush2.msra.mxu0 0.0
    %3544 = vmatprep.subr.mxu0 0.0
    %3545 = vmatpush2.msra.mxu0 0.0
    %3546 = vmatprep.subr.mxu0 0.0
    %3547 = vmatpush2.msra.mxu0 0.0
    %3548 = vmatprep.subr.mxu0 0.0
    %3549 = vmatpush2.msra.mxu0 0.0
    %3550 = vmatprep.subr.mxu0 0.0
    %3551 = vmatpush2.msra.mxu0 0.0
    %3552 = vmatprep.subr.mxu0 0.0
    %3553 = vmatpush2.msra.mxu0 0.0
    %3554 = vmatprep.subr.mxu0 0.0
    %3555 = vmatpush2.msra.mxu0 0.0
    %3556 = vmatprep.subr.mxu0 0.0
    %3557 = vmatpush2.msra.mxu0 0.0
    %3558 = vmatprep.subr.mxu0 0.0
    %3559 = vmatpush2.msra.mxu0 0.0
    %3560 = vmatprep.subr.mxu0 0.0
    %3561 = vmatpush2.msra.mxu0 0.0
    %3562 = vmatprep.subr.mxu0 0.0
    %3563 = vmatpush2.msra.mxu0 0.0
    %3564 = vmatprep.mubr.f32.mxu0 0.0
    %3565 = vmatmul.mubr.f32.gmra.mxu0 %v3498
    %v3566 = vpop.f32.mrf.mxu0
    %v3567 = vadd.f32 %v517, %v3566
    %v3568 = vpop.f32.mrf.mxu0
    %3569 = vdwg.mxu0
    %3571 = vrot.lane.b32.xlu0 %v3398, 32
    %v3572 = vpop.permute.xlu0 %3571
    %v3573 = vsel %vm227, %v3572, 0
    %3575 = vmatprep.subr.mxu0 0.0
    %3576 = vmatpush1.msra.mxu0 0.0
    %3577 = vmatprep.subr.mxu0 0.0
    %3578 = vmatpush1.msra.mxu0 0.0
    %3579 = vmatprep.subr.mxu0 0.0
    %3580 = vmatpush1.msra.mxu0 0.0
    %3581 = vmatprep.subr.mxu0 0.0
    %3582 = vmatpush1.msra.mxu0 0.0
    %3583 = vmatprep.subr.mxu0 0.0
    %3584 = vmatpush1.msra.mxu0 0.0
    %3585 = vmatprep.subr.mxu0 0.0
    %3586 = vmatpush1.msra.mxu0 0.0
    %3587 = vmatprep.subr.mxu0 0.0
    %3588 = vmatpush1.msra.mxu0 0.0
    %3589 = vmatprep.subr.mxu0 0.0
    %3590 = vmatpush1.msra.mxu0 0.0
    %3591 = vmatprep.subr.mxu0 0.0
    %3592 = vmatpush1.msra.mxu0 0.0
    %3593 = vmatprep.subr.mxu0 0.0
    %3594 = vmatpush1.msra.mxu0 0.0
    %3595 = vmatprep.subr.mxu0 0.0
    %3596 = vmatpush1.msra.mxu0 0.0
    %3597 = vmatprep.subr.mxu0 0.0
    %3598 = vmatpush1.msra.mxu0 0.0
    %3599 = vmatprep.subr.mxu0 0.0
    %3600 = vmatpush1.msra.mxu0 %v408
    %3601 = vmatprep.subr.mxu0 0.0
    %3602 = vmatpush1.msra.mxu0 %v407
    %3603 = vmatprep.subr.mxu0 0.0
    %3604 = vmatpush1.msra.mxu0 %v406
    %3605 = vmatprep.subr.mxu0 0.0
    %3606 = vmatpush1.msra.mxu0 %v405
    %3607 = vmatprep.subr.mxu0 0.0
    %3608 = vmatpush2.msra.mxu0 0.0
    %3609 = vmatprep.subr.mxu0 0.0
    %3610 = vmatpush2.msra.mxu0 0.0
    %3611 = vmatprep.subr.mxu0 0.0
    %3612 = vmatpush2.msra.mxu0 0.0
    %3613 = vmatprep.subr.mxu0 0.0
    %3614 = vmatpush2.msra.mxu0 0.0
    %3615 = vmatprep.subr.mxu0 0.0
    %3616 = vmatpush2.msra.mxu0 0.0
    %3617 = vmatprep.subr.mxu0 0.0
    %3618 = vmatpush2.msra.mxu0 0.0
    %3619 = vmatprep.subr.mxu0 0.0
    %3620 = vmatpush2.msra.mxu0 0.0
    %3621 = vmatprep.subr.mxu0 0.0
    %3622 = vmatpush2.msra.mxu0 0.0
    %3623 = vmatprep.subr.mxu0 0.0
    %3624 = vmatpush2.msra.mxu0 0.0
    %3625 = vmatprep.subr.mxu0 0.0
    %3626 = vmatpush2.msra.mxu0 0.0
    %3627 = vmatprep.subr.mxu0 0.0
    %3628 = vmatpush2.msra.mxu0 0.0
    %3629 = vmatprep.subr.mxu0 0.0
    %3630 = vmatpush2.msra.mxu0 0.0
    %3631 = vmatprep.subr.mxu0 0.0
    %3632 = vmatpush2.msra.mxu0 0.0
    %3633 = vmatprep.subr.mxu0 0.0
    %3634 = vmatpush2.msra.mxu0 0.0
    %3635 = vmatprep.subr.mxu0 0.0
    %3636 = vmatpush2.msra.mxu0 0.0
    %3637 = vmatprep.subr.mxu0 0.0
    %3638 = vmatpush2.msra.mxu0 0.0
    %3639 = vmatprep.mubr.f32.mxu0 0.0
    %3640 = vmatmul.mubr.f32.gmra.mxu0 %v3573
    %v3641 = vpop.f32.mrf.mxu0
    %v3642 = vadd.f32 0.0, %v3641
    %v3643 = vpop.f32.mrf.mxu0
    %3644 = vdwg.mxu0
    %v3645 = vadd.f32 %v3567, %v3642
    %v3646 = vxor.u32 %v3645, 2147483648
    %v3647 = vmul.f32 %v3646, 1.442695
    %v3648 = vpow.pop %v3647
    %v3649 = vadd.f32 %v3648, 1.0
    %v3650 = vrcp.pop %v3649
    %v3651 = vmul.f32 1.0, %v3650
    %v3652 = vtanh.pop %v3645
    %v3653 = vmul.f32 %v3651, %v3392
    %3655 = vrot.lane.b32.xlu0 %v3652, 64
    %v3656 = vpop.permute.xlu0 %3655
    %v3658 = vmul.f32 %v3651, %v3656
    %3660 = vrot.lane.b32.xlu0 %v3658, 32
    %v3661 = vpop.permute.xlu0 %3660
    %v3663 = vadd.f32 %v3653, %v3661
    %v3664 = vtanh.pop %v3663
    %3666 = vrot.lane.b32.xlu0 %v3664, 64
    %v3667 = vpop.permute.xlu0 %3666
    %v3669 = vmul.f32 %v3651, %v3667
    %v3670 = vld [vmem:[%s8] sm:$0xff]
    %v3671 = vld [vmem:[%s8 + $0x8] sm:$0xff]
    %v3672 = vld [vmem:[%s8 + $0x10] sm:$0xff]
    %v3673 = vld [vmem:[%s8 + $0x18] sm:$0xff]
    %v3674 = vld [vmem:[%s9] sm:$0x1]
    %v3676 = vlaneseq
    %v3677 = vshrl.u32 %v3676, 7
    %v3678 = vsub.s32 0, %v3677
    %v3679 = vrot.slane %v3674, %v3678
    %3682 = vrot.lane.b32.xlu0 %v3669, 32
    %v3683 = vpop.permute.xlu0 %3682
    %v3684 = vsel %vm227, %v3683, 0
    %3686 = vmatprep.subr.mxu0 0.0
    %3687 = vmatpush1.msra.mxu0 0.0
    %3688 = vmatprep.subr.mxu0 0.0
    %3689 = vmatpush1.msra.mxu0 0.0
    %3690 = vmatprep.subr.mxu0 0.0
    %3691 = vmatpush1.msra.mxu0 0.0
    %3692 = vmatprep.subr.mxu0 0.0
    %3693 = vmatpush1.msra.mxu0 0.0
    %3694 = vmatprep.subr.mxu0 0.0
    %3695 = vmatpush1.msra.mxu0 0.0
    %3696 = vmatprep.subr.mxu0 0.0
    %3697 = vmatpush1.msra.mxu0 0.0
    %3698 = vmatprep.subr.mxu0 0.0
    %3699 = vmatpush1.msra.mxu0 0.0
    %3700 = vmatprep.subr.mxu0 0.0
    %3701 = vmatpush1.msra.mxu0 0.0
    %3702 = vmatprep.subr.mxu0 0.0
    %3703 = vmatpush1.msra.mxu0 0.0
    %3704 = vmatprep.subr.mxu0 0.0
    %3705 = vmatpush1.msra.mxu0 0.0
    %3706 = vmatprep.subr.mxu0 0.0
    %3707 = vmatpush1.msra.mxu0 0.0
    %3708 = vmatprep.subr.mxu0 0.0
    %3709 = vmatpush1.msra.mxu0 0.0
    %3710 = vmatprep.subr.mxu0 0.0
    %3711 = vmatpush1.msra.mxu0 %v3673
    %3712 = vmatprep.subr.mxu0 0.0
    %3713 = vmatpush1.msra.mxu0 %v3672
    %3714 = vmatprep.subr.mxu0 0.0
    %3715 = vmatpush1.msra.mxu0 %v3671
    %3716 = vmatprep.subr.mxu0 0.0
    %3717 = vmatpush1.msra.mxu0 %v3670
    %3718 = vmatprep.subr.mxu0 0.0
    %3719 = vmatpush2.msra.mxu0 0.0
    %3720 = vmatprep.subr.mxu0 0.0
    %3721 = vmatpush2.msra.mxu0 0.0
    %3722 = vmatprep.subr.mxu0 0.0
    %3723 = vmatpush2.msra.mxu0 0.0
    %3724 = vmatprep.subr.mxu0 0.0
    %3725 = vmatpush2.msra.mxu0 0.0
    %3726 = vmatprep.subr.mxu0 0.0
    %3727 = vmatpush2.msra.mxu0 0.0
    %3728 = vmatprep.subr.mxu0 0.0
    %3729 = vmatpush2.msra.mxu0 0.0
    %3730 = vmatprep.subr.mxu0 0.0
    %3731 = vmatpush2.msra.mxu0 0.0
    %3732 = vmatprep.subr.mxu0 0.0
    %3733 = vmatpush2.msra.mxu0 0.0
    %3734 = vmatprep.subr.mxu0 0.0
    %3735 = vmatpush2.msra.mxu0 0.0
    %3736 = vmatprep.subr.mxu0 0.0
    %3737 = vmatpush2.msra.mxu0 0.0
    %3738 = vmatprep.subr.mxu0 0.0
    %3739 = vmatpush2.msra.mxu0 0.0
    %3740 = vmatprep.subr.mxu0 0.0
    %3741 = vmatpush2.msra.mxu0 0.0
    %3742 = vmatprep.subr.mxu0 0.0
    %3743 = vmatpush2.msra.mxu0 0.0
    %3744 = vmatprep.subr.mxu0 0.0
    %3745 = vmatpush2.msra.mxu0 0.0
    %3746 = vmatprep.subr.mxu0 0.0
    %3747 = vmatpush2.msra.mxu0 0.0
    %3748 = vmatprep.subr.mxu0 0.0
    %3749 = vmatpush2.msra.mxu0 0.0
    %3750 = vmatprep.mubr.f32.mxu0 0.0
    %3751 = vmatmul.mubr.f32.gmra.mxu0 %v3684
    %v3752 = vpop.f32.mrf.mxu0
    %v3753 = vadd.f32 %v3679, %v3752
    %v3754 = vpop.f32.mrf.mxu0
    %3755 = vdwg.mxu0
    %vm3756 = vcmp.gt.f32.partialorder %v3753, 20.0
    %v3757 = vmin.f32 %v3753, 20.0
    %v3758 = vmul.f32 %v3757, 1.442695
    %v3759 = vpow.pop %v3758
    %v3760 = vadd.f32 %v3759, 1.0
    %v3761 = vlog2.pop %v3760
    %v3762 = vmul.f32 %v3761, 0.6931472
    %v3763 = vmul.f32 -0.5, %v3759
    %v3764 = vadd.f32 %v3763, 1.0
    %v3765 = vmul.f32 %v3764, %v3759
    %v3766 = vand.u32 2147483647, %v3759
    %vm3767 = vcmp.lt.f32.partialorder %v3766, 0.0004427343
    %v3768 = vsel %vm3767, %v3765, %v3762
    %v3769 = vsel %vm3756, %v3753, %v3768
    %vm3770 = vcmask 64512
    %3771 = vst.msk [vmem:[#allocation3] sm:$0xff] %vm3770, %v3769
    // Predicated region
    $region42: #{tpu_custom_call.1} parent=1 // pred_check
      _
    $region43: #{tpu_custom_call.1} parent=1 // pred_check_branch
      %3773 = sbr.rel (0) target = $region45
    $region44: #{tpu_custom_call.1} parent=1 // pred_region
      %s3775 = ssub.s32 128, 128
      %3776 = vsyncadd [#allocation4], %s3775
      %s3778 = sshll.u32 [#allocation3], 4
      %s3779 = int_to_ptr.vmem [resolvable:$true] %s3778
      %3781 = dma.vmem_to_hbm [thread:$0]  %s3779, 128, %s10, [#allocation4]
    $region45: #{tpu_custom_call.1} parent=1 // pred_fallthru
      _
    // Predicated region
    $region46: #{tpu_custom_call.1} parent=1 // pred_check
      _
    $region47: #{tpu_custom_call.1} parent=1 // pred_check_branch
      %3783 = sbr.rel (0) target = $region49
    $region48: #{tpu_custom_call.1} parent=1 // pred_region
      %3784 = dma.done [#allocation4], 128
    $region49: #{tpu_custom_call.1} parent=1 // pred_fallthru
      _
    %3785 = vsyncpa [#allocation4], 1

</llo_original>
